<compile_context>
chip_gen: v6e
topology: v6e:2x2x1
jax: 0.10.0
libtpu: 0.0.40
codegen_flags: <defaults>
</compile_context>

<pallas_src>
import functools

import jax
import jax.numpy as jnp
from jax import lax
from jax.experimental import pallas as pl
from jax.experimental.pallas import tpu as pltpu


# ------------------------------ fused block kernel ---------------------------


def _temporal_block_kernel(*refs, taps, dilation, has_down):
    if has_down:
        (xc_ref, xp_ref, w1_ref, b1_ref, w2_ref, b2_ref, wd_ref, bd_ref,
         o_ref, hc_ref, hp_ref, hcb_ref, hpb_ref, acc_ref) = refs
    else:
        (xc_ref, xp_ref, w1_ref, b1_ref, w2_ref, b2_ref,
         o_ref, hc_ref, hp_ref, hcb_ref, hpb_ref, acc_ref) = refs

    pad = (taps - 1) * dilation
    tl = xc_ref.shape[2]
    first = pl.program_id(1) == 0                 # first L tile of the sequence

    # Residual path stays exact f32; only MXU operands are cast to bf16.
    xc = xc_ref[...][0]                           # (C_in, T) f32
    xc_b = xc.astype(jnp.bfloat16)
    # Previous L tile supplies the causal halo; at the sequence start the halo
    # is the zero left-pad, so mask the previous-tile data out.
    xp_b = jnp.where(first, 0.0, xp_ref[...][0]).astype(jnp.bfloat16)

    # ---- conv1: K accumulating per-tap matmuls (no im2col, no zero fill). ----
    # Tap taps-1 has zero temporal shift -> it initializes both accumulators
    # (bias folded in).  hc = h over the current tile, hp = recomputed h over
    # the previous tile (only its last `pad` columns are ever consumed).
    b1 = b1_ref[...]                              # (C_out, 1) f32
    w1_last = w1_ref[taps - 1]                    # (C_out, C_in) bf16
    hc_ref[...] = jnp.dot(w1_last, xc_b, preferred_element_type=jnp.float32) + b1
    hp_ref[...] = jnp.dot(w1_last, xp_b, preferred_element_type=jnp.float32) + b1
    for k in range(taps - 1):                     # static, unrolled
        shift = pad - k * dilation                # > 0
        pc = jnp.dot(w1_ref[k], xc_b, preferred_element_type=jnp.float32)
        pp = jnp.dot(w1_ref[k], xp_b, preferred_element_type=jnp.float32)
        hc_ref[:, shift:] += pc[:, :tl - shift]   # in-tile contribution
        hc_ref[:, :shift] += pp[:, tl - shift:]   # halo from previous tile
        hp_ref[:, shift:] += pp[:, :tl - shift]   # prev-tile h tail (recompute)
        # TODO(synk): do these lane-misaligned shifted adds with pltpu.roll +
        # iota mask on the idle XLU slot instead of masked slice stores.
    hcb_ref[...] = jnp.maximum(hc_ref[...], 0.0).astype(jnp.bfloat16)
    hp = jnp.maximum(hp_ref[...], 0.0)
    # conv2's causal left padding at the sequence start must be zeros, not
    # relu(conv1(zero input)).
    hpb_ref[...] = jnp.where(first, 0.0, hp).astype(jnp.bfloat16)

    # ---- conv2: same accumulating structure over h. ----
    b2 = b2_ref[...]
    w2_last = w2_ref[taps - 1]
    acc_ref[...] = jnp.dot(w2_last, hcb_ref[...],
                           preferred_element_type=jnp.float32) + b2
    for k in range(taps - 1):
        shift = pad - k * dilation
        qc = jnp.dot(w2_ref[k], hcb_ref[...], preferred_element_type=jnp.float32)
        qp = jnp.dot(w2_ref[k], hpb_ref[...], preferred_element_type=jnp.float32)
        acc_ref[:, shift:] += qc[:, :tl - shift]
        acc_ref[:, :shift] += qp[:, tl - shift:]
    out = jnp.maximum(acc_ref[...], 0.0)          # (C_out, T) f32

    # ---- residual (1x1 conv if channel counts differ) + fused add/ReLU. ----
    if has_down:
        res = jnp.dot(wd_ref[...], xc_b, preferred_element_type=jnp.float32)
        res = res + bd_ref[...]
    else:
        res = xc
    o_ref[...] = jnp.maximum(out + res, 0.0)[None].astype(o_ref.dtype)
    # TODO(synk): nn.Dropout is stochastic only in training; identity here.


# ------------------------------ wrappers --------------------------------------


def weight_norm_weight(v, g):
    # PyTorch weight_norm (dim=0): w = g * v / ||v|| with norm over (in, k).
    norm = jnp.sqrt(jnp.sum(v * v, axis=(1, 2), keepdims=True))
    return g[:, None, None] * v / norm


def prepare_block_params(params):
    """weight_norm + layout/dtype prep, hoisted out of the forward path."""
    c_out = params["b1"].shape[0]
    w1 = weight_norm_weight(params["v1"], params["g1"])      # (C_out, C_in, K)
    w2 = weight_norm_weight(params["v2"], params["g2"])
    prep = {
        # (K, C_out, C_in): one weight slab per tap, bf16 MXU operand.
        "w1": jnp.transpose(w1, (2, 0, 1)).astype(jnp.bfloat16),
        "w2": jnp.transpose(w2, (2, 0, 1)).astype(jnp.bfloat16),
        "b1": params["b1"].reshape(c_out, 1).astype(jnp.float32),
        "b2": params["b2"].reshape(c_out, 1).astype(jnp.float32),
    }
    if "wd" in params:
        prep["wd"] = params["wd"][:, :, 0].astype(jnp.bfloat16)
        prep["bd"] = params["bd"].reshape(c_out, 1).astype(jnp.float32)
    return prep


def temporal_block(prep, x_ncl, *, kernel_size, dilation, l_tile=None):
    """Fused TemporalBlock forward. x_ncl: (N, C_in, L) -> (N, C_out, L)."""
    n, c_in, l = x_ncl.shape
    k = kernel_size
    c_out = prep["b1"].shape[0]
    pad = (k - 1) * dilation
    assert pad < l, "sequence shorter than one conv's receptive field"

    # L tiling: a tile needs the previous tile as halo for the two stacked
    # causal convs, so it must cover 2*pad columns; otherwise fall back to a
    # single full-L tile (which is always correct).
    tl = l if l_tile is None else min(l_tile, l)
    if tl < 2 * pad or l % tl != 0:
        tl = l
    has_down = "wd" in prep

    inputs = [x_ncl, x_ncl, prep["w1"], prep["b1"], prep["w2"], prep["b2"]]
    in_specs = [
        pl.BlockSpec((1, c_in, tl), lambda b, j: (b, 0, j)),                      # cur tile
        pl.BlockSpec((1, c_in, tl), lambda b, j: (b, 0, jnp.maximum(j - 1, 0))),  # halo tile
        pl.BlockSpec((k, c_out, c_in), lambda b, j: (0, 0, 0)),
        pl.BlockSpec((c_out, 1), lambda b, j: (0, 0)),
        pl.BlockSpec((k, c_out, c_out), lambda b, j: (0, 0, 0)),
        pl.BlockSpec((c_out, 1), lambda b, j: (0, 0)),
    ]
    if has_down:
        inputs += [prep["wd"], prep["bd"]]
        in_specs += [pl.BlockSpec((c_out, c_in), lambda b, j: (0, 0)),
                     pl.BlockSpec((c_out, 1), lambda b, j: (0, 0))]

    kern = functools.partial(_temporal_block_kernel, taps=k, dilation=dilation,
                             has_down=has_down)
    return pl.pallas_call(
        kern,
        out_shape=jax.ShapeDtypeStruct((n, c_out, l), x_ncl.dtype),
        grid=(n, l // tl),
        in_specs=in_specs,
        out_specs=pl.BlockSpec((1, c_out, tl), lambda b, j: (b, 0, j)),
        scratch_shapes=[
            pltpu.VMEM((c_out, tl), jnp.float32),    # hc: conv1 accumulator (cur)
            pltpu.VMEM((c_out, tl), jnp.float32),    # hp: conv1 accumulator (prev halo)
            pltpu.VMEM((c_out, tl), jnp.bfloat16),   # hcb: conv2 operand (cur)
            pltpu.VMEM((c_out, tl), jnp.bfloat16),   # hpb: conv2 operand (halo)
            pltpu.VMEM((c_out, tl), jnp.float32),    # acc: conv2 accumulator
        ],
        compiler_params=pltpu.CompilerParams(
            dimension_semantics=("parallel", "parallel"),
            vmem_limit_bytes=64 * 1024 * 1024),
    )(*inputs)


@functools.partial(jax.jit, static_argnames=("kernel_size", "l_tile"))
def tcn_forward(prepared_list, x_ncl, *, kernel_size, l_tile=None):
    x = x_ncl                                     # stays NCL (L on lanes)
    for i, prep in enumerate(prepared_list):
        x = temporal_block(prep, x, kernel_size=kernel_size, dilation=2 ** i,
                           l_tile=l_tile)
    return x


# ------------------------------ parameters ------------------------------------


def init_temporal_block(key, n_in, n_out, kernel_size):
    ks = jax.random.split(key, 8)
    p = {
        "v1": 0.01 * jax.random.normal(ks[0], (n_out, n_in, kernel_size), jnp.float32),
        "g1": 1.0 + 0.1 * jax.random.uniform(ks[1], (n_out,), jnp.float32),
        "b1": 0.1 * jax.random.normal(ks[2], (n_out,), jnp.float32),
        "v2": 0.01 * jax.random.normal(ks[3], (n_out, n_out, kernel_size), jnp.float32),
        "g2": 1.0 + 0.1 * jax.random.uniform(ks[4], (n_out,), jnp.float32),
        "b2": 0.1 * jax.random.normal(ks[5], (n_out,), jnp.float32),
    }
    if n_in != n_out:
        p["wd"] = 0.01 * jax.random.normal(ks[6], (n_out, n_in, 1), jnp.float32)
        p["bd"] = 0.1 * jax.random.normal(ks[7], (n_out,), jnp.float32)
    return p


# -------------------- pure-JAX reference (mirrors PyTorch) --------------------


def _torch_conv1d(x_ncl, w_oik, b, *, padding, dilation, operand_dtype):
    y = lax.conv_general_dilated(
        x_ncl.astype(operand_dtype), w_oik.astype(operand_dtype),
        window_strides=(1,), padding=[(padding, padding)],
        rhs_dilation=(dilation,), dimension_numbers=("NCH", "OIH", "NCH"),
        preferred_element_type=jnp.float32)
    return y + b[None, :, None]


def ref_temporal_block(params, x_ncl, *, kernel_size, dilation,
                       operand_dtype=jnp.float32):
    pad = (kernel_size - 1) * dilation
    w1 = weight_norm_weight(params["v1"], params["g1"])
    w2 = weight_norm_weight(params["v2"], params["g2"])
    out = jnp.maximum(_torch_conv1d(x_ncl, w1, params["b1"], padding=pad,
                                    dilation=dilation,
                                    operand_dtype=operand_dtype), 0.0)
    out = jnp.maximum(_torch_conv1d(out, w2, params["b2"], padding=pad,
                                    dilation=dilation,
                                    operand_dtype=operand_dtype), 0.0)
    if pad != 0:
        out = out[:, :, :-pad]
    if "wd" in params:
        res = _torch_conv1d(x_ncl, params["wd"], params["bd"], padding=0,
                            dilation=1, operand_dtype=operand_dtype)
    else:
        res = x_ncl
    ll = min(out.shape[2], res.shape[2])
    return jnp.maximum(out[:, :, :ll] + res[:, :, :ll], 0.0)


# ----------------------------------- main --------------------------------------


if __name__ == "__main__":
    num_inputs = 8
    num_channels = [16, 16]
    kernel_size = 4
    N, L = 2, 256
    L_TILE = 128          # exercises the multi-tile halo path (2 tiles/sample)

    key = jax.random.PRNGKey(0)
    kx, *pkeys = jax.random.split(key, 1 + len(num_channels))
    x = jax.random.normal(kx, (N, num_inputs, L), jnp.float32)

    params_list = []
    in_ch = num_inputs
    for i, out_ch in enumerate(num_channels):
        params_list.append(init_temporal_block(pkeys[i], in_ch, out_ch, kernel_size))
        in_ch = out_ch

    # Hoisted weight_norm / layout / bf16 prep (done once, not per forward).
    prepared = [prepare_block_params(p) for p in params_list]

    y = tcn_forward(prepared, x, kernel_size=kernel_size, l_tile=L_TILE)
    y = jax.block_until_ready(y)

    def run_ref(operand_dtype):
        r = x
        for i, p in enumerate(params_list):
            r = ref_temporal_block(p, r, kernel_size=kernel_size,
                                   dilation=2 ** i, operand_dtype=operand_dtype)
        return r

    # Tight check against a reference with the same bf16 rounding points
    # (catches any structural/indexing bug), plus a loose check against the
    # literal f32 PyTorch-semantics reference (bf16 MXU operand tolerance).
    y_ref_mixed = run_ref(jnp.bfloat16)
    y_ref_f32 = run_ref(jnp.float32)

    assert y.shape == (N, num_channels[-1], L), y.shape
    assert jnp.allclose(y, y_ref_mixed, rtol=1e-2, atol=1e-2), \
        float(jnp.max(jnp.abs(y - y_ref_mixed)))
    assert jnp.allclose(y, y_ref_f32, rtol=1e-1, atol=1e-1), \
        float(jnp.max(jnp.abs(y - y_ref_f32)))
    print("KERNEL_OK")
</pallas_src>

<mosaic_0001>
module attributes {stable_mosaic.version = 11 : i64} {
  func.func @_temporal_block_kernel(%arg0: i32, %arg1: i32, %arg2: memref<1x8x128xf32, #tpu.memory_space<vmem>>, %arg3: memref<1x8x128xf32, #tpu.memory_space<vmem>>, %arg4: memref<4x16x8xbf16, #tpu.memory_space<vmem>>, %arg5: memref<16x1xf32, #tpu.memory_space<vmem>>, %arg6: memref<4x16x16xbf16, #tpu.memory_space<vmem>>, %arg7: memref<16x1xf32, #tpu.memory_space<vmem>>, %arg8: memref<16x8xbf16, #tpu.memory_space<vmem>>, %arg9: memref<16x1xf32, #tpu.memory_space<vmem>>, %arg10: memref<1x16x128xf32, #tpu.memory_space<vmem>>, %arg11: memref<16x128xf32, #tpu.memory_space<vmem>>, %arg12: memref<16x128xf32, #tpu.memory_space<vmem>>, %arg13: memref<16x128xbf16, #tpu.memory_space<vmem>>, %arg14: memref<16x128xbf16, #tpu.memory_space<vmem>>, %arg15: memref<16x128xf32, #tpu.memory_space<vmem>>) attributes {dimension_semantics = [#tpu.dimension_semantics<parallel>, #tpu.dimension_semantics<parallel>], iteration_bounds = array<i64: 2, 2>, scalar_prefetch = 0 : i64, scratch_operands = 5 : i64, tpu.core_type = #tpu.core_type<tc>, window_params = [{transform_indices = @transform_0, window_bounds = array<i64: 1, 8, 128>}, {transform_indices = @transform_1, window_bounds = array<i64: 1, 8, 128>}, {pipeline_mode = #tpu.pipeline_mode<synchronous>, transform_indices = @transform_2, window_bounds = array<i64: 4, 16, 8>}, {pipeline_mode = #tpu.pipeline_mode<synchronous>, transform_indices = @transform_3, window_bounds = array<i64: 16, 1>}, {pipeline_mode = #tpu.pipeline_mode<synchronous>, transform_indices = @transform_4, window_bounds = array<i64: 4, 16, 16>}, {pipeline_mode = #tpu.pipeline_mode<synchronous>, transform_indices = @transform_5, window_bounds = array<i64: 16, 1>}, {pipeline_mode = #tpu.pipeline_mode<synchronous>, transform_indices = @transform_6, window_bounds = array<i64: 16, 8>}, {pipeline_mode = #tpu.pipeline_mode<synchronous>, transform_indices = @transform_7, window_bounds = array<i64: 16, 1>}, {transform_indices = @transform_8, window_bounds = array<i64: 1, 16, 128>}]} {
    %c0_i32 = arith.constant 0 : i32
    %0 = arith.cmpi eq, %arg1, %c0_i32 : i32
    %c0 = arith.constant 0 : index
    %c0_0 = arith.constant 0 : index
    %c0_1 = arith.constant 0 : index
    %1 = vector.load %arg2[%c0, %c0_0, %c0_1] : memref<1x8x128xf32, #tpu.memory_space<vmem>>, vector<1x8x128xf32>
    %2 = vector.shape_cast %1 : vector<1x8x128xf32> to vector<8x128xf32>
    %3 = arith.truncf %2 : vector<8x128xf32> to vector<8x128xbf16>
    %c0_2 = arith.constant 0 : index
    %c0_3 = arith.constant 0 : index
    %c0_4 = arith.constant 0 : index
    %4 = vector.load %arg3[%c0_2, %c0_3, %c0_4] : memref<1x8x128xf32, #tpu.memory_space<vmem>>, vector<1x8x128xf32>
    %5 = vector.shape_cast %4 : vector<1x8x128xf32> to vector<8x128xf32>
    %cst = arith.constant 0.000000e+00 : f32
    %6 = vector.broadcast %cst : f32 to vector<8x128xf32>
    %7 = arith.select %0, %6, %5 : vector<8x128xf32>
    %8 = arith.truncf %7 : vector<8x128xf32> to vector<8x128xbf16>
    %c0_5 = arith.constant 0 : index
    %c0_6 = arith.constant 0 : index
    %9 = vector.load %arg5[%c0_5, %c0_6] : memref<16x1xf32, #tpu.memory_space<vmem>>, vector<16x1xf32>
    %c3 = arith.constant 3 : index
    %c0_7 = arith.constant 0 : index
    %c0_8 = arith.constant 0 : index
    %10 = vector.load %arg4[%c3, %c0_7, %c0_8] : memref<4x16x8xbf16, #tpu.memory_space<vmem>>, vector<1x16x8xbf16>
    %11 = vector.shape_cast %10 : vector<1x16x8xbf16> to vector<16x8xbf16>
    %cst_9 = arith.constant dense<0.000000e+00> : vector<16x128xf32>
    %12 = tpu.matmul %11, %3, %cst_9 {dimension_numbers = #tpu.dot_dimension_numbers<[1], [0], [0], [1], [0, 0, 1, 1], [], []>} : vector<16x8xbf16>, vector<8x128xbf16>, vector<16x128xf32> -> vector<16x128xf32>
    %13 = vector.broadcast %9 : vector<16x1xf32> to vector<16x128xf32>
    %14 = arith.addf %12, %13 : vector<16x128xf32>
    %c0_10 = arith.constant 0 : index
    %c0_11 = arith.constant 0 : index
    %15 = vector.load %arg11[%c0_10, %c0_11] : memref<16x128xf32, #tpu.memory_space<vmem>>, vector<16x128xf32>
    tpu.vector_store %arg11[%c0_10, %c0_11], %14 {strides = array<i32>} : memref<16x128xf32, #tpu.memory_space<vmem>>, vector<16x128xf32>,
    %cst_12 = arith.constant dense<0.000000e+00> : vector<16x128xf32>
    %16 = tpu.matmul %11, %8, %cst_12 {dimension_numbers = #tpu.dot_dimension_numbers<[1], [0], [0], [1], [0, 0, 1, 1], [], []>} : vector<16x8xbf16>, vector<8x128xbf16>, vector<16x128xf32> -> vector<16x128xf32>
    %17 = vector.broadcast %9 : vector<16x1xf32> to vector<16x128xf32>
    %18 = arith.addf %16, %17 : vector<16x128xf32>
    %c0_13 = arith.constant 0 : index
    %c0_14 = arith.constant 0 : index
    %19 = vector.load %arg12[%c0_13, %c0_14] : memref<16x128xf32, #tpu.memory_space<vmem>>, vector<16x128xf32>
    tpu.vector_store %arg12[%c0_13, %c0_14], %18 {strides = array<i32>} : memref<16x128xf32, #tpu.memory_space<vmem>>, vector<16x128xf32>,
    %c0_15 = arith.constant 0 : index
    %c0_16 = arith.constant 0 : index
    %c0_17 = arith.constant 0 : index
    %20 = vector.load %arg4[%c0_15, %c0_16, %c0_17] : memref<4x16x8xbf16, #tpu.memory_space<vmem>>, vector<1x16x8xbf16>
    %21 = vector.shape_cast %20 : vector<1x16x8xbf16> to vector<16x8xbf16>
    %cst_18 = arith.constant dense<0.000000e+00> : vector<16x128xf32>
    %22 = tpu.matmul %21, %3, %cst_18 {dimension_numbers = #tpu.dot_dimension_numbers<[1], [0], [0], [1], [0, 0, 1, 1], [], []>} : vector<16x8xbf16>, vector<8x128xbf16>, vector<16x128xf32> -> vector<16x128xf32>
    %c0_19 = arith.constant 0 : index
    %c0_20 = arith.constant 0 : index
    %c0_21 = arith.constant 0 : index
    %23 = vector.load %arg4[%c0_19, %c0_20, %c0_21] : memref<4x16x8xbf16, #tpu.memory_space<vmem>>, vector<1x16x8xbf16>
    %24 = vector.shape_cast %23 : vector<1x16x8xbf16> to vector<16x8xbf16>
    %cst_22 = arith.constant dense<0.000000e+00> : vector<16x128xf32>
    %25 = tpu.matmul %24, %8, %cst_22 {dimension_numbers = #tpu.dot_dimension_numbers<[1], [0], [0], [1], [0, 0, 1, 1], [], []>} : vector<16x8xbf16>, vector<8x128xbf16>, vector<16x128xf32> -> vector<16x128xf32>
    %c0_23 = arith.constant 0 : index
    %c3_24 = arith.constant 3 : index
    %26 = vector.load %arg11[%c0_23, %c3_24] : memref<16x128xf32, #tpu.memory_space<vmem>>, vector<16x125xf32>
    %27 = vector.extract_strided_slice %22 {offsets = [0, 0], sizes = [16, 125], strides = [1, 1]} : vector<16x128xf32> to vector<16x125xf32>
    %28 = arith.addf %26, %27 : vector<16x125xf32>
    %c0_25 = arith.constant 0 : index
    %c3_26 = arith.constant 3 : index
    %29 = vector.load %arg11[%c0_25, %c3_26] : memref<16x128xf32, #tpu.memory_space<vmem>>, vector<16x125xf32>
    tpu.vector_store %arg11[%c0_25, %c3_26], %28 {strides = array<i32>} : memref<16x128xf32, #tpu.memory_space<vmem>>, vector<16x125xf32>,
    %c0_27 = arith.constant 0 : index
    %c0_28 = arith.constant 0 : index
    %30 = vector.load %arg11[%c0_27, %c0_28] : memref<16x128xf32, #tpu.memory_space<vmem>>, vector<16x3xf32>
    %31 = vector.extract_strided_slice %25 {offsets = [0, 125], sizes = [16, 3], strides = [1, 1]} : vector<16x128xf32> to vector<16x3xf32>
    %32 = arith.addf %30, %31 : vector<16x3xf32>
    %c0_29 = arith.constant 0 : index
    %c0_30 = arith.constant 0 : index
    %33 = vector.load %arg11[%c0_29, %c0_30] : memref<16x128xf32, #tpu.memory_space<vmem>>, vector<16x3xf32>
    tpu.vector_store %arg11[%c0_29, %c0_30], %32 {strides = array<i32>} : memref<16x128xf32, #tpu.memory_space<vmem>>, vector<16x3xf32>,
    %c0_31 = arith.constant 0 : index
    %c3_32 = arith.constant 3 : index
    %34 = vector.load %arg12[%c0_31, %c3_32] : memref<16x128xf32, #tpu.memory_space<vmem>>, vector<16x125xf32>
    %35 = vector.extract_strided_slice %25 {offsets = [0, 0], sizes = [16, 125], strides = [1, 1]} : vector<16x128xf32> to vector<16x125xf32>
    %36 = arith.addf %34, %35 : vector<16x125xf32>
    %c0_33 = arith.constant 0 : index
    %c3_34 = arith.constant 3 : index
    %37 = vector.load %arg12[%c0_33, %c3_34] : memref<16x128xf32, #tpu.memory_space<vmem>>, vector<16x125xf32>
    tpu.vector_store %arg12[%c0_33, %c3_34], %36 {strides = array<i32>} : memref<16x128xf32, #tpu.memory_space<vmem>>, vector<16x125xf32>,
    %c1 = arith.constant 1 : index
    %c0_35 = arith.constant 0 : index
    %c0_36 = arith.constant 0 : index
    %38 = vector.load %arg4[%c1, %c0_35, %c0_36] : memref<4x16x8xbf16, #tpu.memory_space<vmem>>, vector<1x16x8xbf16>
    %39 = vector.shape_cast %38 : vector<1x16x8xbf16> to vector<16x8xbf16>
    %cst_37 = arith.constant dense<0.000000e+00> : vector<16x128xf32>
    %40 = tpu.matmul %39, %3, %cst_37 {dimension_numbers = #tpu.dot_dimension_numbers<[1], [0], [0], [1], [0, 0, 1, 1], [], []>} : vector<16x8xbf16>, vector<8x128xbf16>, vector<16x128xf32> -> vector<16x128xf32>
    %c1_38 = arith.constant 1 : index
    %c0_39 = arith.constant 0 : index
    %c0_40 = arith.constant 0 : index
    %41 = vector.load %arg4[%c1_38, %c0_39, %c0_40] : memref<4x16x8xbf16, #tpu.memory_space<vmem>>, vector<1x16x8xbf16>
    %42 = vector.shape_cast %41 : vector<1x16x8xbf16> to vector<16x8xbf16>
    %cst_41 = arith.constant dense<0.000000e+00> : vector<16x128xf32>
    %43 = tpu.matmul %42, %8, %cst_41 {dimension_numbers = #tpu.dot_dimension_numbers<[1], [0], [0], [1], [0, 0, 1, 1], [], []>} : vector<16x8xbf16>, vector<8x128xbf16>, vector<16x128xf32> -> vector<16x128xf32>
    %c0_42 = arith.constant 0 : index
    %c2 = arith.constant 2 : index
    %44 = vector.load %arg11[%c0_42, %c2] : memref<16x128xf32, #tpu.memory_space<vmem>>, vector<16x126xf32>
    %45 = vector.extract_strided_slice %40 {offsets = [0, 0], sizes = [16, 126], strides = [1, 1]} : vector<16x128xf32> to vector<16x126xf32>
    %46 = arith.addf %44, %45 : vector<16x126xf32>
    %c0_43 = arith.constant 0 : index
    %c2_44 = arith.constant 2 : index
    %47 = vector.load %arg11[%c0_43, %c2_44] : memref<16x128xf32, #tpu.memory_space<vmem>>, vector<16x126xf32>
    tpu.vector_store %arg11[%c0_43, %c2_44], %46 {strides = array<i32>} : memref<16x128xf32, #tpu.memory_space<vmem>>, vector<16x126xf32>,
    %c0_45 = arith.constant 0 : index
    %c0_46 = arith.constant 0 : index
    %48 = vector.load %arg11[%c0_45, %c0_46] : memref<16x128xf32, #tpu.memory_space<vmem>>, vector<16x2xf32>
    %49 = vector.extract_strided_slice %43 {offsets = [0, 126], sizes = [16, 2], strides = [1, 1]} : vector<16x128xf32> to vector<16x2xf32>
    %50 = arith.addf %48, %49 : vector<16x2xf32>
    %c0_47 = arith.constant 0 : index
    %c0_48 = arith.constant 0 : index
    %51 = vector.load %arg11[%c0_47, %c0_48] : memref<16x128xf32, #tpu.memory_space<vmem>>, vector<16x2xf32>
    tpu.vector_store %arg11[%c0_47, %c0_48], %50 {strides = array<i32>} : memref<16x128xf32, #tpu.memory_space<vmem>>, vector<16x2xf32>,
    %c0_49 = arith.constant 0 : index
    %c2_50 = arith.constant 2 : index
    %52 = vector.load %arg12[%c0_49, %c2_50] : memref<16x128xf32, #tpu.memory_space<vmem>>, vector<16x126xf32>
    %53 = vector.extract_strided_slice %43 {offsets = [0, 0], sizes = [16, 126], strides = [1, 1]} : vector<16x128xf32> to vector<16x126xf32>
    %54 = arith.addf %52, %53 : vector<16x126xf32>
    %c0_51 = arith.constant 0 : index
    %c2_52 = arith.constant 2 : index
    %55 = vector.load %arg12[%c0_51, %c2_52] : memref<16x128xf32, #tpu.memory_space<vmem>>, vector<16x126xf32>
    tpu.vector_store %arg12[%c0_51, %c2_52], %54 {strides = array<i32>} : memref<16x128xf32, #tpu.memory_space<vmem>>, vector<16x126xf32>,
    %c2_53 = arith.constant 2 : index
    %c0_54 = arith.constant 0 : index
    %c0_55 = arith.constant 0 : index
    %56 = vector.load %arg4[%c2_53, %c0_54, %c0_55] : memref<4x16x8xbf16, #tpu.memory_space<vmem>>, vector<1x16x8xbf16>
    %57 = vector.shape_cast %56 : vector<1x16x8xbf16> to vector<16x8xbf16>
    %cst_56 = arith.constant dense<0.000000e+00> : vector<16x128xf32>
    %58 = tpu.matmul %57, %3, %cst_56 {dimension_numbers = #tpu.dot_dimension_numbers<[1], [0], [0], [1], [0, 0, 1, 1], [], []>} : vector<16x8xbf16>, vector<8x128xbf16>, vector<16x128xf32> -> vector<16x128xf32>
    %c2_57 = arith.constant 2 : index
    %c0_58 = arith.constant 0 : index
    %c0_59 = arith.constant 0 : index
    %59 = vector.load %arg4[%c2_57, %c0_58, %c0_59] : memref<4x16x8xbf16, #tpu.memory_space<vmem>>, vector<1x16x8xbf16>
    %60 = vector.shape_cast %59 : vector<1x16x8xbf16> to vector<16x8xbf16>
    %cst_60 = arith.constant dense<0.000000e+00> : vector<16x128xf32>
    %61 = tpu.matmul %60, %8, %cst_60 {dimension_numbers = #tpu.dot_dimension_numbers<[1], [0], [0], [1], [0, 0, 1, 1], [], []>} : vector<16x8xbf16>, vector<8x128xbf16>, vector<16x128xf32> -> vector<16x128xf32>
    %c0_61 = arith.constant 0 : index
    %c1_62 = arith.constant 1 : index
    %62 = vector.load %arg11[%c0_61, %c1_62] : memref<16x128xf32, #tpu.memory_space<vmem>>, vector<16x127xf32>
    %63 = vector.extract_strided_slice %58 {offsets = [0, 0], sizes = [16, 127], strides = [1, 1]} : vector<16x128xf32> to vector<16x127xf32>
    %64 = arith.addf %62, %63 : vector<16x127xf32>
    %c0_63 = arith.constant 0 : index
    %c1_64 = arith.constant 1 : index
    %65 = vector.load %arg11[%c0_63, %c1_64] : memref<16x128xf32, #tpu.memory_space<vmem>>, vector<16x127xf32>
    tpu.vector_store %arg11[%c0_63, %c1_64], %64 {strides = array<i32>} : memref<16x128xf32, #tpu.memory_space<vmem>>, vector<16x127xf32>,
    %c0_65 = arith.constant 0 : index
    %c0_66 = arith.constant 0 : index
    %66 = vector.load %arg11[%c0_65, %c0_66] : memref<16x128xf32, #tpu.memory_space<vmem>>, vector<16x1xf32>
    %67 = vector.extract_strided_slice %61 {offsets = [0, 127], sizes = [16, 1], strides = [1, 1]} : vector<16x128xf32> to vector<16x1xf32>
    %68 = arith.addf %66, %67 : vector<16x1xf32>
    %c0_67 = arith.constant 0 : index
    %c0_68 = arith.constant 0 : index
    %69 = vector.load %arg11[%c0_67, %c0_68] : memref<16x128xf32, #tpu.memory_space<vmem>>, vector<16x1xf32>
    tpu.vector_store %arg11[%c0_67, %c0_68], %68 {strides = array<i32>} : memref<16x128xf32, #tpu.memory_space<vmem>>, vector<16x1xf32>,
    %c0_69 = arith.constant 0 : index
    %c1_70 = arith.constant 1 : index
    %70 = vector.load %arg12[%c0_69, %c1_70] : memref<16x128xf32, #tpu.memory_space<vmem>>, vector<16x127xf32>
    %71 = vector.extract_strided_slice %61 {offsets = [0, 0], sizes = [16, 127], strides = [1, 1]} : vector<16x128xf32> to vector<16x127xf32>
    %72 = arith.addf %70, %71 : vector<16x127xf32>
    %c0_71 = arith.constant 0 : index
    %c1_72 = arith.constant 1 : index
    %73 = vector.load %arg12[%c0_71, %c1_72] : memref<16x128xf32, #tpu.memory_space<vmem>>, vector<16x127xf32>
    tpu.vector_store %arg12[%c0_71, %c1_72], %72 {strides = array<i32>} : memref<16x128xf32, #tpu.memory_space<vmem>>, vector<16x127xf32>,
    %c0_73 = arith.constant 0 : index
    %c0_74 = arith.constant 0 : index
    %74 = vector.load %arg11[%c0_73, %c0_74] : memref<16x128xf32, #tpu.memory_space<vmem>>, vector<16x128xf32>
    %cst_75 = arith.constant 0.000000e+00 : f32
    %75 = vector.broadcast %cst_75 : f32 to vector<16x128xf32>
    %76 = arith.maximumf %74, %75 : vector<16x128xf32>
    %77 = arith.truncf %76 : vector<16x128xf32> to vector<16x128xbf16>
    %c0_76 = arith.constant 0 : index
    %c0_77 = arith.constant 0 : index
    %78 = vector.load %arg13[%c0_76, %c0_77] : memref<16x128xbf16, #tpu.memory_space<vmem>>, vector<16x128xbf16>
    tpu.vector_store %arg13[%c0_76, %c0_77], %77 {strides = array<i32>} : memref<16x128xbf16, #tpu.memory_space<vmem>>, vector<16x128xbf16>,
    %c0_78 = arith.constant 0 : index
    %c0_79 = arith.constant 0 : index
    %79 = vector.load %arg12[%c0_78, %c0_79] : memref<16x128xf32, #tpu.memory_space<vmem>>, vector<16x128xf32>
    %cst_80 = arith.constant 0.000000e+00 : f32
    %80 = vector.broadcast %cst_80 : f32 to vector<16x128xf32>
    %81 = arith.maximumf %79, %80 : vector<16x128xf32>
    %cst_81 = arith.constant 0.000000e+00 : f32
    %82 = vector.broadcast %cst_81 : f32 to vector<16x128xf32>
    %83 = arith.select %0, %82, %81 : vector<16x128xf32>
    %84 = arith.truncf %83 : vector<16x128xf32> to vector<16x128xbf16>
    %c0_82 = arith.constant 0 : index
    %c0_83 = arith.constant 0 : index
    %85 = vector.load %arg14[%c0_82, %c0_83] : memref<16x128xbf16, #tpu.memory_space<vmem>>, vector<16x128xbf16>
    tpu.vector_store %arg14[%c0_82, %c0_83], %84 {strides = array<i32>} : memref<16x128xbf16, #tpu.memory_space<vmem>>, vector<16x128xbf16>,
    %c0_84 = arith.constant 0 : index
    %c0_85 = arith.constant 0 : index
    %86 = vector.load %arg7[%c0_84, %c0_85] : memref<16x1xf32, #tpu.memory_space<vmem>>, vector<16x1xf32>
    %c3_86 = arith.constant 3 : index
    %c0_87 = arith.constant 0 : index
    %c0_88 = arith.constant 0 : index
    %87 = vector.load %arg6[%c3_86, %c0_87, %c0_88] : memref<4x16x16xbf16, #tpu.memory_space<vmem>>, vector<1x16x16xbf16>
    %88 = vector.shape_cast %87 : vector<1x16x16xbf16> to vector<16x16xbf16>
    %c0_89 = arith.constant 0 : index
    %c0_90 = arith.constant 0 : index
    %89 = vector.load %arg13[%c0_89, %c0_90] : memref<16x128xbf16, #tpu.memory_space<vmem>>, vector<16x128xbf16>
    %cst_91 = arith.constant dense<0.000000e+00> : vector<16x128xf32>
    %90 = tpu.matmul %88, %89, %cst_91 {dimension_numbers = #tpu.dot_dimension_numbers<[1], [0], [0], [1], [0, 0, 1, 1], [], []>} : vector<16x16xbf16>, vector<16x128xbf16>, vector<16x128xf32> -> vector<16x128xf32>
    %91 = vector.broadcast %86 : vector<16x1xf32> to vector<16x128xf32>
    %92 = arith.addf %90, %91 : vector<16x128xf32>
    %c0_92 = arith.constant 0 : index
    %c0_93 = arith.constant 0 : index
    %93 = vector.load %arg15[%c0_92, %c0_93] : memref<16x128xf32, #tpu.memory_space<vmem>>, vector<16x128xf32>
    tpu.vector_store %arg15[%c0_92, %c0_93], %92 {strides = array<i32>} : memref<16x128xf32, #tpu.memory_space<vmem>>, vector<16x128xf32>,
    %c0_94 = arith.constant 0 : index
    %c0_95 = arith.constant 0 : index
    %c0_96 = arith.constant 0 : index
    %94 = vector.load %arg6[%c0_94, %c0_95, %c0_96] : memref<4x16x16xbf16, #tpu.memory_space<vmem>>, vector<1x16x16xbf16>
    %95 = vector.shape_cast %94 : vector<1x16x16xbf16> to vector<16x16xbf16>
    %c0_97 = arith.constant 0 : index
    %c0_98 = arith.constant 0 : index
    %96 = vector.load %arg13[%c0_97, %c0_98] : memref<16x128xbf16, #tpu.memory_space<vmem>>, vector<16x128xbf16>
    %cst_99 = arith.constant dense<0.000000e+00> : vector<16x128xf32>
    %97 = tpu.matmul %95, %96, %cst_99 {dimension_numbers = #tpu.dot_dimension_numbers<[1], [0], [0], [1], [0, 0, 1, 1], [], []>} : vector<16x16xbf16>, vector<16x128xbf16>, vector<16x128xf32> -> vector<16x128xf32>
    %c0_100 = arith.constant 0 : index
    %c0_101 = arith.constant 0 : index
    %c0_102 = arith.constant 0 : index
    %98 = vector.load %arg6[%c0_100, %c0_101, %c0_102] : memref<4x16x16xbf16, #tpu.memory_space<vmem>>, vector<1x16x16xbf16>
    %99 = vector.shape_cast %98 : vector<1x16x16xbf16> to vector<16x16xbf16>
    %c0_103 = arith.constant 0 : index
    %c0_104 = arith.constant 0 : index
    %100 = vector.load %arg14[%c0_103, %c0_104] : memref<16x128xbf16, #tpu.memory_space<vmem>>, vector<16x128xbf16>
    %cst_105 = arith.constant dense<0.000000e+00> : vector<16x128xf32>
    %101 = tpu.matmul %99, %100, %cst_105 {dimension_numbers = #tpu.dot_dimension_numbers<[1], [0], [0], [1], [0, 0, 1, 1], [], []>} : vector<16x16xbf16>, vector<16x128xbf16>, vector<16x128xf32> -> vector<16x128xf32>
    %c0_106 = arith.constant 0 : index
    %c3_107 = arith.constant 3 : index
    %102 = vector.load %arg15[%c0_106, %c3_107] : memref<16x128xf32, #tpu.memory_space<vmem>>, vector<16x125xf32>
    %103 = vector.extract_strided_slice %97 {offsets = [0, 0], sizes = [16, 125], strides = [1, 1]} : vector<16x128xf32> to vector<16x125xf32>
    %104 = arith.addf %102, %103 : vector<16x125xf32>
    %c0_108 = arith.constant 0 : index
    %c3_109 = arith.constant 3 : index
    %105 = vector.load %arg15[%c0_108, %c3_109] : memref<16x128xf32, #tpu.memory_space<vmem>>, vector<16x125xf32>
    tpu.vector_store %arg15[%c0_108, %c3_109], %104 {strides = array<i32>} : memref<16x128xf32, #tpu.memory_space<vmem>>, vector<16x125xf32>,
    %c0_110 = arith.constant 0 : index
    %c0_111 = arith.constant 0 : index
    %106 = vector.load %arg15[%c0_110, %c0_111] : memref<16x128xf32, #tpu.memory_space<vmem>>, vector<16x3xf32>
    %107 = vector.extract_strided_slice %101 {offsets = [0, 125], sizes = [16, 3], strides = [1, 1]} : vector<16x128xf32> to vector<16x3xf32>
    %108 = arith.addf %106, %107 : vector<16x3xf32>
    %c0_112 = arith.constant 0 : index
    %c0_113 = arith.constant 0 : index
    %109 = vector.load %arg15[%c0_112, %c0_113] : memref<16x128xf32, #tpu.memory_space<vmem>>, vector<16x3xf32>
    tpu.vector_store %arg15[%c0_112, %c0_113], %108 {strides = array<i32>} : memref<16x128xf32, #tpu.memory_space<vmem>>, vector<16x3xf32>,
    %c1_114 = arith.constant 1 : index
    %c0_115 = arith.constant 0 : index
    %c0_116 = arith.constant 0 : index
    %110 = vector.load %arg6[%c1_114, %c0_115, %c0_116] : memref<4x16x16xbf16, #tpu.memory_space<vmem>>, vector<1x16x16xbf16>
    %111 = vector.shape_cast %110 : vector<1x16x16xbf16> to vector<16x16xbf16>
    %c0_117 = arith.constant 0 : index
    %c0_118 = arith.constant 0 : index
    %112 = vector.load %arg13[%c0_117, %c0_118] : memref<16x128xbf16, #tpu.memory_space<vmem>>, vector<16x128xbf16>
    %cst_119 = arith.constant dense<0.000000e+00> : vector<16x128xf32>
    %113 = tpu.matmul %111, %112, %cst_119 {dimension_numbers = #tpu.dot_dimension_numbers<[1], [0], [0], [1], [0, 0, 1, 1], [], []>} : vector<16x16xbf16>, vector<16x128xbf16>, vector<16x128xf32> -> vector<16x128xf32>
    %c1_120 = arith.constant 1 : index
    %c0_121 = arith.constant 0 : index
    %c0_122 = arith.constant 0 : index
    %114 = vector.load %arg6[%c1_120, %c0_121, %c0_122] : memref<4x16x16xbf16, #tpu.memory_space<vmem>>, vector<1x16x16xbf16>
    %115 = vector.shape_cast %114 : vector<1x16x16xbf16> to vector<16x16xbf16>
    %c0_123 = arith.constant 0 : index
    %c0_124 = arith.constant 0 : index
    %116 = vector.load %arg14[%c0_123, %c0_124] : memref<16x128xbf16, #tpu.memory_space<vmem>>, vector<16x128xbf16>
    %cst_125 = arith.constant dense<0.000000e+00> : vector<16x128xf32>
    %117 = tpu.matmul %115, %116, %cst_125 {dimension_numbers = #tpu.dot_dimension_numbers<[1], [0], [0], [1], [0, 0, 1, 1], [], []>} : vector<16x16xbf16>, vector<16x128xbf16>, vector<16x128xf32> -> vector<16x128xf32>
    %c0_126 = arith.constant 0 : index
    %c2_127 = arith.constant 2 : index
    %118 = vector.load %arg15[%c0_126, %c2_127] : memref<16x128xf32, #tpu.memory_space<vmem>>, vector<16x126xf32>
    %119 = vector.extract_strided_slice %113 {offsets = [0, 0], sizes = [16, 126], strides = [1, 1]} : vector<16x128xf32> to vector<16x126xf32>
    %120 = arith.addf %118, %119 : vector<16x126xf32>
    %c0_128 = arith.constant 0 : index
    %c2_129 = arith.constant 2 : index
    %121 = vector.load %arg15[%c0_128, %c2_129] : memref<16x128xf32, #tpu.memory_space<vmem>>, vector<16x126xf32>
    tpu.vector_store %arg15[%c0_128, %c2_129], %120 {strides = array<i32>} : memref<16x128xf32, #tpu.memory_space<vmem>>, vector<16x126xf32>,
    %c0_130 = arith.constant 0 : index
    %c0_131 = arith.constant 0 : index
    %122 = vector.load %arg15[%c0_130, %c0_131] : memref<16x128xf32, #tpu.memory_space<vmem>>, vector<16x2xf32>
    %123 = vector.extract_strided_slice %117 {offsets = [0, 126], sizes = [16, 2], strides = [1, 1]} : vector<16x128xf32> to vector<16x2xf32>
    %124 = arith.addf %122, %123 : vector<16x2xf32>
    %c0_132 = arith.constant 0 : index
    %c0_133 = arith.constant 0 : index
    %125 = vector.load %arg15[%c0_132, %c0_133] : memref<16x128xf32, #tpu.memory_space<vmem>>, vector<16x2xf32>
    tpu.vector_store %arg15[%c0_132, %c0_133], %124 {strides = array<i32>} : memref<16x128xf32, #tpu.memory_space<vmem>>, vector<16x2xf32>,
    %c2_134 = arith.constant 2 : index
    %c0_135 = arith.constant 0 : index
    %c0_136 = arith.constant 0 : index
    %126 = vector.load %arg6[%c2_134, %c0_135, %c0_136] : memref<4x16x16xbf16, #tpu.memory_space<vmem>>, vector<1x16x16xbf16>
    %127 = vector.shape_cast %126 : vector<1x16x16xbf16> to vector<16x16xbf16>
    %c0_137 = arith.constant 0 : index
    %c0_138 = arith.constant 0 : index
    %128 = vector.load %arg13[%c0_137, %c0_138] : memref<16x128xbf16, #tpu.memory_space<vmem>>, vector<16x128xbf16>
    %cst_139 = arith.constant dense<0.000000e+00> : vector<16x128xf32>
    %129 = tpu.matmul %127, %128, %cst_139 {dimension_numbers = #tpu.dot_dimension_numbers<[1], [0], [0], [1], [0, 0, 1, 1], [], []>} : vector<16x16xbf16>, vector<16x128xbf16>, vector<16x128xf32> -> vector<16x128xf32>
    %c2_140 = arith.constant 2 : index
    %c0_141 = arith.constant 0 : index
    %c0_142 = arith.constant 0 : index
    %130 = vector.load %arg6[%c2_140, %c0_141, %c0_142] : memref<4x16x16xbf16, #tpu.memory_space<vmem>>, vector<1x16x16xbf16>
    %131 = vector.shape_cast %130 : vector<1x16x16xbf16> to vector<16x16xbf16>
    %c0_143 = arith.constant 0 : index
    %c0_144 = arith.constant 0 : index
    %132 = vector.load %arg14[%c0_143, %c0_144] : memref<16x128xbf16, #tpu.memory_space<vmem>>, vector<16x128xbf16>
    %cst_145 = arith.constant dense<0.000000e+00> : vector<16x128xf32>
    %133 = tpu.matmul %131, %132, %cst_145 {dimension_numbers = #tpu.dot_dimension_numbers<[1], [0], [0], [1], [0, 0, 1, 1], [], []>} : vector<16x16xbf16>, vector<16x128xbf16>, vector<16x128xf32> -> vector<16x128xf32>
    %c0_146 = arith.constant 0 : index
    %c1_147 = arith.constant 1 : index
    %134 = vector.load %arg15[%c0_146, %c1_147] : memref<16x128xf32, #tpu.memory_space<vmem>>, vector<16x127xf32>
    %135 = vector.extract_strided_slice %129 {offsets = [0, 0], sizes = [16, 127], strides = [1, 1]} : vector<16x128xf32> to vector<16x127xf32>
    %136 = arith.addf %134, %135 : vector<16x127xf32>
    %c0_148 = arith.constant 0 : index
    %c1_149 = arith.constant 1 : index
    %137 = vector.load %arg15[%c0_148, %c1_149] : memref<16x128xf32, #tpu.memory_space<vmem>>, vector<16x127xf32>
    tpu.vector_store %arg15[%c0_148, %c1_149], %136 {strides = array<i32>} : memref<16x128xf32, #tpu.memory_space<vmem>>, vector<16x127xf32>,
    %c0_150 = arith.constant 0 : index
    %c0_151 = arith.constant 0 : index
    %138 = vector.load %arg15[%c0_150, %c0_151] : memref<16x128xf32, #tpu.memory_space<vmem>>, vector<16x1xf32>
    %139 = vector.extract_strided_slice %133 {offsets = [0, 127], sizes = [16, 1], strides = [1, 1]} : vector<16x128xf32> to vector<16x1xf32>
    %140 = arith.addf %138, %139 : vector<16x1xf32>
    %c0_152 = arith.constant 0 : index
    %c0_153 = arith.constant 0 : index
    %141 = vector.load %arg15[%c0_152, %c0_153] : memref<16x128xf32, #tpu.memory_space<vmem>>, vector<16x1xf32>
    tpu.vector_store %arg15[%c0_152, %c0_153], %140 {strides = array<i32>} : memref<16x128xf32, #tpu.memory_space<vmem>>, vector<16x1xf32>,
    %c0_154 = arith.constant 0 : index
    %c0_155 = arith.constant 0 : index
    %142 = vector.load %arg15[%c0_154, %c0_155] : memref<16x128xf32, #tpu.memory_space<vmem>>, vector<16x128xf32>
    %cst_156 = arith.constant 0.000000e+00 : f32
    %143 = vector.broadcast %cst_156 : f32 to vector<16x128xf32>
    %144 = arith.maximumf %142, %143 : vector<16x128xf32>
    %c0_157 = arith.constant 0 : index
    %c0_158 = arith.constant 0 : index
    %145 = vector.load %arg8[%c0_157, %c0_158] : memref<16x8xbf16, #tpu.memory_space<vmem>>, vector<16x8xbf16>
    %cst_159 = arith.constant dense<0.000000e+00> : vector<16x128xf32>
    %146 = tpu.matmul %145, %3, %cst_159 {dimension_numbers = #tpu.dot_dimension_numbers<[1], [0], [0], [1], [0, 0, 1, 1], [], []>} : vector<16x8xbf16>, vector<8x128xbf16>, vector<16x128xf32> -> vector<16x128xf32>
    %c0_160 = arith.constant 0 : index
    %c0_161 = arith.constant 0 : index
    %147 = vector.load %arg9[%c0_160, %c0_161] : memref<16x1xf32, #tpu.memory_space<vmem>>, vector<16x1xf32>
    %148 = vector.broadcast %147 : vector<16x1xf32> to vector<16x128xf32>
    %149 = arith.addf %146, %148 : vector<16x128xf32>
    %150 = arith.addf %144, %149 : vector<16x128xf32>
    %cst_162 = arith.constant 0.000000e+00 : f32
    %151 = vector.broadcast %cst_162 : f32 to vector<16x128xf32>
    %152 = arith.maximumf %150, %151 : vector<16x128xf32>
    %153 = vector.shape_cast %152 : vector<16x128xf32> to vector<1x16x128xf32>
    %c0_163 = arith.constant 0 : index
    %c0_164 = arith.constant 0 : index
    %c0_165 = arith.constant 0 : index
    %154 = vector.load %arg10[%c0_163, %c0_164, %c0_165] : memref<1x16x128xf32, #tpu.memory_space<vmem>>, vector<1x16x128xf32>
    tpu.vector_store %arg10[%c0_163, %c0_164, %c0_165], %153 {strides = array<i32>} : memref<1x16x128xf32, #tpu.memory_space<vmem>>, vector<1x16x128xf32>,
    return
  }
  func.func @transform_0(%arg0: i32, %arg1: i32) -> (i32, i32, i32) {
    %c0_i32 = arith.constant 0 : i32
    %c0_i32_0 = arith.constant 0 : i32
    return %arg0, %c0_i32, %arg1 : i32, i32, i32
  }
  func.func @transform_1(%arg0: i32, %arg1: i32) -> (i32, i32, i32) {
    %c1_i32 = arith.constant 1 : i32
    %0 = arith.subi %arg1, %c1_i32 : i32
    %c0_i32 = arith.constant 0 : i32
    %1 = arith.maxsi %0, %c0_i32 : i32
    %c0_i32_0 = arith.constant 0 : i32
    %c0_i32_1 = arith.constant 0 : i32
    return %arg0, %c0_i32_0, %1 : i32, i32, i32
  }
  func.func @transform_2(%arg0: i32, %arg1: i32) -> (i32, i32, i32) {
    %c0_i32 = arith.constant 0 : i32
    %c0_i32_0 = arith.constant 0 : i32
    %c0_i32_1 = arith.constant 0 : i32
    %c0_i32_2 = arith.constant 0 : i32
    return %c0_i32, %c0_i32_0, %c0_i32_1 : i32, i32, i32
  }
  func.func @transform_3(%arg0: i32, %arg1: i32) -> (i32, i32) {
    %c0_i32 = arith.constant 0 : i32
    %c0_i32_0 = arith.constant 0 : i32
    %c0_i32_1 = arith.constant 0 : i32
    return %c0_i32, %c0_i32_0 : i32, i32
  }
  func.func @transform_4(%arg0: i32, %arg1: i32) -> (i32, i32, i32) {
    %c0_i32 = arith.constant 0 : i32
    %c0_i32_0 = arith.constant 0 : i32
    %c0_i32_1 = arith.constant 0 : i32
    %c0_i32_2 = arith.constant 0 : i32
    return %c0_i32, %c0_i32_0, %c0_i32_1 : i32, i32, i32
  }
  func.func @transform_5(%arg0: i32, %arg1: i32) -> (i32, i32) {
    %c0_i32 = arith.constant 0 : i32
    %c0_i32_0 = arith.constant 0 : i32
    %c0_i32_1 = arith.constant 0 : i32
    return %c0_i32, %c0_i32_0 : i32, i32
  }
  func.func @transform_6(%arg0: i32, %arg1: i32) -> (i32, i32) {
    %c0_i32 = arith.constant 0 : i32
    %c0_i32_0 = arith.constant 0 : i32
    %c0_i32_1 = arith.constant 0 : i32
    return %c0_i32, %c0_i32_0 : i32, i32
  }
  func.func @transform_7(%arg0: i32, %arg1: i32) -> (i32, i32) {
    %c0_i32 = arith.constant 0 : i32
    %c0_i32_0 = arith.constant 0 : i32
    %c0_i32_1 = arith.constant 0 : i32
    return %c0_i32, %c0_i32_0 : i32, i32
  }
  func.func @transform_8(%arg0: i32, %arg1: i32) -> (i32, i32, i32) {
    %c0_i32 = arith.constant 0 : i32
    %c0_i32_0 = arith.constant 0 : i32
    return %arg0, %c0_i32, %arg1 : i32, i32, i32
  }
}

module attributes {stable_mosaic.version = 11 : i64} {
  func.func @_temporal_block_kernel(%arg0: i32, %arg1: i32, %arg2: memref<1x16x128xf32, #tpu.memory_space<vmem>>, %arg3: memref<1x16x128xf32, #tpu.memory_space<vmem>>, %arg4: memref<4x16x16xbf16, #tpu.memory_space<vmem>>, %arg5: memref<16x1xf32, #tpu.memory_space<vmem>>, %arg6: memref<4x16x16xbf16, #tpu.memory_space<vmem>>, %arg7: memref<16x1xf32, #tpu.memory_space<vmem>>, %arg8: memref<1x16x128xf32, #tpu.memory_space<vmem>>, %arg9: memref<16x128xf32, #tpu.memory_space<vmem>>, %arg10: memref<16x128xf32, #tpu.memory_space<vmem>>, %arg11: memref<16x128xbf16, #tpu.memory_space<vmem>>, %arg12: memref<16x128xbf16, #tpu.memory_space<vmem>>, %arg13: memref<16x128xf32, #tpu.memory_space<vmem>>) attributes {dimension_semantics = [#tpu.dimension_semantics<parallel>, #tpu.dimension_semantics<parallel>], iteration_bounds = array<i64: 2, 2>, scalar_prefetch = 0 : i64, scratch_operands = 5 : i64, tpu.core_type = #tpu.core_type<tc>, window_params = [{transform_indices = @transform_0, window_bounds = array<i64: 1, 16, 128>}, {transform_indices = @transform_1, window_bounds = array<i64: 1, 16, 128>}, {pipeline_mode = #tpu.pipeline_mode<synchronous>, transform_indices = @transform_2, window_bounds = array<i64: 4, 16, 16>}, {pipeline_mode = #tpu.pipeline_mode<synchronous>, transform_indices = @transform_3, window_bounds = array<i64: 16, 1>}, {pipeline_mode = #tpu.pipeline_mode<synchronous>, transform_indices = @transform_4, window_bounds = array<i64: 4, 16, 16>}, {pipeline_mode = #tpu.pipeline_mode<synchronous>, transform_indices = @transform_5, window_bounds = array<i64: 16, 1>}, {transform_indices = @transform_6, window_bounds = array<i64: 1, 16, 128>}]} {
    %c0_i32 = arith.constant 0 : i32
    %0 = arith.cmpi eq, %arg1, %c0_i32 : i32
    %c0 = arith.constant 0 : index
    %c0_0 = arith.constant 0 : index
    %c0_1 = arith.constant 0 : index
    %1 = vector.load %arg2[%c0, %c0_0, %c0_1] : memref<1x16x128xf32, #tpu.memory_space<vmem>>, vector<1x16x128xf32>
    %2 = vector.shape_cast %1 : vector<1x16x128xf32> to vector<16x128xf32>
    %3 = arith.truncf %2 : vector<16x128xf32> to vector<16x128xbf16>
    %c0_2 = arith.constant 0 : index
    %c0_3 = arith.constant 0 : index
    %c0_4 = arith.constant 0 : index
    %4 = vector.load %arg3[%c0_2, %c0_3, %c0_4] : memref<1x16x128xf32, #tpu.memory_space<vmem>>, vector<1x16x128xf32>
    %5 = vector.shape_cast %4 : vector<1x16x128xf32> to vector<16x128xf32>
    %cst = arith.constant 0.000000e+00 : f32
    %6 = vector.broadcast %cst : f32 to vector<16x128xf32>
    %7 = arith.select %0, %6, %5 : vector<16x128xf32>
    %8 = arith.truncf %7 : vector<16x128xf32> to vector<16x128xbf16>
    %c0_5 = arith.constant 0 : index
    %c0_6 = arith.constant 0 : index
    %9 = vector.load %arg5[%c0_5, %c0_6] : memref<16x1xf32, #tpu.memory_space<vmem>>, vector<16x1xf32>
    %c3 = arith.constant 3 : index
    %c0_7 = arith.constant 0 : index
    %c0_8 = arith.constant 0 : index
    %10 = vector.load %arg4[%c3, %c0_7, %c0_8] : memref<4x16x16xbf16, #tpu.memory_space<vmem>>, vector<1x16x16xbf16>
    %11 = vector.shape_cast %10 : vector<1x16x16xbf16> to vector<16x16xbf16>
    %cst_9 = arith.constant dense<0.000000e+00> : vector<16x128xf32>
    %12 = tpu.matmul %11, %3, %cst_9 {dimension_numbers = #tpu.dot_dimension_numbers<[1], [0], [0], [1], [0, 0, 1, 1], [], []>} : vector<16x16xbf16>, vector<16x128xbf16>, vector<16x128xf32> -> vector<16x128xf32>
    %13 = vector.broadcast %9 : vector<16x1xf32> to vector<16x128xf32>
    %14 = arith.addf %12, %13 : vector<16x128xf32>
    %c0_10 = arith.constant 0 : index
    %c0_11 = arith.constant 0 : index
    %15 = vector.load %arg9[%c0_10, %c0_11] : memref<16x128xf32, #tpu.memory_space<vmem>>, vector<16x128xf32>
    tpu.vector_store %arg9[%c0_10, %c0_11], %14 {strides = array<i32>} : memref<16x128xf32, #tpu.memory_space<vmem>>, vector<16x128xf32>,
    %cst_12 = arith.constant dense<0.000000e+00> : vector<16x128xf32>
    %16 = tpu.matmul %11, %8, %cst_12 {dimension_numbers = #tpu.dot_dimension_numbers<[1], [0], [0], [1], [0, 0, 1, 1], [], []>} : vector<16x16xbf16>, vector<16x128xbf16>, vector<16x128xf32> -> vector<16x128xf32>
    %17 = vector.broadcast %9 : vector<16x1xf32> to vector<16x128xf32>
    %18 = arith.addf %16, %17 : vector<16x128xf32>
    %c0_13 = arith.constant 0 : index
    %c0_14 = arith.constant 0 : index
    %19 = vector.load %arg10[%c0_13, %c0_14] : memref<16x128xf32, #tpu.memory_space<vmem>>, vector<16x128xf32>
    tpu.vector_store %arg10[%c0_13, %c0_14], %18 {strides = array<i32>} : memref<16x128xf32, #tpu.memory_space<vmem>>, vector<16x128xf32>,
    %c0_15 = arith.constant 0 : index
    %c0_16 = arith.constant 0 : index
    %c0_17 = arith.constant 0 : index
    %20 = vector.load %arg4[%c0_15, %c0_16, %c0_17] : memref<4x16x16xbf16, #tpu.memory_space<vmem>>, vector<1x16x16xbf16>
    %21 = vector.shape_cast %20 : vector<1x16x16xbf16> to vector<16x16xbf16>
    %cst_18 = arith.constant dense<0.000000e+00> : vector<16x128xf32>
    %22 = tpu.matmul %21, %3, %cst_18 {dimension_numbers = #tpu.dot_dimension_numbers<[1], [0], [0], [1], [0, 0, 1, 1], [], []>} : vector<16x16xbf16>, vector<16x128xbf16>, vector<16x128xf32> -> vector<16x128xf32>
    %c0_19 = arith.constant 0 : index
    %c0_20 = arith.constant 0 : index
    %c0_21 = arith.constant 0 : index
    %23 = vector.load %arg4[%c0_19, %c0_20, %c0_21] : memref<4x16x16xbf16, #tpu.memory_space<vmem>>, vector<1x16x16xbf16>
    %24 = vector.shape_cast %23 : vector<1x16x16xbf16> to vector<16x16xbf16>
    %cst_22 = arith.constant dense<0.000000e+00> : vector<16x128xf32>
    %25 = tpu.matmul %24, %8, %cst_22 {dimension_numbers = #tpu.dot_dimension_numbers<[1], [0], [0], [1], [0, 0, 1, 1], [], []>} : vector<16x16xbf16>, vector<16x128xbf16>, vector<16x128xf32> -> vector<16x128xf32>
    %c0_23 = arith.constant 0 : index
    %c6 = arith.constant 6 : index
    %26 = vector.load %arg9[%c0_23, %c6] : memref<16x128xf32, #tpu.memory_space<vmem>>, vector<16x122xf32>
    %27 = vector.extract_strided_slice %22 {offsets = [0, 0], sizes = [16, 122], strides = [1, 1]} : vector<16x128xf32> to vector<16x122xf32>
    %28 = arith.addf %26, %27 : vector<16x122xf32>
    %c0_24 = arith.constant 0 : index
    %c6_25 = arith.constant 6 : index
    %29 = vector.load %arg9[%c0_24, %c6_25] : memref<16x128xf32, #tpu.memory_space<vmem>>, vector<16x122xf32>
    tpu.vector_store %arg9[%c0_24, %c6_25], %28 {strides = array<i32>} : memref<16x128xf32, #tpu.memory_space<vmem>>, vector<16x122xf32>,
    %c0_26 = arith.constant 0 : index
    %c0_27 = arith.constant 0 : index
    %30 = vector.load %arg9[%c0_26, %c0_27] : memref<16x128xf32, #tpu.memory_space<vmem>>, vector<16x6xf32>
    %31 = vector.extract_strided_slice %25 {offsets = [0, 122], sizes = [16, 6], strides = [1, 1]} : vector<16x128xf32> to vector<16x6xf32>
    %32 = arith.addf %30, %31 : vector<16x6xf32>
    %c0_28 = arith.constant 0 : index
    %c0_29 = arith.constant 0 : index
    %33 = vector.load %arg9[%c0_28, %c0_29] : memref<16x128xf32, #tpu.memory_space<vmem>>, vector<16x6xf32>
    tpu.vector_store %arg9[%c0_28, %c0_29], %32 {strides = array<i32>} : memref<16x128xf32, #tpu.memory_space<vmem>>, vector<16x6xf32>,
    %c0_30 = arith.constant 0 : index
    %c6_31 = arith.constant 6 : index
    %34 = vector.load %arg10[%c0_30, %c6_31] : memref<16x128xf32, #tpu.memory_space<vmem>>, vector<16x122xf32>
    %35 = vector.extract_strided_slice %25 {offsets = [0, 0], sizes = [16, 122], strides = [1, 1]} : vector<16x128xf32> to vector<16x122xf32>
    %36 = arith.addf %34, %35 : vector<16x122xf32>
    %c0_32 = arith.constant 0 : index
    %c6_33 = arith.constant 6 : index
    %37 = vector.load %arg10[%c0_32, %c6_33] : memref<16x128xf32, #tpu.memory_space<vmem>>, vector<16x122xf32>
    tpu.vector_store %arg10[%c0_32, %c6_33], %36 {strides = array<i32>} : memref<16x128xf32, #tpu.memory_space<vmem>>, vector<16x122xf32>,
    %c1 = arith.constant 1 : index
    %c0_34 = arith.constant 0 : index
    %c0_35 = arith.constant 0 : index
    %38 = vector.load %arg4[%c1, %c0_34, %c0_35] : memref<4x16x16xbf16, #tpu.memory_space<vmem>>, vector<1x16x16xbf16>
    %39 = vector.shape_cast %38 : vector<1x16x16xbf16> to vector<16x16xbf16>
    %cst_36 = arith.constant dense<0.000000e+00> : vector<16x128xf32>
    %40 = tpu.matmul %39, %3, %cst_36 {dimension_numbers = #tpu.dot_dimension_numbers<[1], [0], [0], [1], [0, 0, 1, 1], [], []>} : vector<16x16xbf16>, vector<16x128xbf16>, vector<16x128xf32> -> vector<16x128xf32>
    %c1_37 = arith.constant 1 : index
    %c0_38 = arith.constant 0 : index
    %c0_39 = arith.constant 0 : index
    %41 = vector.load %arg4[%c1_37, %c0_38, %c0_39] : memref<4x16x16xbf16, #tpu.memory_space<vmem>>, vector<1x16x16xbf16>
    %42 = vector.shape_cast %41 : vector<1x16x16xbf16> to vector<16x16xbf16>
    %cst_40 = arith.constant dense<0.000000e+00> : vector<16x128xf32>
    %43 = tpu.matmul %42, %8, %cst_40 {dimension_numbers = #tpu.dot_dimension_numbers<[1], [0], [0], [1], [0, 0, 1, 1], [], []>} : vector<16x16xbf16>, vector<16x128xbf16>, vector<16x128xf32> -> vector<16x128xf32>
    %c0_41 = arith.constant 0 : index
    %c4 = arith.constant 4 : index
    %44 = vector.load %arg9[%c0_41, %c4] : memref<16x128xf32, #tpu.memory_space<vmem>>, vector<16x124xf32>
    %45 = vector.extract_strided_slice %40 {offsets = [0, 0], sizes = [16, 124], strides = [1, 1]} : vector<16x128xf32> to vector<16x124xf32>
    %46 = arith.addf %44, %45 : vector<16x124xf32>
    %c0_42 = arith.constant 0 : index
    %c4_43 = arith.constant 4 : index
    %47 = vector.load %arg9[%c0_42, %c4_43] : memref<16x128xf32, #tpu.memory_space<vmem>>, vector<16x124xf32>
    tpu.vector_store %arg9[%c0_42, %c4_43], %46 {strides = array<i32>} : memref<16x128xf32, #tpu.memory_space<vmem>>, vector<16x124xf32>,
    %c0_44 = arith.constant 0 : index
    %c0_45 = arith.constant 0 : index
    %48 = vector.load %arg9[%c0_44, %c0_45] : memref<16x128xf32, #tpu.memory_space<vmem>>, vector<16x4xf32>
    %49 = vector.extract_strided_slice %43 {offsets = [0, 124], sizes = [16, 4], strides = [1, 1]} : vector<16x128xf32> to vector<16x4xf32>
    %50 = arith.addf %48, %49 : vector<16x4xf32>
    %c0_46 = arith.constant 0 : index
    %c0_47 = arith.constant 0 : index
    %51 = vector.load %arg9[%c0_46, %c0_47] : memref<16x128xf32, #tpu.memory_space<vmem>>, vector<16x4xf32>
    tpu.vector_store %arg9[%c0_46, %c0_47], %50 {strides = array<i32>} : memref<16x128xf32, #tpu.memory_space<vmem>>, vector<16x4xf32>,
    %c0_48 = arith.constant 0 : index
    %c4_49 = arith.constant 4 : index
    %52 = vector.load %arg10[%c0_48, %c4_49] : memref<16x128xf32, #tpu.memory_space<vmem>>, vector<16x124xf32>
    %53 = vector.extract_strided_slice %43 {offsets = [0, 0], sizes = [16, 124], strides = [1, 1]} : vector<16x128xf32> to vector<16x124xf32>
    %54 = arith.addf %52, %53 : vector<16x124xf32>
    %c0_50 = arith.constant 0 : index
    %c4_51 = arith.constant 4 : index
    %55 = vector.load %arg10[%c0_50, %c4_51] : memref<16x128xf32, #tpu.memory_space<vmem>>, vector<16x124xf32>
    tpu.vector_store %arg10[%c0_50, %c4_51], %54 {strides = array<i32>} : memref<16x128xf32, #tpu.memory_space<vmem>>, vector<16x124xf32>,
    %c2 = arith.constant 2 : index
    %c0_52 = arith.constant 0 : index
    %c0_53 = arith.constant 0 : index
    %56 = vector.load %arg4[%c2, %c0_52, %c0_53] : memref<4x16x16xbf16, #tpu.memory_space<vmem>>, vector<1x16x16xbf16>
    %57 = vector.shape_cast %56 : vector<1x16x16xbf16> to vector<16x16xbf16>
    %cst_54 = arith.constant dense<0.000000e+00> : vector<16x128xf32>
    %58 = tpu.matmul %57, %3, %cst_54 {dimension_numbers = #tpu.dot_dimension_numbers<[1], [0], [0], [1], [0, 0, 1, 1], [], []>} : vector<16x16xbf16>, vector<16x128xbf16>, vector<16x128xf32> -> vector<16x128xf32>
    %c2_55 = arith.constant 2 : index
    %c0_56 = arith.constant 0 : index
    %c0_57 = arith.constant 0 : index
    %59 = vector.load %arg4[%c2_55, %c0_56, %c0_57] : memref<4x16x16xbf16, #tpu.memory_space<vmem>>, vector<1x16x16xbf16>
    %60 = vector.shape_cast %59 : vector<1x16x16xbf16> to vector<16x16xbf16>
    %cst_58 = arith.constant dense<0.000000e+00> : vector<16x128xf32>
    %61 = tpu.matmul %60, %8, %cst_58 {dimension_numbers = #tpu.dot_dimension_numbers<[1], [0], [0], [1], [0, 0, 1, 1], [], []>} : vector<16x16xbf16>, vector<16x128xbf16>, vector<16x128xf32> -> vector<16x128xf32>
    %c0_59 = arith.constant 0 : index
    %c2_60 = arith.constant 2 : index
    %62 = vector.load %arg9[%c0_59, %c2_60] : memref<16x128xf32, #tpu.memory_space<vmem>>, vector<16x126xf32>
    %63 = vector.extract_strided_slice %58 {offsets = [0, 0], sizes = [16, 126], strides = [1, 1]} : vector<16x128xf32> to vector<16x126xf32>
    %64 = arith.addf %62, %63 : vector<16x126xf32>
    %c0_61 = arith.constant 0 : index
    %c2_62 = arith.constant 2 : index
    %65 = vector.load %arg9[%c0_61, %c2_62] : memref<16x128xf32, #tpu.memory_space<vmem>>, vector<16x126xf32>
    tpu.vector_store %arg9[%c0_61, %c2_62], %64 {strides = array<i32>} : memref<16x128xf32, #tpu.memory_space<vmem>>, vector<16x126xf32>,
    %c0_63 = arith.constant 0 : index
    %c0_64 = arith.constant 0 : index
    %66 = vector.load %arg9[%c0_63, %c0_64] : memref<16x128xf32, #tpu.memory_space<vmem>>, vector<16x2xf32>
    %67 = vector.extract_strided_slice %61 {offsets = [0, 126], sizes = [16, 2], strides = [1, 1]} : vector<16x128xf32> to vector<16x2xf32>
    %68 = arith.addf %66, %67 : vector<16x2xf32>
    %c0_65 = arith.constant 0 : index
    %c0_66 = arith.constant 0 : index
    %69 = vector.load %arg9[%c0_65, %c0_66] : memref<16x128xf32, #tpu.memory_space<vmem>>, vector<16x2xf32>
    tpu.vector_store %arg9[%c0_65, %c0_66], %68 {strides = array<i32>} : memref<16x128xf32, #tpu.memory_space<vmem>>, vector<16x2xf32>,
    %c0_67 = arith.constant 0 : index
    %c2_68 = arith.constant 2 : index
    %70 = vector.load %arg10[%c0_67, %c2_68] : memref<16x128xf32, #tpu.memory_space<vmem>>, vector<16x126xf32>
    %71 = vector.extract_strided_slice %61 {offsets = [0, 0], sizes = [16, 126], strides = [1, 1]} : vector<16x128xf32> to vector<16x126xf32>
    %72 = arith.addf %70, %71 : vector<16x126xf32>
    %c0_69 = arith.constant 0 : index
    %c2_70 = arith.constant 2 : index
    %73 = vector.load %arg10[%c0_69, %c2_70] : memref<16x128xf32, #tpu.memory_space<vmem>>, vector<16x126xf32>
    tpu.vector_store %arg10[%c0_69, %c2_70], %72 {strides = array<i32>} : memref<16x128xf32, #tpu.memory_space<vmem>>, vector<16x126xf32>,
    %c0_71 = arith.constant 0 : index
    %c0_72 = arith.constant 0 : index
    %74 = vector.load %arg9[%c0_71, %c0_72] : memref<16x128xf32, #tpu.memory_space<vmem>>, vector<16x128xf32>
    %cst_73 = arith.constant 0.000000e+00 : f32
    %75 = vector.broadcast %cst_73 : f32 to vector<16x128xf32>
    %76 = arith.maximumf %74, %75 : vector<16x128xf32>
    %77 = arith.truncf %76 : vector<16x128xf32> to vector<16x128xbf16>
    %c0_74 = arith.constant 0 : index
    %c0_75 = arith.constant 0 : index
    %78 = vector.load %arg11[%c0_74, %c0_75] : memref<16x128xbf16, #tpu.memory_space<vmem>>, vector<16x128xbf16>
    tpu.vector_store %arg11[%c0_74, %c0_75], %77 {strides = array<i32>} : memref<16x128xbf16, #tpu.memory_space<vmem>>, vector<16x128xbf16>,
    %c0_76 = arith.constant 0 : index
    %c0_77 = arith.constant 0 : index
    %79 = vector.load %arg10[%c0_76, %c0_77] : memref<16x128xf32, #tpu.memory_space<vmem>>, vector<16x128xf32>
    %cst_78 = arith.constant 0.000000e+00 : f32
    %80 = vector.broadcast %cst_78 : f32 to vector<16x128xf32>
    %81 = arith.maximumf %79, %80 : vector<16x128xf32>
    %cst_79 = arith.constant 0.000000e+00 : f32
    %82 = vector.broadcast %cst_79 : f32 to vector<16x128xf32>
    %83 = arith.select %0, %82, %81 : vector<16x128xf32>
    %84 = arith.truncf %83 : vector<16x128xf32> to vector<16x128xbf16>
    %c0_80 = arith.constant 0 : index
    %c0_81 = arith.constant 0 : index
    %85 = vector.load %arg12[%c0_80, %c0_81] : memref<16x128xbf16, #tpu.memory_space<vmem>>, vector<16x128xbf16>
    tpu.vector_store %arg12[%c0_80, %c0_81], %84 {strides = array<i32>} : memref<16x128xbf16, #tpu.memory_space<vmem>>, vector<16x128xbf16>,
    %c0_82 = arith.constant 0 : index
    %c0_83 = arith.constant 0 : index
    %86 = vector.load %arg7[%c0_82, %c0_83] : memref<16x1xf32, #tpu.memory_space<vmem>>, vector<16x1xf32>
    %c3_84 = arith.constant 3 : index
    %c0_85 = arith.constant 0 : index
    %c0_86 = arith.constant 0 : index
    %87 = vector.load %arg6[%c3_84, %c0_85, %c0_86] : memref<4x16x16xbf16, #tpu.memory_space<vmem>>, vector<1x16x16xbf16>
    %88 = vector.shape_cast %87 : vector<1x16x16xbf16> to vector<16x16xbf16>
    %c0_87 = arith.constant 0 : index
    %c0_88 = arith.constant 0 : index
    %89 = vector.load %arg11[%c0_87, %c0_88] : memref<16x128xbf16, #tpu.memory_space<vmem>>, vector<16x128xbf16>
    %cst_89 = arith.constant dense<0.000000e+00> : vector<16x128xf32>
    %90 = tpu.matmul %88, %89, %cst_89 {dimension_numbers = #tpu.dot_dimension_numbers<[1], [0], [0], [1], [0, 0, 1, 1], [], []>} : vector<16x16xbf16>, vector<16x128xbf16>, vector<16x128xf32> -> vector<16x128xf32>
    %91 = vector.broadcast %86 : vector<16x1xf32> to vector<16x128xf32>
    %92 = arith.addf %90, %91 : vector<16x128xf32>
    %c0_90 = arith.constant 0 : index
    %c0_91 = arith.constant 0 : index
    %93 = vector.load %arg13[%c0_90, %c0_91] : memref<16x128xf32, #tpu.memory_space<vmem>>, vector<16x128xf32>
    tpu.vector_store %arg13[%c0_90, %c0_91], %92 {strides = array<i32>} : memref<16x128xf32, #tpu.memory_space<vmem>>, vector<16x128xf32>,
    %c0_92 = arith.constant 0 : index
    %c0_93 = arith.constant 0 : index
    %c0_94 = arith.constant 0 : index
    %94 = vector.load %arg6[%c0_92, %c0_93, %c0_94] : memref<4x16x16xbf16, #tpu.memory_space<vmem>>, vector<1x16x16xbf16>
    %95 = vector.shape_cast %94 : vector<1x16x16xbf16> to vector<16x16xbf16>
    %c0_95 = arith.constant 0 : index
    %c0_96 = arith.constant 0 : index
    %96 = vector.load %arg11[%c0_95, %c0_96] : memref<16x128xbf16, #tpu.memory_space<vmem>>, vector<16x128xbf16>
    %cst_97 = arith.constant dense<0.000000e+00> : vector<16x128xf32>
    %97 = tpu.matmul %95, %96, %cst_97 {dimension_numbers = #tpu.dot_dimension_numbers<[1], [0], [0], [1], [0, 0, 1, 1], [], []>} : vector<16x16xbf16>, vector<16x128xbf16>, vector<16x128xf32> -> vector<16x128xf32>
    %c0_98 = arith.constant 0 : index
    %c0_99 = arith.constant 0 : index
    %c0_100 = arith.constant 0 : index
    %98 = vector.load %arg6[%c0_98, %c0_99, %c0_100] : memref<4x16x16xbf16, #tpu.memory_space<vmem>>, vector<1x16x16xbf16>
    %99 = vector.shape_cast %98 : vector<1x16x16xbf16> to vector<16x16xbf16>
    %c0_101 = arith.constant 0 : index
    %c0_102 = arith.constant 0 : index
    %100 = vector.load %arg12[%c0_101, %c0_102] : memref<16x128xbf16, #tpu.memory_space<vmem>>, vector<16x128xbf16>
    %cst_103 = arith.constant dense<0.000000e+00> : vector<16x128xf32>
    %101 = tpu.matmul %99, %100, %cst_103 {dimension_numbers = #tpu.dot_dimension_numbers<[1], [0], [0], [1], [0, 0, 1, 1], [], []>} : vector<16x16xbf16>, vector<16x128xbf16>, vector<16x128xf32> -> vector<16x128xf32>
    %c0_104 = arith.constant 0 : index
    %c6_105 = arith.constant 6 : index
    %102 = vector.load %arg13[%c0_104, %c6_105] : memref<16x128xf32, #tpu.memory_space<vmem>>, vector<16x122xf32>
    %103 = vector.extract_strided_slice %97 {offsets = [0, 0], sizes = [16, 122], strides = [1, 1]} : vector<16x128xf32> to vector<16x122xf32>
    %104 = arith.addf %102, %103 : vector<16x122xf32>
    %c0_106 = arith.constant 0 : index
    %c6_107 = arith.constant 6 : index
    %105 = vector.load %arg13[%c0_106, %c6_107] : memref<16x128xf32, #tpu.memory_space<vmem>>, vector<16x122xf32>
    tpu.vector_store %arg13[%c0_106, %c6_107], %104 {strides = array<i32>} : memref<16x128xf32, #tpu.memory_space<vmem>>, vector<16x122xf32>,
    %c0_108 = arith.constant 0 : index
    %c0_109 = arith.constant 0 : index
    %106 = vector.load %arg13[%c0_108, %c0_109] : memref<16x128xf32, #tpu.memory_space<vmem>>, vector<16x6xf32>
    %107 = vector.extract_strided_slice %101 {offsets = [0, 122], sizes = [16, 6], strides = [1, 1]} : vector<16x128xf32> to vector<16x6xf32>
    %108 = arith.addf %106, %107 : vector<16x6xf32>
    %c0_110 = arith.constant 0 : index
    %c0_111 = arith.constant 0 : index
    %109 = vector.load %arg13[%c0_110, %c0_111] : memref<16x128xf32, #tpu.memory_space<vmem>>, vector<16x6xf32>
    tpu.vector_store %arg13[%c0_110, %c0_111], %108 {strides = array<i32>} : memref<16x128xf32, #tpu.memory_space<vmem>>, vector<16x6xf32>,
    %c1_112 = arith.constant 1 : index
    %c0_113 = arith.constant 0 : index
    %c0_114 = arith.constant 0 : index
    %110 = vector.load %arg6[%c1_112, %c0_113, %c0_114] : memref<4x16x16xbf16, #tpu.memory_space<vmem>>, vector<1x16x16xbf16>
    %111 = vector.shape_cast %110 : vector<1x16x16xbf16> to vector<16x16xbf16>
    %c0_115 = arith.constant 0 : index
    %c0_116 = arith.constant 0 : index
    %112 = vector.load %arg11[%c0_115, %c0_116] : memref<16x128xbf16, #tpu.memory_space<vmem>>, vector<16x128xbf16>
    %cst_117 = arith.constant dense<0.000000e+00> : vector<16x128xf32>
    %113 = tpu.matmul %111, %112, %cst_117 {dimension_numbers = #tpu.dot_dimension_numbers<[1], [0], [0], [1], [0, 0, 1, 1], [], []>} : vector<16x16xbf16>, vector<16x128xbf16>, vector<16x128xf32> -> vector<16x128xf32>
    %c1_118 = arith.constant 1 : index
    %c0_119 = arith.constant 0 : index
    %c0_120 = arith.constant 0 : index
    %114 = vector.load %arg6[%c1_118, %c0_119, %c0_120] : memref<4x16x16xbf16, #tpu.memory_space<vmem>>, vector<1x16x16xbf16>
    %115 = vector.shape_cast %114 : vector<1x16x16xbf16> to vector<16x16xbf16>
    %c0_121 = arith.constant 0 : index
    %c0_122 = arith.constant 0 : index
    %116 = vector.load %arg12[%c0_121, %c0_122] : memref<16x128xbf16, #tpu.memory_space<vmem>>, vector<16x128xbf16>
    %cst_123 = arith.constant dense<0.000000e+00> : vector<16x128xf32>
    %117 = tpu.matmul %115, %116, %cst_123 {dimension_numbers = #tpu.dot_dimension_numbers<[1], [0], [0], [1], [0, 0, 1, 1], [], []>} : vector<16x16xbf16>, vector<16x128xbf16>, vector<16x128xf32> -> vector<16x128xf32>
    %c0_124 = arith.constant 0 : index
    %c4_125 = arith.constant 4 : index
    %118 = vector.load %arg13[%c0_124, %c4_125] : memref<16x128xf32, #tpu.memory_space<vmem>>, vector<16x124xf32>
    %119 = vector.extract_strided_slice %113 {offsets = [0, 0], sizes = [16, 124], strides = [1, 1]} : vector<16x128xf32> to vector<16x124xf32>
    %120 = arith.addf %118, %119 : vector<16x124xf32>
    %c0_126 = arith.constant 0 : index
    %c4_127 = arith.constant 4 : index
    %121 = vector.load %arg13[%c0_126, %c4_127] : memref<16x128xf32, #tpu.memory_space<vmem>>, vector<16x124xf32>
    tpu.vector_store %arg13[%c0_126, %c4_127], %120 {strides = array<i32>} : memref<16x128xf32, #tpu.memory_space<vmem>>, vector<16x124xf32>,
    %c0_128 = arith.constant 0 : index
    %c0_129 = arith.constant 0 : index
    %122 = vector.load %arg13[%c0_128, %c0_129] : memref<16x128xf32, #tpu.memory_space<vmem>>, vector<16x4xf32>
    %123 = vector.extract_strided_slice %117 {offsets = [0, 124], sizes = [16, 4], strides = [1, 1]} : vector<16x128xf32> to vector<16x4xf32>
    %124 = arith.addf %122, %123 : vector<16x4xf32>
    %c0_130 = arith.constant 0 : index
    %c0_131 = arith.constant 0 : index
    %125 = vector.load %arg13[%c0_130, %c0_131] : memref<16x128xf32, #tpu.memory_space<vmem>>, vector<16x4xf32>
    tpu.vector_store %arg13[%c0_130, %c0_131], %124 {strides = array<i32>} : memref<16x128xf32, #tpu.memory_space<vmem>>, vector<16x4xf32>,
    %c2_132 = arith.constant 2 : index
    %c0_133 = arith.constant 0 : index
    %c0_134 = arith.constant 0 : index
    %126 = vector.load %arg6[%c2_132, %c0_133, %c0_134] : memref<4x16x16xbf16, #tpu.memory_space<vmem>>, vector<1x16x16xbf16>
    %127 = vector.shape_cast %126 : vector<1x16x16xbf16> to vector<16x16xbf16>
    %c0_135 = arith.constant 0 : index
    %c0_136 = arith.constant 0 : index
    %128 = vector.load %arg11[%c0_135, %c0_136] : memref<16x128xbf16, #tpu.memory_space<vmem>>, vector<16x128xbf16>
    %cst_137 = arith.constant dense<0.000000e+00> : vector<16x128xf32>
    %129 = tpu.matmul %127, %128, %cst_137 {dimension_numbers = #tpu.dot_dimension_numbers<[1], [0], [0], [1], [0, 0, 1, 1], [], []>} : vector<16x16xbf16>, vector<16x128xbf16>, vector<16x128xf32> -> vector<16x128xf32>
    %c2_138 = arith.constant 2 : index
    %c0_139 = arith.constant 0 : index
    %c0_140 = arith.constant 0 : index
    %130 = vector.load %arg6[%c2_138, %c0_139, %c0_140] : memref<4x16x16xbf16, #tpu.memory_space<vmem>>, vector<1x16x16xbf16>
    %131 = vector.shape_cast %130 : vector<1x16x16xbf16> to vector<16x16xbf16>
    %c0_141 = arith.constant 0 : index
    %c0_142 = arith.constant 0 : index
    %132 = vector.load %arg12[%c0_141, %c0_142] : memref<16x128xbf16, #tpu.memory_space<vmem>>, vector<16x128xbf16>
    %cst_143 = arith.constant dense<0.000000e+00> : vector<16x128xf32>
    %133 = tpu.matmul %131, %132, %cst_143 {dimension_numbers = #tpu.dot_dimension_numbers<[1], [0], [0], [1], [0, 0, 1, 1], [], []>} : vector<16x16xbf16>, vector<16x128xbf16>, vector<16x128xf32> -> vector<16x128xf32>
    %c0_144 = arith.constant 0 : index
    %c2_145 = arith.constant 2 : index
    %134 = vector.load %arg13[%c0_144, %c2_145] : memref<16x128xf32, #tpu.memory_space<vmem>>, vector<16x126xf32>
    %135 = vector.extract_strided_slice %129 {offsets = [0, 0], sizes = [16, 126], strides = [1, 1]} : vector<16x128xf32> to vector<16x126xf32>
    %136 = arith.addf %134, %135 : vector<16x126xf32>
    %c0_146 = arith.constant 0 : index
    %c2_147 = arith.constant 2 : index
    %137 = vector.load %arg13[%c0_146, %c2_147] : memref<16x128xf32, #tpu.memory_space<vmem>>, vector<16x126xf32>
    tpu.vector_store %arg13[%c0_146, %c2_147], %136 {strides = array<i32>} : memref<16x128xf32, #tpu.memory_space<vmem>>, vector<16x126xf32>,
    %c0_148 = arith.constant 0 : index
    %c0_149 = arith.constant 0 : index
    %138 = vector.load %arg13[%c0_148, %c0_149] : memref<16x128xf32, #tpu.memory_space<vmem>>, vector<16x2xf32>
    %139 = vector.extract_strided_slice %133 {offsets = [0, 126], sizes = [16, 2], strides = [1, 1]} : vector<16x128xf32> to vector<16x2xf32>
    %140 = arith.addf %138, %139 : vector<16x2xf32>
    %c0_150 = arith.constant 0 : index
    %c0_151 = arith.constant 0 : index
    %141 = vector.load %arg13[%c0_150, %c0_151] : memref<16x128xf32, #tpu.memory_space<vmem>>, vector<16x2xf32>
    tpu.vector_store %arg13[%c0_150, %c0_151], %140 {strides = array<i32>} : memref<16x128xf32, #tpu.memory_space<vmem>>, vector<16x2xf32>,
    %c0_152 = arith.constant 0 : index
    %c0_153 = arith.constant 0 : index
    %142 = vector.load %arg13[%c0_152, %c0_153] : memref<16x128xf32, #tpu.memory_space<vmem>>, vector<16x128xf32>
    %cst_154 = arith.constant 0.000000e+00 : f32
    %143 = vector.broadcast %cst_154 : f32 to vector<16x128xf32>
    %144 = arith.maximumf %142, %143 : vector<16x128xf32>
    %145 = arith.addf %144, %2 : vector<16x128xf32>
    %cst_155 = arith.constant 0.000000e+00 : f32
    %146 = vector.broadcast %cst_155 : f32 to vector<16x128xf32>
    %147 = arith.maximumf %145, %146 : vector<16x128xf32>
    %148 = vector.shape_cast %147 : vector<16x128xf32> to vector<1x16x128xf32>
    %c0_156 = arith.constant 0 : index
    %c0_157 = arith.constant 0 : index
    %c0_158 = arith.constant 0 : index
    %149 = vector.load %arg8[%c0_156, %c0_157, %c0_158] : memref<1x16x128xf32, #tpu.memory_space<vmem>>, vector<1x16x128xf32>
    tpu.vector_store %arg8[%c0_156, %c0_157, %c0_158], %148 {strides = array<i32>} : memref<1x16x128xf32, #tpu.memory_space<vmem>>, vector<1x16x128xf32>,
    return
  }
  func.func @transform_0(%arg0: i32, %arg1: i32) -> (i32, i32, i32) {
    %c0_i32 = arith.constant 0 : i32
    %c0_i32_0 = arith.constant 0 : i32
    return %arg0, %c0_i32, %arg1 : i32, i32, i32
  }
  func.func @transform_1(%arg0: i32, %arg1: i32) -> (i32, i32, i32) {
    %c1_i32 = arith.constant 1 : i32
    %0 = arith.subi %arg1, %c1_i32 : i32
    %c0_i32 = arith.constant 0 : i32
    %1 = arith.maxsi %0, %c0_i32 : i32
    %c0_i32_0 = arith.constant 0 : i32
    %c0_i32_1 = arith.constant 0 : i32
    return %arg0, %c0_i32_0, %1 : i32, i32, i32
  }
  func.func @transform_2(%arg0: i32, %arg1: i32) -> (i32, i32, i32) {
    %c0_i32 = arith.constant 0 : i32
    %c0_i32_0 = arith.constant 0 : i32
    %c0_i32_1 = arith.constant 0 : i32
    %c0_i32_2 = arith.constant 0 : i32
    return %c0_i32, %c0_i32_0, %c0_i32_1 : i32, i32, i32
  }
  func.func @transform_3(%arg0: i32, %arg1: i32) -> (i32, i32) {
    %c0_i32 = arith.constant 0 : i32
    %c0_i32_0 = arith.constant 0 : i32
    %c0_i32_1 = arith.constant 0 : i32
    return %c0_i32, %c0_i32_0 : i32, i32
  }
  func.func @transform_4(%arg0: i32, %arg1: i32) -> (i32, i32, i32) {
    %c0_i32 = arith.constant 0 : i32
    %c0_i32_0 = arith.constant 0 : i32
    %c0_i32_1 = arith.constant 0 : i32
    %c0_i32_2 = arith.constant 0 : i32
    return %c0_i32, %c0_i32_0, %c0_i32_1 : i32, i32, i32
  }
  func.func @transform_5(%arg0: i32, %arg1: i32) -> (i32, i32) {
    %c0_i32 = arith.constant 0 : i32
    %c0_i32_0 = arith.constant 0 : i32
    %c0_i32_1 = arith.constant 0 : i32
    return %c0_i32, %c0_i32_0 : i32, i32
  }
  func.func @transform_6(%arg0: i32, %arg1: i32) -> (i32, i32, i32) {
    %c0_i32 = arith.constant 0 : i32
    %c0_i32_0 = arith.constant 0 : i32
    return %arg0, %c0_i32, %arg1 : i32, i32, i32
  }
}

</mosaic_0001>

<llo_original>
// kernel: tcn_forward.2
$region0: #{tcn_forward.2}
  #allocation0 [shape = 'u32[]', space=smem, size = 0x4, offset = 0x4, fixed_abs, tag = 'smem constant byte address 0x4 - core index']
  #allocation1 [shape = 'u32[144,128]{1,0:T(1,128)}', space=vmem, size = 0x12000, scoped, tag = 'internal scratch']
  #allocation2 [shape = 'f32[16,128]{1,0:T(8,128)}', space=vmem, size = 0x2000, scoped, tag = 'scratch operand']
  #allocation3 [shape = 'f32[16,128]{1,0:T(8,128)}', space=vmem, size = 0x2000, scoped, tag = 'scratch operand']
  #allocation4 [shape = 'bf16[16,128]{1,0:T(8,128)(2,1)}', space=vmem, size = 0x1000, scoped, tag = 'scratch operand']
  #allocation5 [shape = 'bf16[16,128]{1,0:T(8,128)(2,1)}', space=vmem, size = 0x1000, scoped, tag = 'scratch operand']
  #allocation6 [shape = 'f32[16,128]{1,0:T(8,128)}', space=vmem, size = 0x2000, scoped, tag = 'scratch operand']
  %s0 = inlined_call_operand.vmem [shape: f32[2,8,256], index: 0, kind: input, shape index: {}, may-alias: {0,1}]
  %s1 = inlined_call_operand.vmem [shape: f32[2,8,256], index: 1, kind: input, shape index: {}, may-alias: {0,1}]
  %s2 = inlined_call_operand.vmem [shape: bf16[4,16,8], index: 2, kind: input, shape index: {}]
  %s3 = inlined_call_operand.vmem [shape: f32[16,1], index: 3, kind: input, shape index: {}]
  %s4 = inlined_call_operand.vmem [shape: bf16[4,16,16], index: 4, kind: input, shape index: {}]
  %s5 = inlined_call_operand.vmem [shape: f32[16,1], index: 5, kind: input, shape index: {}]
  %s6 = inlined_call_operand.vmem [shape: bf16[16,8], index: 6, kind: input, shape index: {}]
  %s7 = inlined_call_operand.vmem [shape: f32[16,1], index: 7, kind: input, shape index: {}]
  %s8 = inlined_call_operand.vmem [shape: f32[2,16,256], index: 8, kind: output, shape index: {}]
  %s9 = sld [smem:[#allocation0]]
  $region99: #{tcn_forward.2} parent=0
    _
  %s11 = ssub.s32 1, %s9
  %s12 = scalar_select 0, %s11, %s9
  $region1: #{tcn_forward.2} parent=0
    #allocation7 [shape = 'u8[16384]{0}', space=vmem, size = 0x4000, scoped, tag = 'output window, operand 0']
    loop: start=0, step=1, limit=6
    $region2: #{tcn_forward.2} parent=1 // loop_pre_header
      _
    $region3: #{tcn_forward.2} parent=1 // loop_header
      %s14 = sphi 0, %s18
      %p15 = scmp.ge.s32.totalorder %s14, 6
      %s21 = sphi 0, %s33
      %s22 = sphi 0, %s29
      %s23 = sphi 0, %s21
      %s24 = sphi 0, %s22
      %s25 = sphi 0, %s23
      %s26 = sphi 0, %s24
      %s38 = sphi 0, %s40
      %s41 = sphi 0, %s38
      %s42 = sphi 0, %s41
      %s58 = sphi 0, %s42
      %s72 = sphi 0, %s74
      %s75 = sphi 0, %s72
      %s76 = sphi 0, %s75
      %s92 = sphi 0, %s76
      %s96 = sphi 0, %s96
      %s98 = sphi 0, %s96
      %s99 = sphi 0, %s98
      %s113 = sphi 0, %s99
      %s117 = sphi 0, %s117
      %s119 = sphi 0, %s117
      %s120 = sphi 0, %s119
      %s134 = sphi 0, %s120
      %s138 = sphi 0, %s138
      %s140 = sphi 0, %s138
      %s141 = sphi 0, %s140
      %s155 = sphi 0, %s141
      %s159 = sphi 0, %s159
      %s161 = sphi 0, %s159
      %s162 = sphi 0, %s161
      %s176 = sphi 0, %s162
      %s180 = sphi 0, %s180
      %s182 = sphi 0, %s180
      %s183 = sphi 0, %s182
      %s197 = sphi 0, %s183
      %s201 = sphi 0, %s201
      %s203 = sphi 0, %s201
      %s204 = sphi 0, %s203
      %s218 = sphi 0, %s204
      %s226 = sphi 0, %s228
      %s229 = sphi 0, %s226
      %s230 = sphi 0, %s229
      %s246 = sphi 0, %s230
    $region4: #{tcn_forward.2} parent=1 // loop_header_branch
      %17 = sbr.rel (%p15) target = $region8
    $region5: #{tcn_forward.2} parent=1 // loop_body
      %s19 = ssub.s32 %s14, 1
      %s20 = ssub.s32 %s14, 2
      %s27 = sadd.s32 1, %s22
      %p28 = scmp.ge.s32.totalorder %s27, 2
      %s29 = scalar_select %p28, 0, %s27
      %s30 = sadd.s32 1, %s21
      %s31 = scalar_select %p28, %s30, %s21
      %p32 = scmp.ge.s32.totalorder %s31, 2
      %s33 = scalar_select %p32, 0, %s31
      %s34 = ssub.s32 %s21, %s33
      %s35 = ssub.s32 %s22, %s29
      %s36 = sor.u32 %s34, %s35
      %p37 = scmp.eq.s32.totalorder %s36, 0
      %s39 = sadd.s32 %s38, 1
      %s40 = scalar_select %p37, %s38, %s39
      %p43 = pneg %p37
      %p44 = scmp.eq.s32.totalorder %s14, 3
      %p45 = por %p43, %p44
      %p46 = scmp.ne.s32.totalorder %s38, %s41
      %p47 = scmp.eq.s32.totalorder %s14, 0
      %p48 = por %p46, %p47
      %p49 = scmp.ne.s32.totalorder %s38, %s41
      %p50 = scmp.eq.s32.totalorder %s19, 3
      %p51 = por %p49, %p50
      %p52 = scmp.ne.s32.totalorder %s41, %s42
      %p53 = scmp.eq.s32.totalorder %s19, 0
      %p54 = por %p52, %p53
      %p55 = scmp.ne.s32.totalorder %s41, %s42
      %p56 = scmp.eq.s32.totalorder %s20, 3
      %p57 = por %p55, %p56
      %p59 = scmp.ne.s32.totalorder %s42, %s58
      %p60 = scmp.eq.s32.totalorder %s20, 0
      %p61 = por %p59, %p60
      %s62 = ssub.s32 %s22, 1
      %p63 = scmp.gt.s32.totalorder %s62, 0
      %s64 = scalar_select %p63, %s62, 0
      %s65 = ssub.s32 %s29, 1
      %p66 = scmp.gt.s32.totalorder %s65, 0
      %s67 = scalar_select %p66, %s65, 0
      %s68 = ssub.s32 %s21, %s33
      %s69 = ssub.s32 %s64, %s67
      %s70 = sor.u32 %s68, %s69
      %p71 = scmp.eq.s32.totalorder %s70, 0
      %s73 = sadd.s32 %s72, 1
      %s74 = scalar_select %p71, %s72, %s73
      %p77 = pneg %p71
      %p78 = scmp.eq.s32.totalorder %s14, 3
      %p79 = por %p77, %p78
      %p80 = scmp.ne.s32.totalorder %s72, %s75
      %p81 = scmp.eq.s32.totalorder %s14, 0
      %p82 = por %p80, %p81
      %p83 = scmp.ne.s32.totalorder %s72, %s75
      %p84 = scmp.eq.s32.totalorder %s19, 3
      %p85 = por %p83, %p84
      %p86 = scmp.ne.s32.totalorder %s75, %s76
      %p87 = scmp.eq.s32.totalorder %s19, 0
      %p88 = por %p86, %p87
      %p89 = scmp.ne.s32.totalorder %s75, %s76
      %p90 = scmp.eq.s32.totalorder %s20, 3
      %p91 = por %p89, %p90
      %p93 = scmp.ne.s32.totalorder %s76, %s92
      %p94 = scmp.eq.s32.totalorder %s20, 0
      %p95 = por %p93, %p94
      %s97 = sadd.s32 %s96, 1
      %p100 = scmp.eq.s32.totalorder %s14, 3
      %p101 = scmp.ne.s32.totalorder %s96, %s98
      %p102 = scmp.eq.s32.totalorder %s14, 0
      %p103 = por %p101, %p102
      %p104 = scmp.ne.s32.totalorder %s96, %s98
      %p105 = scmp.eq.s32.totalorder %s19, 3
      %p106 = por %p104, %p105
      %p107 = scmp.ne.s32.totalorder %s98, %s99
      %p108 = scmp.eq.s32.totalorder %s19, 0
      %p109 = por %p107, %p108
      %p110 = scmp.ne.s32.totalorder %s98, %s99
      %p111 = scmp.eq.s32.totalorder %s20, 3
      %p112 = por %p110, %p111
      %p114 = scmp.ne.s32.totalorder %s99, %s113
      %p115 = scmp.eq.s32.totalorder %s20, 0
      %p116 = por %p114, %p115
      %s118 = sadd.s32 %s117, 1
      %p121 = scmp.eq.s32.totalorder %s14, 3
      %p122 = scmp.ne.s32.totalorder %s117, %s119
      %p123 = scmp.eq.s32.totalorder %s14, 0
      %p124 = por %p122, %p123
      %p125 = scmp.ne.s32.totalorder %s117, %s119
      %p126 = scmp.eq.s32.totalorder %s19, 3
      %p127 = por %p125, %p126
      %p128 = scmp.ne.s32.totalorder %s119, %s120
      %p129 = scmp.eq.s32.totalorder %s19, 0
      %p130 = por %p128, %p129
      %p131 = scmp.ne.s32.totalorder %s119, %s120
      %p132 = scmp.eq.s32.totalorder %s20, 3
      %p133 = por %p131, %p132
      %p135 = scmp.ne.s32.totalorder %s120, %s134
      %p136 = scmp.eq.s32.totalorder %s20, 0
      %p137 = por %p135, %p136
      %s139 = sadd.s32 %s138, 1
      %p142 = scmp.eq.s32.totalorder %s14, 3
      %p143 = scmp.ne.s32.totalorder %s138, %s140
      %p144 = scmp.eq.s32.totalorder %s14, 0
      %p145 = por %p143, %p144
      %p146 = scmp.ne.s32.totalorder %s138, %s140
      %p147 = scmp.eq.s32.totalorder %s19, 3
      %p148 = por %p146, %p147
      %p149 = scmp.ne.s32.totalorder %s140, %s141
      %p150 = scmp.eq.s32.totalorder %s19, 0
      %p151 = por %p149, %p150
      %p152 = scmp.ne.s32.totalorder %s140, %s141
      %p153 = scmp.eq.s32.totalorder %s20, 3
      %p154 = por %p152, %p153
      %p156 = scmp.ne.s32.totalorder %s141, %s155
      %p157 = scmp.eq.s32.totalorder %s20, 0
      %p158 = por %p156, %p157
      %s160 = sadd.s32 %s159, 1
      %p163 = scmp.eq.s32.totalorder %s14, 3
      %p164 = scmp.ne.s32.totalorder %s159, %s161
      %p165 = scmp.eq.s32.totalorder %s14, 0
      %p166 = por %p164, %p165
      %p167 = scmp.ne.s32.totalorder %s159, %s161
      %p168 = scmp.eq.s32.totalorder %s19, 3
      %p169 = por %p167, %p168
      %p170 = scmp.ne.s32.totalorder %s161, %s162
      %p171 = scmp.eq.s32.totalorder %s19, 0
      %p172 = por %p170, %p171
      %p173 = scmp.ne.s32.totalorder %s161, %s162
      %p174 = scmp.eq.s32.totalorder %s20, 3
      %p175 = por %p173, %p174
      %p177 = scmp.ne.s32.totalorder %s162, %s176
      %p178 = scmp.eq.s32.totalorder %s20, 0
      %p179 = por %p177, %p178
      %s181 = sadd.s32 %s180, 1
      %p184 = scmp.eq.s32.totalorder %s14, 3
      %p185 = scmp.ne.s32.totalorder %s180, %s182
      %p186 = scmp.eq.s32.totalorder %s14, 0
      %p187 = por %p185, %p186
      %p188 = scmp.ne.s32.totalorder %s180, %s182
      %p189 = scmp.eq.s32.totalorder %s19, 3
      %p190 = por %p188, %p189
      %p191 = scmp.ne.s32.totalorder %s182, %s183
      %p192 = scmp.eq.s32.totalorder %s19, 0
      %p193 = por %p191, %p192
      %p194 = scmp.ne.s32.totalorder %s182, %s183
      %p195 = scmp.eq.s32.totalorder %s20, 3
      %p196 = por %p194, %p195
      %p198 = scmp.ne.s32.totalorder %s183, %s197
      %p199 = scmp.eq.s32.totalorder %s20, 0
      %p200 = por %p198, %p199
      %s202 = sadd.s32 %s201, 1
      %p205 = scmp.eq.s32.totalorder %s14, 3
      %p206 = scmp.ne.s32.totalorder %s201, %s203
      %p207 = scmp.eq.s32.totalorder %s14, 0
      %p208 = por %p206, %p207
      %p209 = scmp.ne.s32.totalorder %s201, %s203
      %p210 = scmp.eq.s32.totalorder %s19, 3
      %p211 = por %p209, %p210
      %p212 = scmp.ne.s32.totalorder %s203, %s204
      %p213 = scmp.eq.s32.totalorder %s19, 0
      %p214 = por %p212, %p213
      %p215 = scmp.ne.s32.totalorder %s203, %s204
      %p216 = scmp.eq.s32.totalorder %s20, 3
      %p217 = por %p215, %p216
      %p219 = scmp.ne.s32.totalorder %s204, %s218
      %p220 = scmp.eq.s32.totalorder %s20, 0
      %p221 = por %p219, %p220
      %s222 = ssub.s32 %s21, %s33
      %s223 = ssub.s32 %s22, %s29
      %s224 = sor.u32 %s222, %s223
      %p225 = scmp.eq.s32.totalorder %s224, 0
      %s227 = sadd.s32 %s226, 1
      %s228 = scalar_select %p225, %s226, %s227
      %p231 = pneg %p225
      %p232 = scmp.eq.s32.totalorder %s14, 3
      %p233 = por %p231, %p232
      %p234 = scmp.ne.s32.totalorder %s226, %s229
      %p235 = scmp.eq.s32.totalorder %s14, 0
      %p236 = por %p234, %p235
      %p237 = scmp.ne.s32.totalorder %s226, %s229
      %p238 = scmp.eq.s32.totalorder %s19, 3
      %p239 = por %p237, %p238
      %p240 = scmp.ne.s32.totalorder %s229, %s230
      %p241 = scmp.eq.s32.totalorder %s19, 0
      %p242 = por %p240, %p241
      %p243 = scmp.ne.s32.totalorder %s229, %s230
      %p244 = scmp.eq.s32.totalorder %s20, 3
      %p245 = por %p243, %p244
      %p247 = scmp.ne.s32.totalorder %s230, %s246
      %p248 = scmp.eq.s32.totalorder %s20, 0
      %p249 = por %p247, %p248
      %p250 = scmp.le.s32.totalorder 1, %s14
      %p251 = scmp.lt.s32.totalorder %s14, 5
      %p252 = pnand %p250, %p251
      %p253 = pneg %p252
      // Predicated region
      $region9: #{tcn_forward.2} parent=5 // pred_check
        _
      $region10: #{tcn_forward.2} parent=5 // pred_check_branch
        %255 = sbr.rel (%p252) target = $region12
      $region11: #{tcn_forward.2} parent=5 // pred_region
        %s256 = ssub.s32 %s14, 1
        // Predicated region
        $region13: #{tcn_forward.2} parent=11 // pred_check
          %p257 = pneg %p109
        $region14: #{tcn_forward.2} parent=11 // pred_check_branch
          %259 = sbr.rel (%p257) target = $region16
        $region15: #{tcn_forward.2} parent=11 // pred_region
          _
        $region16: #{tcn_forward.2} parent=11 // pred_fallthru
          _
        // Predicated region
        $region17: #{tcn_forward.2} parent=11 // pred_check
          %p260 = pneg %p130
        $region18: #{tcn_forward.2} parent=11 // pred_check_branch
          %262 = sbr.rel (%p260) target = $region20
        $region19: #{tcn_forward.2} parent=11 // pred_region
          _
        $region20: #{tcn_forward.2} parent=11 // pred_fallthru
          _
        // Predicated region
        $region21: #{tcn_forward.2} parent=11 // pred_check
          %p263 = pneg %p151
        $region22: #{tcn_forward.2} parent=11 // pred_check_branch
          %265 = sbr.rel (%p263) target = $region24
        $region23: #{tcn_forward.2} parent=11 // pred_region
          _
        $region24: #{tcn_forward.2} parent=11 // pred_fallthru
          _
        // Predicated region
        $region25: #{tcn_forward.2} parent=11 // pred_check
          %p266 = pneg %p172
        $region26: #{tcn_forward.2} parent=11 // pred_check_branch
          %268 = sbr.rel (%p266) target = $region28
        $region27: #{tcn_forward.2} parent=11 // pred_region
          _
        $region28: #{tcn_forward.2} parent=11 // pred_fallthru
          _
        // Predicated region
        $region29: #{tcn_forward.2} parent=11 // pred_check
          %p269 = pneg %p193
        $region30: #{tcn_forward.2} parent=11 // pred_check_branch
          %271 = sbr.rel (%p269) target = $region32
        $region31: #{tcn_forward.2} parent=11 // pred_region
          _
        $region32: #{tcn_forward.2} parent=11 // pred_fallthru
          _
        // Predicated region
        $region33: #{tcn_forward.2} parent=11 // pred_check
          %p272 = pneg %p214
        $region34: #{tcn_forward.2} parent=11 // pred_check_branch
          %274 = sbr.rel (%p272) target = $region36
        $region35: #{tcn_forward.2} parent=11 // pred_region
          _
        $region36: #{tcn_forward.2} parent=11 // pred_fallthru
          _
      $region12: #{tcn_forward.2} parent=5 // pred_fallthru
        _
      %p275 = scmp.lt.s32.totalorder %s14, 4
      // Predicated region
      $region37: #{tcn_forward.2} parent=5 // pred_check
        %p276 = pneg %p275
      $region38: #{tcn_forward.2} parent=5 // pred_check_branch
        %278 = sbr.rel (%p276) target = $region40
      $region39: #{tcn_forward.2} parent=5 // pred_region
        // Predicated region
        $region41: #{tcn_forward.2} parent=39 // pred_check
          %p279 = pneg %p48
        $region42: #{tcn_forward.2} parent=39 // pred_check_branch
          %281 = sbr.rel (%p279) target = $region44
        $region43: #{tcn_forward.2} parent=39 // pred_region
          %p282 = scmp.lt.s32.totalorder %s21, 1
          %s283 = scalar_select %p282, %s21, 1
          %p284 = scmp.lt.s32.totalorder %s22, 1
          %s285 = scalar_select %p284, %s22, 1
          %s286 = smul.addr %s283, 2
          %s287 = sadd.s32 %s285, %s286
          %s288 = smul.addr %s287, 8
          %s289 = scalar_lea.vmem %s0, %s288
        $region44: #{tcn_forward.2} parent=39 // pred_fallthru
          _
        // Predicated region
        $region45: #{tcn_forward.2} parent=39 // pred_check
          %p290 = pneg %p82
        $region46: #{tcn_forward.2} parent=39 // pred_check_branch
          %292 = sbr.rel (%p290) target = $region48
        $region47: #{tcn_forward.2} parent=39 // pred_region
          %s293 = ssub.s32 %s22, 1
          %p294 = scmp.gt.s32.totalorder %s293, 0
          %s295 = scalar_select %p294, %s293, 0
          %p296 = scmp.lt.s32.totalorder %s21, 1
          %s297 = scalar_select %p296, %s21, 1
          %p298 = scmp.lt.s32.totalorder %s295, 1
          %s299 = scalar_select %p298, %s295, 1
          %s300 = smul.addr %s297, 2
          %s301 = sadd.s32 %s299, %s300
          %s302 = smul.addr %s301, 8
          %s303 = scalar_lea.vmem %s1, %s302
          %s304 = ssub.s32 %s22, 1
          %p305 = scmp.gt.s32.totalorder %s304, 0
          %s306 = scalar_select %p305, %s304, 0
        $region48: #{tcn_forward.2} parent=39 // pred_fallthru
          _
      $region40: #{tcn_forward.2} parent=5 // pred_fallthru
        _
      %p307 = scmp.le.s32.totalorder 1, %s14
      %p308 = scmp.lt.s32.totalorder %s14, 5
      %p309 = pnand %p307, %p308
      %p310 = pneg %p309
      // Predicated region
      $region49: #{tcn_forward.2} parent=5 // pred_check
        _
      $region50: #{tcn_forward.2} parent=5 // pred_check_branch
        %312 = sbr.rel (%p309) target = $region52
      $region51: #{tcn_forward.2} parent=5 // pred_region
        %s313 = ssub.s32 %s14, 1
        %p314 = scmp.lt.s32.totalorder %s23, 1
        %s315 = scalar_select %p314, %s23, 1
        %p316 = scmp.lt.s32.totalorder %s24, 1
        %s317 = scalar_select %p316, %s24, 1
        %s318 = smul.addr %s315, 2
        %s319 = sadd.s32 %s317, %s318
        %s320 = smul.addr %s319, 8
        %s321 = scalar_lea.vmem %s0, %s320
        %p322 = pneg %p54
        %p323 = pneg %p51
        %s324 = ssub.s32 %s24, 1
        %p325 = scmp.gt.s32.totalorder %s324, 0
        %s326 = scalar_select %p325, %s324, 0
        %p327 = scmp.lt.s32.totalorder %s23, 1
        %s328 = scalar_select %p327, %s23, 1
        %p329 = scmp.lt.s32.totalorder %s326, 1
        %s330 = scalar_select %p329, %s326, 1
        %s331 = smul.addr %s328, 2
        %s332 = sadd.s32 %s330, %s331
        %s333 = smul.addr %s332, 8
        %s334 = scalar_lea.vmem %s1, %s333
        %p335 = pneg %p88
        %p336 = pneg %p85
        %p337 = pneg %p109
        %p338 = pneg %p106
        %p339 = pneg %p130
        %p340 = pneg %p127
        %p341 = pneg %p151
        %p342 = pneg %p148
        %p343 = pneg %p172
        %p344 = pneg %p169
        %p345 = pneg %p193
        %p346 = pneg %p190
        %p347 = pneg %p214
        %p348 = pneg %p211
        %p349 = pneg %p242
        %p350 = pneg %p239
        %s351 = sand.u32 %s229, 1
        %s352 = sand.u32 %s229, 1
        %s353 = smul.addr %s352, 16
        %s354 = scalar_lea.vmem [#allocation7], %s353
        %p355 = scmp.lt.s32.totalorder %s23, 1
        %s356 = scalar_select %p355, %s23, 1
        %p357 = scmp.lt.s32.totalorder %s24, 1
        %s358 = scalar_select %p357, %s24, 1
        %s359 = smul.addr %s356, 2
        %s360 = sadd.s32 %s358, %s359
        %s361 = smul.addr %s360, 8
        %s362 = scalar_lea.vmem %s0, %s361
        %s363 = ssub.s32 %s24, 1
        %p364 = scmp.gt.s32.totalorder %s363, 0
        %s365 = scalar_select %p364, %s363, 0
        %p366 = scmp.lt.s32.totalorder %s23, 1
        %s367 = scalar_select %p366, %s23, 1
        %p368 = scmp.lt.s32.totalorder %s365, 1
        %s369 = scalar_select %p368, %s365, 1
        %s370 = smul.addr %s367, 2
        %s371 = sadd.s32 %s369, %s370
        %s372 = smul.addr %s371, 8
        %s373 = scalar_lea.vmem %s1, %s372
        %s374 = ssub.s32 %s24, 1
        %p375 = scmp.gt.s32.totalorder %s374, 0
        %s376 = scalar_select %p375, %s374, 0
        %p378 = scmp.eq.s32.totalorder %s24, 0
        %v379 = vld [vmem:[%s362] sm:$0xff]
        %v380 = vpack.c.bf16 %v379, %v379
        %v381 = vld [vmem:[%s373] sm:$0xff]
        %s382 = scalar_select %p378, 1, 0
        %v383 = vstv %s382
        %vm384 = vcmp.eq.s32.totalorder %v383, 1
        %v385 = vsel %vm384, 0.0, %v381
        %v386 = vpack.c.bf16 %v385, %v385
        %v387 = vld [vmem:[%s3] sm:$0xff]
        %v388 = vld [vmem:[%s3 + $0x8] sm:$0xff]
        %s389 = scalar_lea.vmem %s2, 24
        %v390 = vld [vmem:[%s389] sm:$0xf]
        %v391 = vld [vmem:[%s389 + $0x4] sm:$0xf]
        %393 = vset.pattern.permute.xlu0 0
        %394 = vperm.xlu0 %393, %v387
        %v395 = vpop.permute.xlu0 %394
        %398 = vset.pattern.permute.xlu0 0
        %399 = vperm.xlu0 %398, %v388
        %v400 = vpop.permute.xlu0 %399
        %v404 = vunpack.c.l.b16 %v390
        %v405 = vunpack.c.l.b16 %v391
        %v406 = vpack.c.b16 %v405, %v404
        %vm407 = vcmask 64512
        %v409 = vsel %vm407, %v406, 0
        %vm411 = vcmask 1043456
        %v413 = vsel %vm411, %v380, 0
        %415 = vmatprep.subr.bf16.mxu0 0
        %416 = vmatpush1.bf16.msra.mxu0 0
        %417 = vmatprep.subr.bf16.mxu0 0
        %418 = vmatpush1.bf16.msra.mxu0 0
        %419 = vmatprep.subr.bf16.mxu0 0
        %420 = vmatpush1.bf16.msra.mxu0 0
        %421 = vmatprep.subr.bf16.mxu0 0
        %422 = vmatpush1.bf16.msra.mxu0 0
        %423 = vmatprep.subr.bf16.mxu0 0
        %424 = vmatpush1.bf16.msra.mxu0 0
        %425 = vmatprep.subr.bf16.mxu0 0
        %426 = vmatpush1.bf16.msra.mxu0 0
        %427 = vmatprep.subr.bf16.mxu0 0
        %428 = vmatpush1.bf16.msra.mxu0 0
        %429 = vmatprep.subr.bf16.mxu0 0
        %430 = vmatpush1.bf16.msra.mxu0 %v413
        %431 = vmatprep.subr.bf16.mxu0 0
        %432 = vmatpush2.bf16.msra.mxu0 0
        %433 = vmatprep.subr.bf16.mxu0 0
        %434 = vmatpush2.bf16.msra.mxu0 0
        %435 = vmatprep.subr.bf16.mxu0 0
        %436 = vmatpush2.bf16.msra.mxu0 0
        %437 = vmatprep.subr.bf16.mxu0 0
        %438 = vmatpush2.bf16.msra.mxu0 0
        %439 = vmatprep.subr.bf16.mxu0 0
        %440 = vmatpush2.bf16.msra.mxu0 0
        %441 = vmatprep.subr.bf16.mxu0 0
        %442 = vmatpush2.bf16.msra.mxu0 0
        %443 = vmatprep.subr.bf16.mxu0 0
        %444 = vmatpush2.bf16.msra.mxu0 0
        %445 = vmatprep.subr.bf16.mxu0 0
        %446 = vmatpush2.bf16.msra.mxu0 0
        %447 = vmatprep.mubr.bf16.mxu0 0
        %448 = vmatmul.mubr.bf16.gmra.mxu0 %v409
        %v449 = vpop.f32.mrf.mxu0
        %v450 = vadd.f32 %v395, %v449
        %v451 = vpop.f32.mrf.mxu0
        %v452 = vpop.f32.mrf.mxu0
        %v453 = vadd.f32 %v400, %v452
        %v454 = vpop.f32.mrf.mxu0
        %455 = vdwg.mxu0
        %456 = vst [vmem:[#allocation2] sm:$0xff] %v450
        %457 = vst [vmem:[#allocation2 + $0x8] sm:$0xff] %v453
        %v459 = vsel %vm411, %v386, 0
        %461 = vmatprep.subr.bf16.mxu0 0
        %462 = vmatpush1.bf16.msra.mxu0 0
        %463 = vmatprep.subr.bf16.mxu0 0
        %464 = vmatpush1.bf16.msra.mxu0 0
        %465 = vmatprep.subr.bf16.mxu0 0
        %466 = vmatpush1.bf16.msra.mxu0 0
        %467 = vmatprep.subr.bf16.mxu0 0
        %468 = vmatpush1.bf16.msra.mxu0 0
        %469 = vmatprep.subr.bf16.mxu0 0
        %470 = vmatpush1.bf16.msra.mxu0 0
        %471 = vmatprep.subr.bf16.mxu0 0
        %472 = vmatpush1.bf16.msra.mxu0 0
        %473 = vmatprep.subr.bf16.mxu0 0
        %474 = vmatpush1.bf16.msra.mxu0 0
        %475 = vmatprep.subr.bf16.mxu0 0
        %476 = vmatpush1.bf16.msra.mxu0 %v459
        %477 = vmatprep.subr.bf16.mxu0 0
        %478 = vmatpush2.bf16.msra.mxu0 0
        %479 = vmatprep.subr.bf16.mxu0 0
        %480 = vmatpush2.bf16.msra.mxu0 0
        %481 = vmatprep.subr.bf16.mxu0 0
        %482 = vmatpush2.bf16.msra.mxu0 0
        %483 = vmatprep.subr.bf16.mxu0 0
        %484 = vmatpush2.bf16.msra.mxu0 0
        %485 = vmatprep.subr.bf16.mxu0 0
        %486 = vmatpush2.bf16.msra.mxu0 0
        %487 = vmatprep.subr.bf16.mxu0 0
        %488 = vmatpush2.bf16.msra.mxu0 0
        %489 = vmatprep.subr.bf16.mxu0 0
        %490 = vmatpush2.bf16.msra.mxu0 0
        %491 = vmatprep.subr.bf16.mxu0 0
        %492 = vmatpush2.bf16.msra.mxu0 0
        %493 = vmatprep.mubr.bf16.mxu0 0
        %494 = vmatmul.mubr.bf16.gmra.mxu0 %v409
        %v495 = vpop.f32.mrf.mxu0
        %v496 = vadd.f32 %v395, %v495
        %v497 = vpop.f32.mrf.mxu0
        %v498 = vpop.f32.mrf.mxu0
        %v499 = vadd.f32 %v400, %v498
        %v500 = vpop.f32.mrf.mxu0
        %501 = vdwg.mxu0
        %502 = vst [vmem:[#allocation3] sm:$0xff] %v496
        %503 = vst [vmem:[#allocation3 + $0x8] sm:$0xff] %v499
        %v504 = vld [vmem:[%s2] sm:$0xf]
        %v505 = vld [vmem:[%s2 + $0x4] sm:$0xf]
        %v508 = vunpack.c.l.b16 %v504
        %v509 = vunpack.c.l.b16 %v505
        %v510 = vpack.c.b16 %v509, %v508
        %v512 = vsel %vm407, %v510, 0
        %514 = vmatprep.subr.bf16.mxu0 0
        %515 = vmatpush1.bf16.msra.mxu0 0
        %516 = vmatprep.subr.bf16.mxu0 0
        %517 = vmatpush1.bf16.msra.mxu0 0
        %518 = vmatprep.subr.bf16.mxu0 0
        %519 = vmatpush1.bf16.msra.mxu0 0
        %520 = vmatprep.subr.bf16.mxu0 0
        %521 = vmatpush1.bf16.msra.mxu0 0
        %522 = vmatprep.subr.bf16.mxu0 0
        %523 = vmatpush1.bf16.msra.mxu0 0
        %524 = vmatprep.subr.bf16.mxu0 0
        %525 = vmatpush1.bf16.msra.mxu0 0
        %526 = vmatprep.subr.bf16.mxu0 0
        %527 = vmatpush1.bf16.msra.mxu0 0
        %528 = vmatprep.subr.bf16.mxu0 0
        %529 = vmatpush1.bf16.msra.mxu0 %v413
        %530 = vmatprep.subr.bf16.mxu0 0
        %531 = vmatpush2.bf16.msra.mxu0 0
        %532 = vmatprep.subr.bf16.mxu0 0
        %533 = vmatpush2.bf16.msra.mxu0 0
        %534 = vmatprep.subr.bf16.mxu0 0
        %535 = vmatpush2.bf16.msra.mxu0 0
        %536 = vmatprep.subr.bf16.mxu0 0
        %537 = vmatpush2.bf16.msra.mxu0 0
        %538 = vmatprep.subr.bf16.mxu0 0
        %539 = vmatpush2.bf16.msra.mxu0 0
        %540 = vmatprep.subr.bf16.mxu0 0
        %541 = vmatpush2.bf16.msra.mxu0 0
        %542 = vmatprep.subr.bf16.mxu0 0
        %543 = vmatpush2.bf16.msra.mxu0 0
        %544 = vmatprep.subr.bf16.mxu0 0
        %545 = vmatpush2.bf16.msra.mxu0 0
        %546 = vmatprep.mubr.bf16.mxu0 0
        %547 = vmatmul.mubr.bf16.gmra.mxu0 %v512
        %v548 = vpop.f32.mrf.mxu0
        %v549 = vadd.f32 0.0, %v548
        %v550 = vpop.f32.mrf.mxu0
        %v551 = vpop.f32.mrf.mxu0
        %v552 = vadd.f32 0.0, %v551
        %v553 = vpop.f32.mrf.mxu0
        %554 = vdwg.mxu0
        %555 = vmatprep.subr.bf16.mxu0 0
        %556 = vmatpush1.bf16.msra.mxu0 0
        %557 = vmatprep.subr.bf16.mxu0 0
        %558 = vmatpush1.bf16.msra.mxu0 0
        %559 = vmatprep.subr.bf16.mxu0 0
        %560 = vmatpush1.bf16.msra.mxu0 0
        %561 = vmatprep.subr.bf16.mxu0 0
        %562 = vmatpush1.bf16.msra.mxu0 0
        %563 = vmatprep.subr.bf16.mxu0 0
        %564 = vmatpush1.bf16.msra.mxu0 0
        %565 = vmatprep.subr.bf16.mxu0 0
        %566 = vmatpush1.bf16.msra.mxu0 0
        %567 = vmatprep.subr.bf16.mxu0 0
        %568 = vmatpush1.bf16.msra.mxu0 0
        %569 = vmatprep.subr.bf16.mxu0 0
        %570 = vmatpush1.bf16.msra.mxu0 %v459
        %571 = vmatprep.subr.bf16.mxu0 0
        %572 = vmatpush2.bf16.msra.mxu0 0
        %573 = vmatprep.subr.bf16.mxu0 0
        %574 = vmatpush2.bf16.msra.mxu0 0
        %575 = vmatprep.subr.bf16.mxu0 0
        %576 = vmatpush2.bf16.msra.mxu0 0
        %577 = vmatprep.subr.bf16.mxu0 0
        %578 = vmatpush2.bf16.msra.mxu0 0
        %579 = vmatprep.subr.bf16.mxu0 0
        %580 = vmatpush2.bf16.msra.mxu0 0
        %581 = vmatprep.subr.bf16.mxu0 0
        %582 = vmatpush2.bf16.msra.mxu0 0
        %583 = vmatprep.subr.bf16.mxu0 0
        %584 = vmatpush2.bf16.msra.mxu0 0
        %585 = vmatprep.subr.bf16.mxu0 0
        %586 = vmatpush2.bf16.msra.mxu0 0
        %587 = vmatprep.mubr.bf16.mxu0 0
        %588 = vmatmul.mubr.bf16.gmra.mxu0 %v512
        %v589 = vpop.f32.mrf.mxu0
        %v590 = vadd.f32 0.0, %v589
        %v591 = vpop.f32.mrf.mxu0
        %v592 = vpop.f32.mrf.mxu0
        %v593 = vadd.f32 0.0, %v592
        %v594 = vpop.f32.mrf.mxu0
        %595 = vdwg.mxu0
        %v596 = vld [vmem:[#allocation2] sm:$0xff]
        %v597 = vld [vmem:[#allocation2 + $0x8] sm:$0xff]
        %600 = vrot.lane.b32.xlu0 %v549, 3
        %v601 = vpop.permute.xlu0 %600
        %602 = vrot.lane.b32.xlu0 %v552, 3
        %v603 = vpop.permute.xlu0 %602
        %v606 = vadd.f32 %v596, %v601
        %v607 = vadd.f32 %v597, %v603
        %vm608 = vcmask 1047576
        %609 = vst.msk [vmem:[#allocation2] sm:$0xff] %vm608, %v606
        %610 = vst.msk [vmem:[#allocation2 + $0x8] sm:$0xff] %vm608, %v607
        %v611 = vld [vmem:[#allocation2] sm:$0xff]
        %v612 = vld [vmem:[#allocation2 + $0x8] sm:$0xff]
        %615 = vrot.lane.b32.xlu0 %v590, 3
        %v616 = vpop.permute.xlu0 %615
        %617 = vrot.lane.b32.xlu0 %v593, 3
        %v618 = vpop.permute.xlu0 %617
        %v621 = vadd.f32 %v611, %v616
        %v622 = vadd.f32 %v612, %v618
        %vm623 = vcmask 23552
        %624 = vst.msk [vmem:[#allocation2] sm:$0xff] %vm623, %v621
        %625 = vst.msk [vmem:[#allocation2 + $0x8] sm:$0xff] %vm623, %v622
        %v626 = vld [vmem:[#allocation3] sm:$0xff]
        %v627 = vld [vmem:[#allocation3 + $0x8] sm:$0xff]
        %v628 = vadd.f32 %v626, %v616
        %v629 = vadd.f32 %v627, %v618
        %630 = vst.msk [vmem:[#allocation3] sm:$0xff] %vm608, %v628
        %631 = vst.msk [vmem:[#allocation3 + $0x8] sm:$0xff] %vm608, %v629
        %s632 = scalar_lea.vmem %s2, 8
        %v633 = vld [vmem:[%s632] sm:$0xf]
        %v634 = vld [vmem:[%s632 + $0x4] sm:$0xf]
        %v637 = vunpack.c.l.b16 %v633
        %v638 = vunpack.c.l.b16 %v634
        %v639 = vpack.c.b16 %v638, %v637
        %v641 = vsel %vm407, %v639, 0
        %643 = vmatprep.subr.bf16.mxu0 0
        %644 = vmatpush1.bf16.msra.mxu0 0
        %645 = vmatprep.subr.bf16.mxu0 0
        %646 = vmatpush1.bf16.msra.mxu0 0
        %647 = vmatprep.subr.bf16.mxu0 0
        %648 = vmatpush1.bf16.msra.mxu0 0
        %649 = vmatprep.subr.bf16.mxu0 0
        %650 = vmatpush1.bf16.msra.mxu0 0
        %651 = vmatprep.subr.bf16.mxu0 0
        %652 = vmatpush1.bf16.msra.mxu0 0
        %653 = vmatprep.subr.bf16.mxu0 0
        %654 = vmatpush1.bf16.msra.mxu0 0
        %655 = vmatprep.subr.bf16.mxu0 0
        %656 = vmatpush1.bf16.msra.mxu0 0
        %657 = vmatprep.subr.bf16.mxu0 0
        %658 = vmatpush1.bf16.msra.mxu0 %v413
        %659 = vmatprep.subr.bf16.mxu0 0
        %660 = vmatpush2.bf16.msra.mxu0 0
        %661 = vmatprep.subr.bf16.mxu0 0
        %662 = vmatpush2.bf16.msra.mxu0 0
        %663 = vmatprep.subr.bf16.mxu0 0
        %664 = vmatpush2.bf16.msra.mxu0 0
        %665 = vmatprep.subr.bf16.mxu0 0
        %666 = vmatpush2.bf16.msra.mxu0 0
        %667 = vmatprep.subr.bf16.mxu0 0
        %668 = vmatpush2.bf16.msra.mxu0 0
        %669 = vmatprep.subr.bf16.mxu0 0
        %670 = vmatpush2.bf16.msra.mxu0 0
        %671 = vmatprep.subr.bf16.mxu0 0
        %672 = vmatpush2.bf16.msra.mxu0 0
        %673 = vmatprep.subr.bf16.mxu0 0
        %674 = vmatpush2.bf16.msra.mxu0 0
        %675 = vmatprep.mubr.bf16.mxu0 0
        %676 = vmatmul.mubr.bf16.gmra.mxu0 %v641
        %v677 = vpop.f32.mrf.mxu0
        %v678 = vadd.f32 0.0, %v677
        %v679 = vpop.f32.mrf.mxu0
        %v680 = vpop.f32.mrf.mxu0
        %v681 = vadd.f32 0.0, %v680
        %v682 = vpop.f32.mrf.mxu0
        %683 = vdwg.mxu0
        %684 = vmatprep.subr.bf16.mxu0 0
        %685 = vmatpush1.bf16.msra.mxu0 0
        %686 = vmatprep.subr.bf16.mxu0 0
        %687 = vmatpush1.bf16.msra.mxu0 0
        %688 = vmatprep.subr.bf16.mxu0 0
        %689 = vmatpush1.bf16.msra.mxu0 0
        %690 = vmatprep.subr.bf16.mxu0 0
        %691 = vmatpush1.bf16.msra.mxu0 0
        %692 = vmatprep.subr.bf16.mxu0 0
        %693 = vmatpush1.bf16.msra.mxu0 0
        %694 = vmatprep.subr.bf16.mxu0 0
        %695 = vmatpush1.bf16.msra.mxu0 0
        %696 = vmatprep.subr.bf16.mxu0 0
        %697 = vmatpush1.bf16.msra.mxu0 0
        %698 = vmatprep.subr.bf16.mxu0 0
        %699 = vmatpush1.bf16.msra.mxu0 %v459
        %700 = vmatprep.subr.bf16.mxu0 0
        %701 = vmatpush2.bf16.msra.mxu0 0
        %702 = vmatprep.subr.bf16.mxu0 0
        %703 = vmatpush2.bf16.msra.mxu0 0
        %704 = vmatprep.subr.bf16.mxu0 0
        %705 = vmatpush2.bf16.msra.mxu0 0
        %706 = vmatprep.subr.bf16.mxu0 0
        %707 = vmatpush2.bf16.msra.mxu0 0
        %708 = vmatprep.subr.bf16.mxu0 0
        %709 = vmatpush2.bf16.msra.mxu0 0
        %710 = vmatprep.subr.bf16.mxu0 0
        %711 = vmatpush2.bf16.msra.mxu0 0
        %712 = vmatprep.subr.bf16.mxu0 0
        %713 = vmatpush2.bf16.msra.mxu0 0
        %714 = vmatprep.subr.bf16.mxu0 0
        %715 = vmatpush2.bf16.msra.mxu0 0
        %716 = vmatprep.mubr.bf16.mxu0 0
        %717 = vmatmul.mubr.bf16.gmra.mxu0 %v641
        %v718 = vpop.f32.mrf.mxu0
        %v719 = vadd.f32 0.0, %v718
        %v720 = vpop.f32.mrf.mxu0
        %v721 = vpop.f32.mrf.mxu0
        %v722 = vadd.f32 0.0, %v721
        %v723 = vpop.f32.mrf.mxu0
        %724 = vdwg.mxu0
        %v725 = vld [vmem:[#allocation2] sm:$0xff]
        %v726 = vld [vmem:[#allocation2 + $0x8] sm:$0xff]
        %729 = vrot.lane.b32.xlu0 %v678, 2
        %v730 = vpop.permute.xlu0 %729
        %731 = vrot.lane.b32.xlu0 %v681, 2
        %v732 = vpop.permute.xlu0 %731
        %v735 = vadd.f32 %v725, %v730
        %v736 = vadd.f32 %v726, %v732
        %vm737 = vcmask 1047568
        %738 = vst.msk [vmem:[#allocation2] sm:$0xff] %vm737, %v735
        %739 = vst.msk [vmem:[#allocation2 + $0x8] sm:$0xff] %vm737, %v736
        %v740 = vld [vmem:[#allocation2] sm:$0xff]
        %v741 = vld [vmem:[#allocation2 + $0x8] sm:$0xff]
        %744 = vrot.lane.b32.xlu0 %v719, 2
        %v745 = vpop.permute.xlu0 %744
        %746 = vrot.lane.b32.xlu0 %v722, 2
        %v747 = vpop.permute.xlu0 %746
        %v750 = vadd.f32 %v740, %v745
        %v751 = vadd.f32 %v741, %v747
        %vm752 = vcmask 15360
        %753 = vst.msk [vmem:[#allocation2] sm:$0xff] %vm752, %v750
        %754 = vst.msk [vmem:[#allocation2 + $0x8] sm:$0xff] %vm752, %v751
        %v755 = vld [vmem:[#allocation3] sm:$0xff]
        %v756 = vld [vmem:[#allocation3 + $0x8] sm:$0xff]
        %v757 = vadd.f32 %v755, %v745
        %v758 = vadd.f32 %v756, %v747
        %759 = vst.msk [vmem:[#allocation3] sm:$0xff] %vm737, %v757
        %760 = vst.msk [vmem:[#allocation3 + $0x8] sm:$0xff] %vm737, %v758
        %s761 = scalar_lea.vmem %s2, 16
        %v762 = vld [vmem:[%s761] sm:$0xf]
        %v763 = vld [vmem:[%s761 + $0x4] sm:$0xf]
        %v766 = vunpack.c.l.b16 %v762
        %v767 = vunpack.c.l.b16 %v763
        %v768 = vpack.c.b16 %v767, %v766
        %v770 = vsel %vm407, %v768, 0
        %772 = vmatprep.subr.bf16.mxu0 0
        %773 = vmatpush1.bf16.msra.mxu0 0
        %774 = vmatprep.subr.bf16.mxu0 0
        %775 = vmatpush1.bf16.msra.mxu0 0
        %776 = vmatprep.subr.bf16.mxu0 0
        %777 = vmatpush1.bf16.msra.mxu0 0
        %778 = vmatprep.subr.bf16.mxu0 0
        %779 = vmatpush1.bf16.msra.mxu0 0
        %780 = vmatprep.subr.bf16.mxu0 0
        %781 = vmatpush1.bf16.msra.mxu0 0
        %782 = vmatprep.subr.bf16.mxu0 0
        %783 = vmatpush1.bf16.msra.mxu0 0
        %784 = vmatprep.subr.bf16.mxu0 0
        %785 = vmatpush1.bf16.msra.mxu0 0
        %786 = vmatprep.subr.bf16.mxu0 0
        %787 = vmatpush1.bf16.msra.mxu0 %v413
        %788 = vmatprep.subr.bf16.mxu0 0
        %789 = vmatpush2.bf16.msra.mxu0 0
        %790 = vmatprep.subr.bf16.mxu0 0
        %791 = vmatpush2.bf16.msra.mxu0 0
        %792 = vmatprep.subr.bf16.mxu0 0
        %793 = vmatpush2.bf16.msra.mxu0 0
        %794 = vmatprep.subr.bf16.mxu0 0
        %795 = vmatpush2.bf16.msra.mxu0 0
        %796 = vmatprep.subr.bf16.mxu0 0
        %797 = vmatpush2.bf16.msra.mxu0 0
        %798 = vmatprep.subr.bf16.mxu0 0
        %799 = vmatpush2.bf16.msra.mxu0 0
        %800 = vmatprep.subr.bf16.mxu0 0
        %801 = vmatpush2.bf16.msra.mxu0 0
        %802 = vmatprep.subr.bf16.mxu0 0
        %803 = vmatpush2.bf16.msra.mxu0 0
        %804 = vmatprep.mubr.bf16.mxu0 0
        %805 = vmatmul.mubr.bf16.gmra.mxu0 %v770
        %v806 = vpop.f32.mrf.mxu0
        %v807 = vadd.f32 0.0, %v806
        %v808 = vpop.f32.mrf.mxu0
        %v809 = vpop.f32.mrf.mxu0
        %v810 = vadd.f32 0.0, %v809
        %v811 = vpop.f32.mrf.mxu0
        %812 = vdwg.mxu0
        %813 = vmatprep.subr.bf16.mxu0 0
        %814 = vmatpush1.bf16.msra.mxu0 0
        %815 = vmatprep.subr.bf16.mxu0 0
        %816 = vmatpush1.bf16.msra.mxu0 0
        %817 = vmatprep.subr.bf16.mxu0 0
        %818 = vmatpush1.bf16.msra.mxu0 0
        %819 = vmatprep.subr.bf16.mxu0 0
        %820 = vmatpush1.bf16.msra.mxu0 0
        %821 = vmatprep.subr.bf16.mxu0 0
        %822 = vmatpush1.bf16.msra.mxu0 0
        %823 = vmatprep.subr.bf16.mxu0 0
        %824 = vmatpush1.bf16.msra.mxu0 0
        %825 = vmatprep.subr.bf16.mxu0 0
        %826 = vmatpush1.bf16.msra.mxu0 0
        %827 = vmatprep.subr.bf16.mxu0 0
        %828 = vmatpush1.bf16.msra.mxu0 %v459
        %829 = vmatprep.subr.bf16.mxu0 0
        %830 = vmatpush2.bf16.msra.mxu0 0
        %831 = vmatprep.subr.bf16.mxu0 0
        %832 = vmatpush2.bf16.msra.mxu0 0
        %833 = vmatprep.subr.bf16.mxu0 0
        %834 = vmatpush2.bf16.msra.mxu0 0
        %835 = vmatprep.subr.bf16.mxu0 0
        %836 = vmatpush2.bf16.msra.mxu0 0
        %837 = vmatprep.subr.bf16.mxu0 0
        %838 = vmatpush2.bf16.msra.mxu0 0
        %839 = vmatprep.subr.bf16.mxu0 0
        %840 = vmatpush2.bf16.msra.mxu0 0
        %841 = vmatprep.subr.bf16.mxu0 0
        %842 = vmatpush2.bf16.msra.mxu0 0
        %843 = vmatprep.subr.bf16.mxu0 0
        %844 = vmatpush2.bf16.msra.mxu0 0
        %845 = vmatprep.mubr.bf16.mxu0 0
        %846 = vmatmul.mubr.bf16.gmra.mxu0 %v770
        %v847 = vpop.f32.mrf.mxu0
        %v848 = vadd.f32 0.0, %v847
        %v849 = vpop.f32.mrf.mxu0
        %v850 = vpop.f32.mrf.mxu0
        %v851 = vadd.f32 0.0, %v850
        %v852 = vpop.f32.mrf.mxu0
        %853 = vdwg.mxu0
        %v854 = vld [vmem:[#allocation2] sm:$0xff]
        %v855 = vld [vmem:[#allocation2 + $0x8] sm:$0xff]
        %858 = vrot.lane.b32.xlu0 %v807, 1
        %v859 = vpop.permute.xlu0 %858
        %860 = vrot.lane.b32.xlu0 %v810, 1
        %v861 = vpop.permute.xlu0 %860
        %v864 = vadd.f32 %v854, %v859
        %v865 = vadd.f32 %v855, %v861
        %vm866 = vcmask 1047560
        %867 = vst.msk [vmem:[#allocation2] sm:$0xff] %vm866, %v864
        %868 = vst.msk [vmem:[#allocation2 + $0x8] sm:$0xff] %vm866, %v865
        %v869 = vld [vmem:[#allocation2] sm:$0xff]
        %v870 = vld [vmem:[#allocation2 + $0x8] sm:$0xff]
        %873 = vrot.lane.b32.xlu0 %v848, 1
        %v874 = vpop.permute.xlu0 %873
        %875 = vrot.lane.b32.xlu0 %v851, 1
        %v876 = vpop.permute.xlu0 %875
        %v879 = vadd.f32 %v869, %v874
        %v880 = vadd.f32 %v870, %v876
        %vm881 = vcmask 7168
        %882 = vst.msk [vmem:[#allocation2] sm:$0xff] %vm881, %v879
        %883 = vst.msk [vmem:[#allocation2 + $0x8] sm:$0xff] %vm881, %v880
        %v884 = vld [vmem:[#allocation3] sm:$0xff]
        %v885 = vld [vmem:[#allocation3 + $0x8] sm:$0xff]
        %v886 = vadd.f32 %v884, %v874
        %v887 = vadd.f32 %v885, %v876
        %888 = vst.msk [vmem:[#allocation3] sm:$0xff] %vm866, %v886
        %889 = vst.msk [vmem:[#allocation3 + $0x8] sm:$0xff] %vm866, %v887
        %v890 = vld [vmem:[#allocation2] sm:$0xff]
        %v891 = vld [vmem:[#allocation2 + $0x8] sm:$0xff]
        %v892 = vmax.f32 %v890, 0.0
        %v893 = vmax.f32 %v891, 0.0
        %v894 = vpack.c.bf16 %v893, %v892
        %v896 = vunpack.c.l.b16 %v894
        %v897 = vunpack.c.h.b16 %v894
        %v898 = vpack.c.b16 %v896, %v896
        %v899 = vpack.c.b16 %v897, %v897
        %902 = vst [vmem:[#allocation4] sm:$0xf] %v898
        %903 = vst [vmem:[#allocation4 + $0x4] sm:$0xf] %v899
        %v904 = vld [vmem:[#allocation3] sm:$0xff]
        %v905 = vld [vmem:[#allocation3 + $0x8] sm:$0xff]
        %v906 = vmax.f32 %v904, 0.0
        %v907 = vmax.f32 %v905, 0.0
        %v908 = vsel %vm384, 0.0, %v906
        %v909 = vsel %vm384, 0.0, %v907
        %v910 = vpack.c.bf16 %v909, %v908
        %v912 = vunpack.c.l.b16 %v910
        %v913 = vunpack.c.h.b16 %v910
        %v914 = vpack.c.b16 %v912, %v912
        %v915 = vpack.c.b16 %v913, %v913
        %918 = vst [vmem:[#allocation5] sm:$0xf] %v914
        %919 = vst [vmem:[#allocation5 + $0x4] sm:$0xf] %v915
        %v920 = vld [vmem:[%s5] sm:$0xff]
        %v921 = vld [vmem:[%s5 + $0x8] sm:$0xff]
        %s922 = scalar_lea.vmem %s4, 24
        %v923 = vld [vmem:[%s922] sm:$0xf]
        %v924 = vld [vmem:[%s922 + $0x4] sm:$0xf]
        %v925 = vld [vmem:[#allocation4] sm:$0xf]
        %v926 = vld [vmem:[#allocation4 + $0x4] sm:$0xf]
        %928 = vset.pattern.permute.xlu0 0
        %929 = vperm.xlu0 %928, %v920
        %v930 = vpop.permute.xlu0 %929
        %933 = vset.pattern.permute.xlu0 0
        %934 = vperm.xlu0 %933, %v921
        %v935 = vpop.permute.xlu0 %934
        %v939 = vunpack.c.l.b16 %v923
        %v940 = vunpack.c.l.b16 %v924
        %v941 = vpack.c.b16 %v940, %v939
        %v944 = vunpack.c.l.b16 %v925
        %v945 = vunpack.c.l.b16 %v926
        %v946 = vpack.c.b16 %v945, %v944
        %vm948 = vcmask 130048
        %v950 = vsel %vm948, %v941, 0
        %952 = vmatprep.subr.bf16.mxu0 0
        %953 = vmatpush1.bf16.msra.mxu0 0
        %954 = vmatprep.subr.bf16.mxu0 0
        %955 = vmatpush1.bf16.msra.mxu0 0
        %956 = vmatprep.subr.bf16.mxu0 0
        %957 = vmatpush1.bf16.msra.mxu0 0
        %958 = vmatprep.subr.bf16.mxu0 0
        %959 = vmatpush1.bf16.msra.mxu0 0
        %960 = vmatprep.subr.bf16.mxu0 0
        %961 = vmatpush1.bf16.msra.mxu0 0
        %962 = vmatprep.subr.bf16.mxu0 0
        %963 = vmatpush1.bf16.msra.mxu0 0
        %964 = vmatprep.subr.bf16.mxu0 0
        %965 = vmatpush1.bf16.msra.mxu0 0
        %966 = vmatprep.subr.bf16.mxu0 0
        %967 = vmatpush1.bf16.msra.mxu0 %v946
        %968 = vmatprep.subr.bf16.mxu0 0
        %969 = vmatpush2.bf16.msra.mxu0 0
        %970 = vmatprep.subr.bf16.mxu0 0
        %971 = vmatpush2.bf16.msra.mxu0 0
        %972 = vmatprep.subr.bf16.mxu0 0
        %973 = vmatpush2.bf16.msra.mxu0 0
        %974 = vmatprep.subr.bf16.mxu0 0
        %975 = vmatpush2.bf16.msra.mxu0 0
        %976 = vmatprep.subr.bf16.mxu0 0
        %977 = vmatpush2.bf16.msra.mxu0 0
        %978 = vmatprep.subr.bf16.mxu0 0
        %979 = vmatpush2.bf16.msra.mxu0 0
        %980 = vmatprep.subr.bf16.mxu0 0
        %981 = vmatpush2.bf16.msra.mxu0 0
        %982 = vmatprep.subr.bf16.mxu0 0
        %983 = vmatpush2.bf16.msra.mxu0 0
        %984 = vmatprep.mubr.bf16.mxu0 0
        %985 = vmatmul.mubr.bf16.gmra.mxu0 %v950
        %v986 = vpop.f32.mrf.mxu0
        %v987 = vadd.f32 %v930, %v986
        %v988 = vpop.f32.mrf.mxu0
        %v989 = vpop.f32.mrf.mxu0
        %v990 = vadd.f32 %v935, %v989
        %v991 = vpop.f32.mrf.mxu0
        %992 = vdwg.mxu0
        %993 = vst [vmem:[#allocation6] sm:$0xff] %v987
        %994 = vst [vmem:[#allocation6 + $0x8] sm:$0xff] %v990
        %v995 = vld [vmem:[%s4] sm:$0xf]
        %v996 = vld [vmem:[%s4 + $0x4] sm:$0xf]
        %v997 = vld [vmem:[#allocation4] sm:$0xf]
        %v998 = vld [vmem:[#allocation4 + $0x4] sm:$0xf]
        %v1001 = vunpack.c.l.b16 %v995
        %v1002 = vunpack.c.l.b16 %v996
        %v1003 = vpack.c.b16 %v1002, %v1001
        %v1006 = vunpack.c.l.b16 %v997
        %v1007 = vunpack.c.l.b16 %v998
        %v1008 = vpack.c.b16 %v1007, %v1006
        %v1011 = vsel %vm948, %v1003, 0
        %1013 = vmatprep.subr.bf16.mxu0 0
        %1014 = vmatpush1.bf16.msra.mxu0 0
        %1015 = vmatprep.subr.bf16.mxu0 0
        %1016 = vmatpush1.bf16.msra.mxu0 0
        %1017 = vmatprep.subr.bf16.mxu0 0
        %1018 = vmatpush1.bf16.msra.mxu0 0
        %1019 = vmatprep.subr.bf16.mxu0 0
        %1020 = vmatpush1.bf16.msra.mxu0 0
        %1021 = vmatprep.subr.bf16.mxu0 0
        %1022 = vmatpush1.bf16.msra.mxu0 0
        %1023 = vmatprep.subr.bf16.mxu0 0
        %1024 = vmatpush1.bf16.msra.mxu0 0
        %1025 = vmatprep.subr.bf16.mxu0 0
        %1026 = vmatpush1.bf16.msra.mxu0 0
        %1027 = vmatprep.subr.bf16.mxu0 0
        %1028 = vmatpush1.bf16.msra.mxu0 %v1008
        %1029 = vmatprep.subr.bf16.mxu0 0
        %1030 = vmatpush2.bf16.msra.mxu0 0
        %1031 = vmatprep.subr.bf16.mxu0 0
        %1032 = vmatpush2.bf16.msra.mxu0 0
        %1033 = vmatprep.subr.bf16.mxu0 0
        %1034 = vmatpush2.bf16.msra.mxu0 0
        %1035 = vmatprep.subr.bf16.mxu0 0
        %1036 = vmatpush2.bf16.msra.mxu0 0
        %1037 = vmatprep.subr.bf16.mxu0 0
        %1038 = vmatpush2.bf16.msra.mxu0 0
        %1039 = vmatprep.subr.bf16.mxu0 0
        %1040 = vmatpush2.bf16.msra.mxu0 0
        %1041 = vmatprep.subr.bf16.mxu0 0
        %1042 = vmatpush2.bf16.msra.mxu0 0
        %1043 = vmatprep.subr.bf16.mxu0 0
        %1044 = vmatpush2.bf16.msra.mxu0 0
        %1045 = vmatprep.mubr.bf16.mxu0 0
        %1046 = vmatmul.mubr.bf16.gmra.mxu0 %v1011
        %v1047 = vpop.f32.mrf.mxu0
        %v1048 = vadd.f32 0.0, %v1047
        %v1049 = vpop.f32.mrf.mxu0
        %v1050 = vpop.f32.mrf.mxu0
        %v1051 = vadd.f32 0.0, %v1050
        %v1052 = vpop.f32.mrf.mxu0
        %1053 = vdwg.mxu0
        %v1054 = vld [vmem:[#allocation5] sm:$0xf]
        %v1055 = vld [vmem:[#allocation5 + $0x4] sm:$0xf]
        %v1058 = vunpack.c.l.b16 %v1054
        %v1059 = vunpack.c.l.b16 %v1055
        %v1060 = vpack.c.b16 %v1059, %v1058
        %1062 = vmatprep.subr.bf16.mxu0 0
        %1063 = vmatpush1.bf16.msra.mxu0 0
        %1064 = vmatprep.subr.bf16.mxu0 0
        %1065 = vmatpush1.bf16.msra.mxu0 0
        %1066 = vmatprep.subr.bf16.mxu0 0
        %1067 = vmatpush1.bf16.msra.mxu0 0
        %1068 = vmatprep.subr.bf16.mxu0 0
        %1069 = vmatpush1.bf16.msra.mxu0 0
        %1070 = vmatprep.subr.bf16.mxu0 0
        %1071 = vmatpush1.bf16.msra.mxu0 0
        %1072 = vmatprep.subr.bf16.mxu0 0
        %1073 = vmatpush1.bf16.msra.mxu0 0
        %1074 = vmatprep.subr.bf16.mxu0 0
        %1075 = vmatpush1.bf16.msra.mxu0 0
        %1076 = vmatprep.subr.bf16.mxu0 0
        %1077 = vmatpush1.bf16.msra.mxu0 %v1060
        %1078 = vmatprep.subr.bf16.mxu0 0
        %1079 = vmatpush2.bf16.msra.mxu0 0
        %1080 = vmatprep.subr.bf16.mxu0 0
        %1081 = vmatpush2.bf16.msra.mxu0 0
        %1082 = vmatprep.subr.bf16.mxu0 0
        %1083 = vmatpush2.bf16.msra.mxu0 0
        %1084 = vmatprep.subr.bf16.mxu0 0
        %1085 = vmatpush2.bf16.msra.mxu0 0
        %1086 = vmatprep.subr.bf16.mxu0 0
        %1087 = vmatpush2.bf16.msra.mxu0 0
        %1088 = vmatprep.subr.bf16.mxu0 0
        %1089 = vmatpush2.bf16.msra.mxu0 0
        %1090 = vmatprep.subr.bf16.mxu0 0
        %1091 = vmatpush2.bf16.msra.mxu0 0
        %1092 = vmatprep.subr.bf16.mxu0 0
        %1093 = vmatpush2.bf16.msra.mxu0 0
        %1094 = vmatprep.mubr.bf16.mxu0 0
        %1095 = vmatmul.mubr.bf16.gmra.mxu0 %v1011
        %v1096 = vpop.f32.mrf.mxu0
        %v1097 = vadd.f32 0.0, %v1096
        %v1098 = vpop.f32.mrf.mxu0
        %v1099 = vpop.f32.mrf.mxu0
        %v1100 = vadd.f32 0.0, %v1099
        %v1101 = vpop.f32.mrf.mxu0
        %1102 = vdwg.mxu0
        %v1103 = vld [vmem:[#allocation6] sm:$0xff]
        %v1104 = vld [vmem:[#allocation6 + $0x8] sm:$0xff]
        %1107 = vrot.lane.b32.xlu0 %v1048, 3
        %v1108 = vpop.permute.xlu0 %1107
        %1109 = vrot.lane.b32.xlu0 %v1051, 3
        %v1110 = vpop.permute.xlu0 %1109
        %v1113 = vadd.f32 %v1103, %v1108
        %v1114 = vadd.f32 %v1104, %v1110
        %1115 = vst.msk [vmem:[#allocation6] sm:$0xff] %vm608, %v1113
        %1116 = vst.msk [vmem:[#allocation6 + $0x8] sm:$0xff] %vm608, %v1114
        %v1117 = vld [vmem:[#allocation6] sm:$0xff]
        %v1118 = vld [vmem:[#allocation6 + $0x8] sm:$0xff]
        %1121 = vrot.lane.b32.xlu0 %v1097, 3
        %v1122 = vpop.permute.xlu0 %1121
        %1123 = vrot.lane.b32.xlu0 %v1100, 3
        %v1124 = vpop.permute.xlu0 %1123
        %v1127 = vadd.f32 %v1117, %v1122
        %v1128 = vadd.f32 %v1118, %v1124
        %1129 = vst.msk [vmem:[#allocation6] sm:$0xff] %vm623, %v1127
        %1130 = vst.msk [vmem:[#allocation6 + $0x8] sm:$0xff] %vm623, %v1128
        %s1131 = scalar_lea.vmem %s4, 8
        %v1132 = vld [vmem:[%s1131] sm:$0xf]
        %v1133 = vld [vmem:[%s1131 + $0x4] sm:$0xf]
        %v1134 = vld [vmem:[#allocation4] sm:$0xf]
        %v1135 = vld [vmem:[#allocation4 + $0x4] sm:$0xf]
        %v1138 = vunpack.c.l.b16 %v1132
        %v1139 = vunpack.c.l.b16 %v1133
        %v1140 = vpack.c.b16 %v1139, %v1138
        %v1143 = vunpack.c.l.b16 %v1134
        %v1144 = vunpack.c.l.b16 %v1135
        %v1145 = vpack.c.b16 %v1144, %v1143
        %v1148 = vsel %vm948, %v1140, 0
        %1150 = vmatprep.subr.bf16.mxu0 0
        %1151 = vmatpush1.bf16.msra.mxu0 0
        %1152 = vmatprep.subr.bf16.mxu0 0
        %1153 = vmatpush1.bf16.msra.mxu0 0
        %1154 = vmatprep.subr.bf16.mxu0 0
        %1155 = vmatpush1.bf16.msra.mxu0 0
        %1156 = vmatprep.subr.bf16.mxu0 0
        %1157 = vmatpush1.bf16.msra.mxu0 0
        %1158 = vmatprep.subr.bf16.mxu0 0
        %1159 = vmatpush1.bf16.msra.mxu0 0
        %1160 = vmatprep.subr.bf16.mxu0 0
        %1161 = vmatpush1.bf16.msra.mxu0 0
        %1162 = vmatprep.subr.bf16.mxu0 0
        %1163 = vmatpush1.bf16.msra.mxu0 0
        %1164 = vmatprep.subr.bf16.mxu0 0
        %1165 = vmatpush1.bf16.msra.mxu0 %v1145
        %1166 = vmatprep.subr.bf16.mxu0 0
        %1167 = vmatpush2.bf16.msra.mxu0 0
        %1168 = vmatprep.subr.bf16.mxu0 0
        %1169 = vmatpush2.bf16.msra.mxu0 0
        %1170 = vmatprep.subr.bf16.mxu0 0
        %1171 = vmatpush2.bf16.msra.mxu0 0
        %1172 = vmatprep.subr.bf16.mxu0 0
        %1173 = vmatpush2.bf16.msra.mxu0 0
        %1174 = vmatprep.subr.bf16.mxu0 0
        %1175 = vmatpush2.bf16.msra.mxu0 0
        %1176 = vmatprep.subr.bf16.mxu0 0
        %1177 = vmatpush2.bf16.msra.mxu0 0
        %1178 = vmatprep.subr.bf16.mxu0 0
        %1179 = vmatpush2.bf16.msra.mxu0 0
        %1180 = vmatprep.subr.bf16.mxu0 0
        %1181 = vmatpush2.bf16.msra.mxu0 0
        %1182 = vmatprep.mubr.bf16.mxu0 0
        %1183 = vmatmul.mubr.bf16.gmra.mxu0 %v1148
        %v1184 = vpop.f32.mrf.mxu0
        %v1185 = vadd.f32 0.0, %v1184
        %v1186 = vpop.f32.mrf.mxu0
        %v1187 = vpop.f32.mrf.mxu0
        %v1188 = vadd.f32 0.0, %v1187
        %v1189 = vpop.f32.mrf.mxu0
        %1190 = vdwg.mxu0
        %v1191 = vld [vmem:[#allocation5] sm:$0xf]
        %v1192 = vld [vmem:[#allocation5 + $0x4] sm:$0xf]
        %v1195 = vunpack.c.l.b16 %v1191
        %v1196 = vunpack.c.l.b16 %v1192
        %v1197 = vpack.c.b16 %v1196, %v1195
        %1199 = vmatprep.subr.bf16.mxu0 0
        %1200 = vmatpush1.bf16.msra.mxu0 0
        %1201 = vmatprep.subr.bf16.mxu0 0
        %1202 = vmatpush1.bf16.msra.mxu0 0
        %1203 = vmatprep.subr.bf16.mxu0 0
        %1204 = vmatpush1.bf16.msra.mxu0 0
        %1205 = vmatprep.subr.bf16.mxu0 0
        %1206 = vmatpush1.bf16.msra.mxu0 0
        %1207 = vmatprep.subr.bf16.mxu0 0
        %1208 = vmatpush1.bf16.msra.mxu0 0
        %1209 = vmatprep.subr.bf16.mxu0 0
        %1210 = vmatpush1.bf16.msra.mxu0 0
        %1211 = vmatprep.subr.bf16.mxu0 0
        %1212 = vmatpush1.bf16.msra.mxu0 0
        %1213 = vmatprep.subr.bf16.mxu0 0
        %1214 = vmatpush1.bf16.msra.mxu0 %v1197
        %1215 = vmatprep.subr.bf16.mxu0 0
        %1216 = vmatpush2.bf16.msra.mxu0 0
        %1217 = vmatprep.subr.bf16.mxu0 0
        %1218 = vmatpush2.bf16.msra.mxu0 0
        %1219 = vmatprep.subr.bf16.mxu0 0
        %1220 = vmatpush2.bf16.msra.mxu0 0
        %1221 = vmatprep.subr.bf16.mxu0 0
        %1222 = vmatpush2.bf16.msra.mxu0 0
        %1223 = vmatprep.subr.bf16.mxu0 0
        %1224 = vmatpush2.bf16.msra.mxu0 0
        %1225 = vmatprep.subr.bf16.mxu0 0
        %1226 = vmatpush2.bf16.msra.mxu0 0
        %1227 = vmatprep.subr.bf16.mxu0 0
        %1228 = vmatpush2.bf16.msra.mxu0 0
        %1229 = vmatprep.subr.bf16.mxu0 0
        %1230 = vmatpush2.bf16.msra.mxu0 0
        %1231 = vmatprep.mubr.bf16.mxu0 0
        %1232 = vmatmul.mubr.bf16.gmra.mxu0 %v1148
        %v1233 = vpop.f32.mrf.mxu0
        %v1234 = vadd.f32 0.0, %v1233
        %v1235 = vpop.f32.mrf.mxu0
        %v1236 = vpop.f32.mrf.mxu0
        %v1237 = vadd.f32 0.0, %v1236
        %v1238 = vpop.f32.mrf.mxu0
        %1239 = vdwg.mxu0
        %v1240 = vld [vmem:[#allocation6] sm:$0xff]
        %v1241 = vld [vmem:[#allocation6 + $0x8] sm:$0xff]
        %1244 = vrot.lane.b32.xlu0 %v1185, 2
        %v1245 = vpop.permute.xlu0 %1244
        %1246 = vrot.lane.b32.xlu0 %v1188, 2
        %v1247 = vpop.permute.xlu0 %1246
        %v1250 = vadd.f32 %v1240, %v1245
        %v1251 = vadd.f32 %v1241, %v1247
        %1252 = vst.msk [vmem:[#allocation6] sm:$0xff] %vm737, %v1250
        %1253 = vst.msk [vmem:[#allocation6 + $0x8] sm:$0xff] %vm737, %v1251
        %v1254 = vld [vmem:[#allocation6] sm:$0xff]
        %v1255 = vld [vmem:[#allocation6 + $0x8] sm:$0xff]
        %1258 = vrot.lane.b32.xlu0 %v1234, 2
        %v1259 = vpop.permute.xlu0 %1258
        %1260 = vrot.lane.b32.xlu0 %v1237, 2
        %v1261 = vpop.permute.xlu0 %1260
        %v1264 = vadd.f32 %v1254, %v1259
        %v1265 = vadd.f32 %v1255, %v1261
        %1266 = vst.msk [vmem:[#allocation6] sm:$0xff] %vm752, %v1264
        %1267 = vst.msk [vmem:[#allocation6 + $0x8] sm:$0xff] %vm752, %v1265
        %s1268 = scalar_lea.vmem %s4, 16
        %v1269 = vld [vmem:[%s1268] sm:$0xf]
        %v1270 = vld [vmem:[%s1268 + $0x4] sm:$0xf]
        %v1271 = vld [vmem:[#allocation4] sm:$0xf]
        %v1272 = vld [vmem:[#allocation4 + $0x4] sm:$0xf]
        %v1275 = vunpack.c.l.b16 %v1269
        %v1276 = vunpack.c.l.b16 %v1270
        %v1277 = vpack.c.b16 %v1276, %v1275
        %v1280 = vunpack.c.l.b16 %v1271
        %v1281 = vunpack.c.l.b16 %v1272
        %v1282 = vpack.c.b16 %v1281, %v1280
        %v1285 = vsel %vm948, %v1277, 0
        %1287 = vmatprep.subr.bf16.mxu0 0
        %1288 = vmatpush1.bf16.msra.mxu0 0
        %1289 = vmatprep.subr.bf16.mxu0 0
        %1290 = vmatpush1.bf16.msra.mxu0 0
        %1291 = vmatprep.subr.bf16.mxu0 0
        %1292 = vmatpush1.bf16.msra.mxu0 0
        %1293 = vmatprep.subr.bf16.mxu0 0
        %1294 = vmatpush1.bf16.msra.mxu0 0
        %1295 = vmatprep.subr.bf16.mxu0 0
        %1296 = vmatpush1.bf16.msra.mxu0 0
        %1297 = vmatprep.subr.bf16.mxu0 0
        %1298 = vmatpush1.bf16.msra.mxu0 0
        %1299 = vmatprep.subr.bf16.mxu0 0
        %1300 = vmatpush1.bf16.msra.mxu0 0
        %1301 = vmatprep.subr.bf16.mxu0 0
        %1302 = vmatpush1.bf16.msra.mxu0 %v1282
        %1303 = vmatprep.subr.bf16.mxu0 0
        %1304 = vmatpush2.bf16.msra.mxu0 0
        %1305 = vmatprep.subr.bf16.mxu0 0
        %1306 = vmatpush2.bf16.msra.mxu0 0
        %1307 = vmatprep.subr.bf16.mxu0 0
        %1308 = vmatpush2.bf16.msra.mxu0 0
        %1309 = vmatprep.subr.bf16.mxu0 0
        %1310 = vmatpush2.bf16.msra.mxu0 0
        %1311 = vmatprep.subr.bf16.mxu0 0
        %1312 = vmatpush2.bf16.msra.mxu0 0
        %1313 = vmatprep.subr.bf16.mxu0 0
        %1314 = vmatpush2.bf16.msra.mxu0 0
        %1315 = vmatprep.subr.bf16.mxu0 0
        %1316 = vmatpush2.bf16.msra.mxu0 0
        %1317 = vmatprep.subr.bf16.mxu0 0
        %1318 = vmatpush2.bf16.msra.mxu0 0
        %1319 = vmatprep.mubr.bf16.mxu0 0
        %1320 = vmatmul.mubr.bf16.gmra.mxu0 %v1285
        %v1321 = vpop.f32.mrf.mxu0
        %v1322 = vadd.f32 0.0, %v1321
        %v1323 = vpop.f32.mrf.mxu0
        %v1324 = vpop.f32.mrf.mxu0
        %v1325 = vadd.f32 0.0, %v1324
        %v1326 = vpop.f32.mrf.mxu0
        %1327 = vdwg.mxu0
        %v1328 = vld [vmem:[#allocation5] sm:$0xf]
        %v1329 = vld [vmem:[#allocation5 + $0x4] sm:$0xf]
        %v1332 = vunpack.c.l.b16 %v1328
        %v1333 = vunpack.c.l.b16 %v1329
        %v1334 = vpack.c.b16 %v1333, %v1332
        %1336 = vmatprep.subr.bf16.mxu0 0
        %1337 = vmatpush1.bf16.msra.mxu0 0
        %1338 = vmatprep.subr.bf16.mxu0 0
        %1339 = vmatpush1.bf16.msra.mxu0 0
        %1340 = vmatprep.subr.bf16.mxu0 0
        %1341 = vmatpush1.bf16.msra.mxu0 0
        %1342 = vmatprep.subr.bf16.mxu0 0
        %1343 = vmatpush1.bf16.msra.mxu0 0
        %1344 = vmatprep.subr.bf16.mxu0 0
        %1345 = vmatpush1.bf16.msra.mxu0 0
        %1346 = vmatprep.subr.bf16.mxu0 0
        %1347 = vmatpush1.bf16.msra.mxu0 0
        %1348 = vmatprep.subr.bf16.mxu0 0
        %1349 = vmatpush1.bf16.msra.mxu0 0
        %1350 = vmatprep.subr.bf16.mxu0 0
        %1351 = vmatpush1.bf16.msra.mxu0 %v1334
        %1352 = vmatprep.subr.bf16.mxu0 0
        %1353 = vmatpush2.bf16.msra.mxu0 0
        %1354 = vmatprep.subr.bf16.mxu0 0
        %1355 = vmatpush2.bf16.msra.mxu0 0
        %1356 = vmatprep.subr.bf16.mxu0 0
        %1357 = vmatpush2.bf16.msra.mxu0 0
        %1358 = vmatprep.subr.bf16.mxu0 0
        %1359 = vmatpush2.bf16.msra.mxu0 0
        %1360 = vmatprep.subr.bf16.mxu0 0
        %1361 = vmatpush2.bf16.msra.mxu0 0
        %1362 = vmatprep.subr.bf16.mxu0 0
        %1363 = vmatpush2.bf16.msra.mxu0 0
        %1364 = vmatprep.subr.bf16.mxu0 0
        %1365 = vmatpush2.bf16.msra.mxu0 0
        %1366 = vmatprep.subr.bf16.mxu0 0
        %1367 = vmatpush2.bf16.msra.mxu0 0
        %1368 = vmatprep.mubr.bf16.mxu0 0
        %1369 = vmatmul.mubr.bf16.gmra.mxu0 %v1285
        %v1370 = vpop.f32.mrf.mxu0
        %v1371 = vadd.f32 0.0, %v1370
        %v1372 = vpop.f32.mrf.mxu0
        %v1373 = vpop.f32.mrf.mxu0
        %v1374 = vadd.f32 0.0, %v1373
        %v1375 = vpop.f32.mrf.mxu0
        %1376 = vdwg.mxu0
        %v1377 = vld [vmem:[#allocation6] sm:$0xff]
        %v1378 = vld [vmem:[#allocation6 + $0x8] sm:$0xff]
        %1381 = vrot.lane.b32.xlu0 %v1322, 1
        %v1382 = vpop.permute.xlu0 %1381
        %1383 = vrot.lane.b32.xlu0 %v1325, 1
        %v1384 = vpop.permute.xlu0 %1383
        %v1387 = vadd.f32 %v1377, %v1382
        %v1388 = vadd.f32 %v1378, %v1384
        %1389 = vst.msk [vmem:[#allocation6] sm:$0xff] %vm866, %v1387
        %1390 = vst.msk [vmem:[#allocation6 + $0x8] sm:$0xff] %vm866, %v1388
        %v1391 = vld [vmem:[#allocation6] sm:$0xff]
        %v1392 = vld [vmem:[#allocation6 + $0x8] sm:$0xff]
        %1395 = vrot.lane.b32.xlu0 %v1371, 1
        %v1396 = vpop.permute.xlu0 %1395
        %1397 = vrot.lane.b32.xlu0 %v1374, 1
        %v1398 = vpop.permute.xlu0 %1397
        %v1401 = vadd.f32 %v1391, %v1396
        %v1402 = vadd.f32 %v1392, %v1398
        %1403 = vst.msk [vmem:[#allocation6] sm:$0xff] %vm881, %v1401
        %1404 = vst.msk [vmem:[#allocation6 + $0x8] sm:$0xff] %vm881, %v1402
        %v1405 = vld [vmem:[#allocation6] sm:$0xff]
        %v1406 = vld [vmem:[#allocation6 + $0x8] sm:$0xff]
        %v1407 = vmax.f32 %v1405, 0.0
        %v1408 = vmax.f32 %v1406, 0.0
        %v1409 = vld [vmem:[%s6] sm:$0xf]
        %v1410 = vld [vmem:[%s6 + $0x4] sm:$0xf]
        %v1411 = vld [vmem:[%s7] sm:$0xff]
        %v1412 = vld [vmem:[%s7 + $0x8] sm:$0xff]
        %1414 = vset.pattern.permute.xlu0 0
        %1415 = vperm.xlu0 %1414, %v1411
        %v1416 = vpop.permute.xlu0 %1415
        %1419 = vset.pattern.permute.xlu0 0
        %1420 = vperm.xlu0 %1419, %v1412
        %v1421 = vpop.permute.xlu0 %1420
        %v1425 = vunpack.c.l.b16 %v1409
        %v1426 = vunpack.c.l.b16 %v1410
        %v1427 = vpack.c.b16 %v1426, %v1425
        %v1429 = vsel %vm407, %v1427, 0
        %1431 = vmatprep.subr.bf16.mxu0 0
        %1432 = vmatpush1.bf16.msra.mxu0 0
        %1433 = vmatprep.subr.bf16.mxu0 0
        %1434 = vmatpush1.bf16.msra.mxu0 0
        %1435 = vmatprep.subr.bf16.mxu0 0
        %1436 = vmatpush1.bf16.msra.mxu0 0
        %1437 = vmatprep.subr.bf16.mxu0 0
        %1438 = vmatpush1.bf16.msra.mxu0 0
        %1439 = vmatprep.subr.bf16.mxu0 0
        %1440 = vmatpush1.bf16.msra.mxu0 0
        %1441 = vmatprep.subr.bf16.mxu0 0
        %1442 = vmatpush1.bf16.msra.mxu0 0
        %1443 = vmatprep.subr.bf16.mxu0 0
        %1444 = vmatpush1.bf16.msra.mxu0 0
        %1445 = vmatprep.subr.bf16.mxu0 0
        %1446 = vmatpush1.bf16.msra.mxu0 %v413
        %1447 = vmatprep.subr.bf16.mxu0 0
        %1448 = vmatpush2.bf16.msra.mxu0 0
        %1449 = vmatprep.subr.bf16.mxu0 0
        %1450 = vmatpush2.bf16.msra.mxu0 0
        %1451 = vmatprep.subr.bf16.mxu0 0
        %1452 = vmatpush2.bf16.msra.mxu0 0
        %1453 = vmatprep.subr.bf16.mxu0 0
        %1454 = vmatpush2.bf16.msra.mxu0 0
        %1455 = vmatprep.subr.bf16.mxu0 0
        %1456 = vmatpush2.bf16.msra.mxu0 0
        %1457 = vmatprep.subr.bf16.mxu0 0
        %1458 = vmatpush2.bf16.msra.mxu0 0
        %1459 = vmatprep.subr.bf16.mxu0 0
        %1460 = vmatpush2.bf16.msra.mxu0 0
        %1461 = vmatprep.subr.bf16.mxu0 0
        %1462 = vmatpush2.bf16.msra.mxu0 0
        %1463 = vmatprep.mubr.bf16.mxu0 0
        %1464 = vmatmul.mubr.bf16.gmra.mxu0 %v1429
        %v1465 = vpop.f32.mrf.mxu0
        %v1466 = vadd.f32 %v1416, %v1465
        %v1467 = vpop.f32.mrf.mxu0
        %v1468 = vpop.f32.mrf.mxu0
        %v1469 = vadd.f32 %v1421, %v1468
        %v1470 = vpop.f32.mrf.mxu0
        %1471 = vdwg.mxu0
        %v1472 = vadd.f32 %v1407, %v1466
        %v1473 = vadd.f32 %v1408, %v1469
        %v1474 = vmax.f32 %v1472, 0.0
        %v1475 = vmax.f32 %v1473, 0.0
        %1476 = vst [vmem:[%s354] sm:$0xff] %v1474
        %1477 = vst [vmem:[%s354 + $0x8] sm:$0xff] %v1475
        %s1478 = sand.u32 %s229, 1
        %s1479 = sand.u32 %s229, 1
        %s1480 = smul.addr %s1479, 16
        %s1481 = scalar_lea.vmem [#allocation7], %s1480
        // Predicated region
        $region53: #{tcn_forward.2} parent=51 // pred_check
          %p1482 = pneg %p239
        $region54: #{tcn_forward.2} parent=51 // pred_check_branch
          %1484 = sbr.rel (%p1482) target = $region56
        $region55: #{tcn_forward.2} parent=51 // pred_region
          %s1485 = smul.addr %s23, 4
          %s1486 = sadd.s32 %s24, %s1485
          %s1487 = smul.addr %s1486, 8
          %s1488 = scalar_lea.vmem %s8, %s1487
          // Predicated region
          $region57: #{tcn_forward.2} parent=55 // pred_check
            _
          $region58: #{tcn_forward.2} parent=55 // pred_check_branch
            %1490 = sbr.rel (0) target = $region60
          $region59: #{tcn_forward.2} parent=55 // pred_region
            // Predicated region
            $region61: #{tcn_forward.2} parent=59 // pred_check
              _
            $region62: #{tcn_forward.2} parent=59 // pred_check_branch
              %1492 = sbr.rel (0) target = $region64
            $region63: #{tcn_forward.2} parent=59 // pred_region
              // Predicated region
              $region76: #{tcn_forward.2} parent=63 // pred_check
                _
              $region77: #{tcn_forward.2} parent=63 // pred_check_branch
                %1510 = sbr.rel (0) target = $region79
              $region78: #{tcn_forward.2} parent=63 // pred_region
                loop: start=0, step=1, limit=1
                $region80: #{tcn_forward.2} parent=78 // loop_pre_header
                  _
                $region81: #{tcn_forward.2} parent=78 // loop_header
                  %s1512 = sphi 0, %s1516
                  %p1513 = scmp.ge.s32.totalorder %s1512, 1
                  %s1517 = sphi %s1481, %s1481
                  %s1518 = sphi %s1488, %s1488
                $region82: #{tcn_forward.2} parent=78 // loop_header_branch
                  %1515 = sbr.rel (%p1513) target = $region86
                $region83: #{tcn_forward.2} parent=78 // loop_body
                  %v1519 = vld [vmem:[%s1517] sm:$0xff]
                  %1520 = vst [vmem:[%s1518] sm:$0xff] %v1519
                  %v1521 = vld [vmem:[%s1517 + $0x8] sm:$0xff]
                  %1522 = vst [vmem:[%s1518 + $0x10] sm:$0xff] %v1521
                $region84: #{tcn_forward.2} parent=78 // loop_footer
                  %s1516 = sadd.s32 1, %s1512
                $region85: #{tcn_forward.2} parent=78 // loop_footer_branch
                  %1511 = sbr.rel target = $region81
                $region86: #{tcn_forward.2} parent=78 // loop_exit
                  _
              $region79: #{tcn_forward.2} parent=63 // pred_fallthru
                _
              // Predicated region
              $region87: #{tcn_forward.2} parent=63 // pred_check
                _
              $region88: #{tcn_forward.2} parent=63 // pred_check_branch
                %1524 = sbr.rel target = $region90
              $region89: #{tcn_forward.2} parent=63 // pred_region
                _
              $region90: #{tcn_forward.2} parent=63 // pred_fallthru
                _
            $region64: #{tcn_forward.2} parent=59 // pred_fallthru
              _
            // Predicated region
            $region65: #{tcn_forward.2} parent=59 // pred_check
              _
            $region66: #{tcn_forward.2} parent=59 // pred_check_branch
              %1494 = sbr.rel target = $region68
            $region67: #{tcn_forward.2} parent=59 // pred_region
              %s1496 = ssub.s32 256, 1
              loop: start=0, step=1, limit=1
              $region69: #{tcn_forward.2} parent=67 // loop_pre_header
                _
              $region70: #{tcn_forward.2} parent=67 // loop_header
                %s1498 = sphi 0, %s1502
                %p1499 = scmp.ge.s32.totalorder %s1498, 1
                %s1503 = sphi %s1481, %s1481
                %s1504 = sphi %s1488, %s1488
              $region71: #{tcn_forward.2} parent=67 // loop_header_branch
                %1501 = sbr.rel (%p1499) target = $region75
              $region72: #{tcn_forward.2} parent=67 // loop_body
                %v1505 = vld [vmem:[%s1503] sm:%s1496]
                %1506 = vst [vmem:[%s1504] sm:%s1496] %v1505
                %v1507 = vld [vmem:[%s1503 + $0x8] sm:%s1496]
                %1508 = vst [vmem:[%s1504 + $0x10] sm:%s1496] %v1507
              $region73: #{tcn_forward.2} parent=67 // loop_footer
                %s1502 = sadd.s32 1, %s1498
              $region74: #{tcn_forward.2} parent=67 // loop_footer_branch
                %1497 = sbr.rel target = $region70
              $region75: #{tcn_forward.2} parent=67 // loop_exit
                _
            $region68: #{tcn_forward.2} parent=59 // pred_fallthru
              _
          $region60: #{tcn_forward.2} parent=55 // pred_fallthru
            _
          %1525 = vnop
        $region56: #{tcn_forward.2} parent=51 // pred_fallthru
          _
      $region52: #{tcn_forward.2} parent=5 // pred_fallthru
        _
      %p1526 = scmp.le.s32.totalorder 2, %s14
      // Predicated region
      $region91: #{tcn_forward.2} parent=5 // pred_check
        %p1527 = pneg %p1526
      $region92: #{tcn_forward.2} parent=5 // pred_check_branch
        %1529 = sbr.rel (%p1527) target = $region94
      $region93: #{tcn_forward.2} parent=5 // pred_region
        %s1530 = ssub.s32 %s14, 2
        // Predicated region
        $region95: #{tcn_forward.2} parent=93 // pred_check
          %p1531 = pneg %p245
        $region96: #{tcn_forward.2} parent=93 // pred_check_branch
          %1533 = sbr.rel (%p1531) target = $region98
        $region97: #{tcn_forward.2} parent=93 // pred_region
          %s1534 = sand.u32 %s230, 1
          %s1535 = sand.u32 %s230, 1
          %s1536 = smul.addr %s1535, 16
          %s1537 = scalar_lea.vmem [#allocation7], %s1536
        $region98: #{tcn_forward.2} parent=93 // pred_fallthru
          _
      $region94: #{tcn_forward.2} parent=5 // pred_fallthru
        _
    $region6: #{tcn_forward.2} parent=1 // loop_footer
      %s18 = sadd.s32 1, %s14
    $region7: #{tcn_forward.2} parent=1 // loop_footer_branch
      %13 = sbr.rel target = $region3
    $region8: #{tcn_forward.2} parent=1 // loop_exit
      _

// kernel: tcn_forward.3
$region0: #{tcn_forward.3}
  #allocation0 [shape = 'u32[]', space=smem, size = 0x4, offset = 0x4, fixed_abs, tag = 'smem constant byte address 0x4 - core index']
  #allocation1 [shape = 'u32[144,128]{1,0:T(1,128)}', space=vmem, size = 0x12000, scoped, tag = 'internal scratch']
  #allocation2 [shape = 'f32[16,128]{1,0:T(8,128)}', space=vmem, size = 0x2000, scoped, tag = 'scratch operand']
  #allocation3 [shape = 'f32[16,128]{1,0:T(8,128)}', space=vmem, size = 0x2000, scoped, tag = 'scratch operand']
  #allocation4 [shape = 'bf16[16,128]{1,0:T(8,128)(2,1)}', space=vmem, size = 0x1000, scoped, tag = 'scratch operand']
  #allocation5 [shape = 'bf16[16,128]{1,0:T(8,128)(2,1)}', space=vmem, size = 0x1000, scoped, tag = 'scratch operand']
  #allocation6 [shape = 'f32[16,128]{1,0:T(8,128)}', space=vmem, size = 0x2000, scoped, tag = 'scratch operand']
  %s0 = inlined_call_operand.vmem [shape: f32[2,16,256], index: 0, kind: input, shape index: {}, may-alias: {0,1}]
  %s1 = inlined_call_operand.vmem [shape: f32[2,16,256], index: 1, kind: input, shape index: {}, may-alias: {0,1}]
  %s2 = inlined_call_operand.vmem [shape: bf16[4,16,16], index: 2, kind: input, shape index: {}]
  %s3 = inlined_call_operand.vmem [shape: f32[16,1], index: 3, kind: input, shape index: {}]
  %s4 = inlined_call_operand.vmem [shape: bf16[4,16,16], index: 4, kind: input, shape index: {}]
  %s5 = inlined_call_operand.vmem [shape: f32[16,1], index: 5, kind: input, shape index: {}]
  %s6 = inlined_call_operand.hbm [shape: f32[2,16,256], index: 6, kind: output, shape index: {}]
  %s7 = sld [smem:[#allocation0]]
  $region133: #{tcn_forward.3} parent=0
    _
  %s9 = ssub.s32 1, %s7
  %s10 = scalar_select 0, %s9, %s7
  $region1: #{tcn_forward.3} parent=0
    #allocation7 [shape = 'u8[16384]{0}', space=vmem, size = 0x4000, scoped, tag = 'input window, operand 0']
    #allocation8 [shape = 'u8[16384]{0}', space=vmem, size = 0x4000, scoped, tag = 'input window, operand 1']
    #allocation9 [shape = 'u8[16384]{0}', space=vmem, size = 0x4000, scoped, tag = 'output window, operand 0']
    #allocation10 [shape = 's32[2]{0}', space=sflag, size = 0x8, scoped, tag = 'scoped memory for tcn_forward.3']
    %11 = vsyncpa [#allocation10], 0
    %s12 = scalar_lea.sflag [#allocation10], 1
    %13 = vsyncpa %s12, 0
    loop: start=0, step=1, limit=6
    $region2: #{tcn_forward.3} parent=1 // loop_pre_header
      _
    $region3: #{tcn_forward.3} parent=1 // loop_header
      %s15 = sphi 0, %s19
      %p16 = scmp.ge.s32.totalorder %s15, 6
      %s22 = sphi 0, %s34
      %s23 = sphi 0, %s30
      %s24 = sphi 0, %s22
      %s25 = sphi 0, %s23
      %s26 = sphi 0, %s24
      %s27 = sphi 0, %s25
      %s39 = sphi 0, %s41
      %s42 = sphi 0, %s39
      %s43 = sphi 0, %s42
      %s59 = sphi 0, %s43
      %s73 = sphi 0, %s75
      %s76 = sphi 0, %s73
      %s77 = sphi 0, %s76
      %s93 = sphi 0, %s77
      %s97 = sphi 0, %s97
      %s99 = sphi 0, %s97
      %s100 = sphi 0, %s99
      %s114 = sphi 0, %s100
      %s118 = sphi 0, %s118
      %s120 = sphi 0, %s118
      %s121 = sphi 0, %s120
      %s135 = sphi 0, %s121
      %s139 = sphi 0, %s139
      %s141 = sphi 0, %s139
      %s142 = sphi 0, %s141
      %s156 = sphi 0, %s142
      %s160 = sphi 0, %s160
      %s162 = sphi 0, %s160
      %s163 = sphi 0, %s162
      %s177 = sphi 0, %s163
      %s185 = sphi 0, %s187
      %s188 = sphi 0, %s185
      %s189 = sphi 0, %s188
      %s205 = sphi 0, %s189
    $region4: #{tcn_forward.3} parent=1 // loop_header_branch
      %18 = sbr.rel (%p16) target = $region8
    $region5: #{tcn_forward.3} parent=1 // loop_body
      %s20 = ssub.s32 %s15, 1
      %s21 = ssub.s32 %s15, 2
      %s28 = sadd.s32 1, %s23
      %p29 = scmp.ge.s32.totalorder %s28, 2
      %s30 = scalar_select %p29, 0, %s28
      %s31 = sadd.s32 1, %s22
      %s32 = scalar_select %p29, %s31, %s22
      %p33 = scmp.ge.s32.totalorder %s32, 2
      %s34 = scalar_select %p33, 0, %s32
      %s35 = ssub.s32 %s22, %s34
      %s36 = ssub.s32 %s23, %s30
      %s37 = sor.u32 %s35, %s36
      %p38 = scmp.eq.s32.totalorder %s37, 0
      %s40 = sadd.s32 %s39, 1
      %s41 = scalar_select %p38, %s39, %s40
      %p44 = pneg %p38
      %p45 = scmp.eq.s32.totalorder %s15, 3
      %p46 = por %p44, %p45
      %p47 = scmp.ne.s32.totalorder %s39, %s42
      %p48 = scmp.eq.s32.totalorder %s15, 0
      %p49 = por %p47, %p48
      %p50 = scmp.ne.s32.totalorder %s39, %s42
      %p51 = scmp.eq.s32.totalorder %s20, 3
      %p52 = por %p50, %p51
      %p53 = scmp.ne.s32.totalorder %s42, %s43
      %p54 = scmp.eq.s32.totalorder %s20, 0
      %p55 = por %p53, %p54
      %p56 = scmp.ne.s32.totalorder %s42, %s43
      %p57 = scmp.eq.s32.totalorder %s21, 3
      %p58 = por %p56, %p57
      %p60 = scmp.ne.s32.totalorder %s43, %s59
      %p61 = scmp.eq.s32.totalorder %s21, 0
      %p62 = por %p60, %p61
      %s63 = ssub.s32 %s23, 1
      %p64 = scmp.gt.s32.totalorder %s63, 0
      %s65 = scalar_select %p64, %s63, 0
      %s66 = ssub.s32 %s30, 1
      %p67 = scmp.gt.s32.totalorder %s66, 0
      %s68 = scalar_select %p67, %s66, 0
      %s69 = ssub.s32 %s22, %s34
      %s70 = ssub.s32 %s65, %s68
      %s71 = sor.u32 %s69, %s70
      %p72 = scmp.eq.s32.totalorder %s71, 0
      %s74 = sadd.s32 %s73, 1
      %s75 = scalar_select %p72, %s73, %s74
      %p78 = pneg %p72
      %p79 = scmp.eq.s32.totalorder %s15, 3
      %p80 = por %p78, %p79
      %p81 = scmp.ne.s32.totalorder %s73, %s76
      %p82 = scmp.eq.s32.totalorder %s15, 0
      %p83 = por %p81, %p82
      %p84 = scmp.ne.s32.totalorder %s73, %s76
      %p85 = scmp.eq.s32.totalorder %s20, 3
      %p86 = por %p84, %p85
      %p87 = scmp.ne.s32.totalorder %s76, %s77
      %p88 = scmp.eq.s32.totalorder %s20, 0
      %p89 = por %p87, %p88
      %p90 = scmp.ne.s32.totalorder %s76, %s77
      %p91 = scmp.eq.s32.totalorder %s21, 3
      %p92 = por %p90, %p91
      %p94 = scmp.ne.s32.totalorder %s77, %s93
      %p95 = scmp.eq.s32.totalorder %s21, 0
      %p96 = por %p94, %p95
      %s98 = sadd.s32 %s97, 1
      %p101 = scmp.eq.s32.totalorder %s15, 3
      %p102 = scmp.ne.s32.totalorder %s97, %s99
      %p103 = scmp.eq.s32.totalorder %s15, 0
      %p104 = por %p102, %p103
      %p105 = scmp.ne.s32.totalorder %s97, %s99
      %p106 = scmp.eq.s32.totalorder %s20, 3
      %p107 = por %p105, %p106
      %p108 = scmp.ne.s32.totalorder %s99, %s100
      %p109 = scmp.eq.s32.totalorder %s20, 0
      %p110 = por %p108, %p109
      %p111 = scmp.ne.s32.totalorder %s99, %s100
      %p112 = scmp.eq.s32.totalorder %s21, 3
      %p113 = por %p111, %p112
      %p115 = scmp.ne.s32.totalorder %s100, %s114
      %p116 = scmp.eq.s32.totalorder %s21, 0
      %p117 = por %p115, %p116
      %s119 = sadd.s32 %s118, 1
      %p122 = scmp.eq.s32.totalorder %s15, 3
      %p123 = scmp.ne.s32.totalorder %s118, %s120
      %p124 = scmp.eq.s32.totalorder %s15, 0
      %p125 = por %p123, %p124
      %p126 = scmp.ne.s32.totalorder %s118, %s120
      %p127 = scmp.eq.s32.totalorder %s20, 3
      %p128 = por %p126, %p127
      %p129 = scmp.ne.s32.totalorder %s120, %s121
      %p130 = scmp.eq.s32.totalorder %s20, 0
      %p131 = por %p129, %p130
      %p132 = scmp.ne.s32.totalorder %s120, %s121
      %p133 = scmp.eq.s32.totalorder %s21, 3
      %p134 = por %p132, %p133
      %p136 = scmp.ne.s32.totalorder %s121, %s135
      %p137 = scmp.eq.s32.totalorder %s21, 0
      %p138 = por %p136, %p137
      %s140 = sadd.s32 %s139, 1
      %p143 = scmp.eq.s32.totalorder %s15, 3
      %p144 = scmp.ne.s32.totalorder %s139, %s141
      %p145 = scmp.eq.s32.totalorder %s15, 0
      %p146 = por %p144, %p145
      %p147 = scmp.ne.s32.totalorder %s139, %s141
      %p148 = scmp.eq.s32.totalorder %s20, 3
      %p149 = por %p147, %p148
      %p150 = scmp.ne.s32.totalorder %s141, %s142
      %p151 = scmp.eq.s32.totalorder %s20, 0
      %p152 = por %p150, %p151
      %p153 = scmp.ne.s32.totalorder %s141, %s142
      %p154 = scmp.eq.s32.totalorder %s21, 3
      %p155 = por %p153, %p154
      %p157 = scmp.ne.s32.totalorder %s142, %s156
      %p158 = scmp.eq.s32.totalorder %s21, 0
      %p159 = por %p157, %p158
      %s161 = sadd.s32 %s160, 1
      %p164 = scmp.eq.s32.totalorder %s15, 3
      %p165 = scmp.ne.s32.totalorder %s160, %s162
      %p166 = scmp.eq.s32.totalorder %s15, 0
      %p167 = por %p165, %p166
      %p168 = scmp.ne.s32.totalorder %s160, %s162
      %p169 = scmp.eq.s32.totalorder %s20, 3
      %p170 = por %p168, %p169
      %p171 = scmp.ne.s32.totalorder %s162, %s163
      %p172 = scmp.eq.s32.totalorder %s20, 0
      %p173 = por %p171, %p172
      %p174 = scmp.ne.s32.totalorder %s162, %s163
      %p175 = scmp.eq.s32.totalorder %s21, 3
      %p176 = por %p174, %p175
      %p178 = scmp.ne.s32.totalorder %s163, %s177
      %p179 = scmp.eq.s32.totalorder %s21, 0
      %p180 = por %p178, %p179
      %s181 = ssub.s32 %s22, %s34
      %s182 = ssub.s32 %s23, %s30
      %s183 = sor.u32 %s181, %s182
      %p184 = scmp.eq.s32.totalorder %s183, 0
      %s186 = sadd.s32 %s185, 1
      %s187 = scalar_select %p184, %s185, %s186
      %p190 = pneg %p184
      %p191 = scmp.eq.s32.totalorder %s15, 3
      %p192 = por %p190, %p191
      %p193 = scmp.ne.s32.totalorder %s185, %s188
      %p194 = scmp.eq.s32.totalorder %s15, 0
      %p195 = por %p193, %p194
      %p196 = scmp.ne.s32.totalorder %s185, %s188
      %p197 = scmp.eq.s32.totalorder %s20, 3
      %p198 = por %p196, %p197
      %p199 = scmp.ne.s32.totalorder %s188, %s189
      %p200 = scmp.eq.s32.totalorder %s20, 0
      %p201 = por %p199, %p200
      %p202 = scmp.ne.s32.totalorder %s188, %s189
      %p203 = scmp.eq.s32.totalorder %s21, 3
      %p204 = por %p202, %p203
      %p206 = scmp.ne.s32.totalorder %s189, %s205
      %p207 = scmp.eq.s32.totalorder %s21, 0
      %p208 = por %p206, %p207
      %p209 = scmp.le.s32.totalorder 1, %s15
      %p210 = scmp.lt.s32.totalorder %s15, 5
      %p211 = pnand %p209, %p210
      %p212 = pneg %p211
      // Predicated region
      $region9: #{tcn_forward.3} parent=5 // pred_check
        _
      $region10: #{tcn_forward.3} parent=5 // pred_check_branch
        %214 = sbr.rel (%p211) target = $region12
      $region11: #{tcn_forward.3} parent=5 // pred_region
        %s215 = ssub.s32 %s15, 1
        // Predicated region
        $region13: #{tcn_forward.3} parent=11 // pred_check
          %p216 = pneg %p110
        $region14: #{tcn_forward.3} parent=11 // pred_check_branch
          %218 = sbr.rel (%p216) target = $region16
        $region15: #{tcn_forward.3} parent=11 // pred_region
          _
        $region16: #{tcn_forward.3} parent=11 // pred_fallthru
          _
        // Predicated region
        $region17: #{tcn_forward.3} parent=11 // pred_check
          %p219 = pneg %p131
        $region18: #{tcn_forward.3} parent=11 // pred_check_branch
          %221 = sbr.rel (%p219) target = $region20
        $region19: #{tcn_forward.3} parent=11 // pred_region
          _
        $region20: #{tcn_forward.3} parent=11 // pred_fallthru
          _
        // Predicated region
        $region21: #{tcn_forward.3} parent=11 // pred_check
          %p222 = pneg %p152
        $region22: #{tcn_forward.3} parent=11 // pred_check_branch
          %224 = sbr.rel (%p222) target = $region24
        $region23: #{tcn_forward.3} parent=11 // pred_region
          _
        $region24: #{tcn_forward.3} parent=11 // pred_fallthru
          _
        // Predicated region
        $region25: #{tcn_forward.3} parent=11 // pred_check
          %p225 = pneg %p173
        $region26: #{tcn_forward.3} parent=11 // pred_check_branch
          %227 = sbr.rel (%p225) target = $region28
        $region27: #{tcn_forward.3} parent=11 // pred_region
          _
        $region28: #{tcn_forward.3} parent=11 // pred_fallthru
          _
      $region12: #{tcn_forward.3} parent=5 // pred_fallthru
        _
      %p228 = scmp.lt.s32.totalorder %s15, 4
      // Predicated region
      $region29: #{tcn_forward.3} parent=5 // pred_check
        %p229 = pneg %p228
      $region30: #{tcn_forward.3} parent=5 // pred_check_branch
        %231 = sbr.rel (%p229) target = $region32
      $region31: #{tcn_forward.3} parent=5 // pred_region
        // Predicated region
        $region33: #{tcn_forward.3} parent=31 // pred_check
          %p232 = pneg %p49
        $region34: #{tcn_forward.3} parent=31 // pred_check_branch
          %234 = sbr.rel (%p232) target = $region36
        $region35: #{tcn_forward.3} parent=31 // pred_region
          %s235 = sand.u32 %s39, 1
          %s236 = sand.u32 %s39, 1
          %s237 = smul.addr %s236, 16
          %s238 = scalar_lea.vmem [#allocation7], %s237
          %s239 = smul.addr %s22, 4
          %s240 = sadd.s32 %s23, %s239
          %s241 = smul.addr %s240, 8
          %s242 = scalar_lea.vmem %s0, %s241
          // Predicated region
          $region37: #{tcn_forward.3} parent=35 // pred_check
            _
          $region38: #{tcn_forward.3} parent=35 // pred_check_branch
            %244 = sbr.rel (0) target = $region40
          $region39: #{tcn_forward.3} parent=35 // pred_region
            // Predicated region
            $region41: #{tcn_forward.3} parent=39 // pred_check
              _
            $region42: #{tcn_forward.3} parent=39 // pred_check_branch
              %246 = sbr.rel (0) target = $region44
            $region43: #{tcn_forward.3} parent=39 // pred_region
              // Predicated region
              $region56: #{tcn_forward.3} parent=43 // pred_check
                _
              $region57: #{tcn_forward.3} parent=43 // pred_check_branch
                %264 = sbr.rel (0) target = $region59
              $region58: #{tcn_forward.3} parent=43 // pred_region
                loop: start=0, step=1, limit=1
                $region60: #{tcn_forward.3} parent=58 // loop_pre_header
                  _
                $region61: #{tcn_forward.3} parent=58 // loop_header
                  %s266 = sphi 0, %s270
                  %p267 = scmp.ge.s32.totalorder %s266, 1
                  %s271 = sphi %s242, %s242
                  %s272 = sphi %s238, %s238
                $region62: #{tcn_forward.3} parent=58 // loop_header_branch
                  %269 = sbr.rel (%p267) target = $region66
                $region63: #{tcn_forward.3} parent=58 // loop_body
                  %v273 = vld [vmem:[%s271] sm:$0xff]
                  %274 = vst [vmem:[%s272] sm:$0xff] %v273
                  %v275 = vld [vmem:[%s271 + $0x10] sm:$0xff]
                  %276 = vst [vmem:[%s272 + $0x8] sm:$0xff] %v275
                $region64: #{tcn_forward.3} parent=58 // loop_footer
                  %s270 = sadd.s32 1, %s266
                $region65: #{tcn_forward.3} parent=58 // loop_footer_branch
                  %265 = sbr.rel target = $region61
                $region66: #{tcn_forward.3} parent=58 // loop_exit
                  _
              $region59: #{tcn_forward.3} parent=43 // pred_fallthru
                _
              // Predicated region
              $region67: #{tcn_forward.3} parent=43 // pred_check
                _
              $region68: #{tcn_forward.3} parent=43 // pred_check_branch
                %278 = sbr.rel target = $region70
              $region69: #{tcn_forward.3} parent=43 // pred_region
                _
              $region70: #{tcn_forward.3} parent=43 // pred_fallthru
                _
            $region44: #{tcn_forward.3} parent=39 // pred_fallthru
              _
            // Predicated region
            $region45: #{tcn_forward.3} parent=39 // pred_check
              _
            $region46: #{tcn_forward.3} parent=39 // pred_check_branch
              %248 = sbr.rel target = $region48
            $region47: #{tcn_forward.3} parent=39 // pred_region
              %s250 = ssub.s32 256, 1
              loop: start=0, step=1, limit=1
              $region49: #{tcn_forward.3} parent=47 // loop_pre_header
                _
              $region50: #{tcn_forward.3} parent=47 // loop_header
                %s252 = sphi 0, %s256
                %p253 = scmp.ge.s32.totalorder %s252, 1
                %s257 = sphi %s242, %s242
                %s258 = sphi %s238, %s238
              $region51: #{tcn_forward.3} parent=47 // loop_header_branch
                %255 = sbr.rel (%p253) target = $region55
              $region52: #{tcn_forward.3} parent=47 // loop_body
                %v259 = vld [vmem:[%s257] sm:%s250]
                %260 = vst [vmem:[%s258] sm:%s250] %v259
                %v261 = vld [vmem:[%s257 + $0x10] sm:%s250]
                %262 = vst [vmem:[%s258 + $0x8] sm:%s250] %v261
              $region53: #{tcn_forward.3} parent=47 // loop_footer
                %s256 = sadd.s32 1, %s252
              $region54: #{tcn_forward.3} parent=47 // loop_footer_branch
                %251 = sbr.rel target = $region50
              $region55: #{tcn_forward.3} parent=47 // loop_exit
                _
            $region48: #{tcn_forward.3} parent=39 // pred_fallthru
              _
          $region40: #{tcn_forward.3} parent=35 // pred_fallthru
            _
          %279 = vnop
        $region36: #{tcn_forward.3} parent=31 // pred_fallthru
          _
        // Predicated region
        $region71: #{tcn_forward.3} parent=31 // pred_check
          %p280 = pneg %p83
        $region72: #{tcn_forward.3} parent=31 // pred_check_branch
          %282 = sbr.rel (%p280) target = $region74
        $region73: #{tcn_forward.3} parent=31 // pred_region
          %s283 = sand.u32 %s73, 1
          %s284 = sand.u32 %s73, 1
          %s285 = smul.addr %s284, 16
          %s286 = scalar_lea.vmem [#allocation8], %s285
          %s287 = ssub.s32 %s23, 1
          %p288 = scmp.gt.s32.totalorder %s287, 0
          %s289 = scalar_select %p288, %s287, 0
          %s290 = smul.addr %s22, 4
          %s291 = sadd.s32 %s289, %s290
          %s292 = smul.addr %s291, 8
          %s293 = scalar_lea.vmem %s1, %s292
          // Predicated region
          $region75: #{tcn_forward.3} parent=73 // pred_check
            _
          $region76: #{tcn_forward.3} parent=73 // pred_check_branch
            %295 = sbr.rel (0) target = $region78
          $region77: #{tcn_forward.3} parent=73 // pred_region
            // Predicated region
            $region79: #{tcn_forward.3} parent=77 // pred_check
              _
            $region80: #{tcn_forward.3} parent=77 // pred_check_branch
              %297 = sbr.rel (0) target = $region82
            $region81: #{tcn_forward.3} parent=77 // pred_region
              // Predicated region
              $region94: #{tcn_forward.3} parent=81 // pred_check
                _
              $region95: #{tcn_forward.3} parent=81 // pred_check_branch
                %315 = sbr.rel (0) target = $region97
              $region96: #{tcn_forward.3} parent=81 // pred_region
                loop: start=0, step=1, limit=1
                $region98: #{tcn_forward.3} parent=96 // loop_pre_header
                  _
                $region99: #{tcn_forward.3} parent=96 // loop_header
                  %s317 = sphi 0, %s321
                  %p318 = scmp.ge.s32.totalorder %s317, 1
                  %s322 = sphi %s293, %s293
                  %s323 = sphi %s286, %s286
                $region100: #{tcn_forward.3} parent=96 // loop_header_branch
                  %320 = sbr.rel (%p318) target = $region104
                $region101: #{tcn_forward.3} parent=96 // loop_body
                  %v324 = vld [vmem:[%s322] sm:$0xff]
                  %325 = vst [vmem:[%s323] sm:$0xff] %v324
                  %v326 = vld [vmem:[%s322 + $0x10] sm:$0xff]
                  %327 = vst [vmem:[%s323 + $0x8] sm:$0xff] %v326
                $region102: #{tcn_forward.3} parent=96 // loop_footer
                  %s321 = sadd.s32 1, %s317
                $region103: #{tcn_forward.3} parent=96 // loop_footer_branch
                  %316 = sbr.rel target = $region99
                $region104: #{tcn_forward.3} parent=96 // loop_exit
                  _
              $region97: #{tcn_forward.3} parent=81 // pred_fallthru
                _
              // Predicated region
              $region105: #{tcn_forward.3} parent=81 // pred_check
                _
              $region106: #{tcn_forward.3} parent=81 // pred_check_branch
                %329 = sbr.rel target = $region108
              $region107: #{tcn_forward.3} parent=81 // pred_region
                _
              $region108: #{tcn_forward.3} parent=81 // pred_fallthru
                _
            $region82: #{tcn_forward.3} parent=77 // pred_fallthru
              _
            // Predicated region
            $region83: #{tcn_forward.3} parent=77 // pred_check
              _
            $region84: #{tcn_forward.3} parent=77 // pred_check_branch
              %299 = sbr.rel target = $region86
            $region85: #{tcn_forward.3} parent=77 // pred_region
              %s301 = ssub.s32 256, 1
              loop: start=0, step=1, limit=1
              $region87: #{tcn_forward.3} parent=85 // loop_pre_header
                _
              $region88: #{tcn_forward.3} parent=85 // loop_header
                %s303 = sphi 0, %s307
                %p304 = scmp.ge.s32.totalorder %s303, 1
                %s308 = sphi %s293, %s293
                %s309 = sphi %s286, %s286
              $region89: #{tcn_forward.3} parent=85 // loop_header_branch
                %306 = sbr.rel (%p304) target = $region93
              $region90: #{tcn_forward.3} parent=85 // loop_body
                %v310 = vld [vmem:[%s308] sm:%s301]
                %311 = vst [vmem:[%s309] sm:%s301] %v310
                %v312 = vld [vmem:[%s308 + $0x10] sm:%s301]
                %313 = vst [vmem:[%s309 + $0x8] sm:%s301] %v312
              $region91: #{tcn_forward.3} parent=85 // loop_footer
                %s307 = sadd.s32 1, %s303
              $region92: #{tcn_forward.3} parent=85 // loop_footer_branch
                %302 = sbr.rel target = $region88
              $region93: #{tcn_forward.3} parent=85 // loop_exit
                _
            $region86: #{tcn_forward.3} parent=77 // pred_fallthru
              _
          $region78: #{tcn_forward.3} parent=73 // pred_fallthru
            _
          %330 = vnop
        $region74: #{tcn_forward.3} parent=31 // pred_fallthru
          _
      $region32: #{tcn_forward.3} parent=5 // pred_fallthru
        _
      %p331 = scmp.le.s32.totalorder 1, %s15
      %p332 = scmp.lt.s32.totalorder %s15, 5
      %p333 = pnand %p331, %p332
      %p334 = pneg %p333
      // Predicated region
      $region109: #{tcn_forward.3} parent=5 // pred_check
        _
      $region110: #{tcn_forward.3} parent=5 // pred_check_branch
        %336 = sbr.rel (%p333) target = $region112
      $region111: #{tcn_forward.3} parent=5 // pred_region
        %s337 = ssub.s32 %s15, 1
        %s338 = sand.u32 %s42, 1
        %s339 = sand.u32 %s42, 1
        %s340 = smul.addr %s339, 16
        %s341 = scalar_lea.vmem [#allocation7], %s340
        // Predicated region
        $region113: #{tcn_forward.3} parent=111 // pred_check
          %p342 = pneg %p55
        $region114: #{tcn_forward.3} parent=111 // pred_check_branch
          %344 = sbr.rel (%p342) target = $region116
        $region115: #{tcn_forward.3} parent=111 // pred_region
          _
        $region116: #{tcn_forward.3} parent=111 // pred_fallthru
          _
        %s345 = sand.u32 %s76, 1
        %s346 = sand.u32 %s76, 1
        %s347 = smul.addr %s346, 16
        %s348 = scalar_lea.vmem [#allocation8], %s347
        // Predicated region
        $region117: #{tcn_forward.3} parent=111 // pred_check
          %p349 = pneg %p89
        $region118: #{tcn_forward.3} parent=111 // pred_check_branch
          %351 = sbr.rel (%p349) target = $region120
        $region119: #{tcn_forward.3} parent=111 // pred_region
          _
        $region120: #{tcn_forward.3} parent=111 // pred_fallthru
          _
        %s352 = sand.u32 %s42, 1
        %s353 = sand.u32 %s42, 1
        %s354 = smul.addr %s353, 16
        %s355 = scalar_lea.vmem [#allocation7], %s354
        %p356 = pneg %p55
        %p357 = pneg %p52
        %s358 = sand.u32 %s76, 1
        %s359 = sand.u32 %s76, 1
        %s360 = smul.addr %s359, 16
        %s361 = scalar_lea.vmem [#allocation8], %s360
        %p362 = pneg %p89
        %p363 = pneg %p86
        %p364 = pneg %p110
        %p365 = pneg %p107
        %p366 = pneg %p131
        %p367 = pneg %p128
        %p368 = pneg %p152
        %p369 = pneg %p149
        %p370 = pneg %p173
        %p371 = pneg %p170
        %p372 = pneg %p201
        %p373 = pneg %p198
        %s374 = sand.u32 %s188, 1
        %s375 = scalar_lea.sflag [#allocation10], %s374
        %s376 = sand.u32 %s188, 1
        %s377 = smul.addr %s376, 16
        %s378 = scalar_lea.vmem [#allocation9], %s377
        %s379 = ssub.s32 %s25, 1
        %p380 = scmp.gt.s32.totalorder %s379, 0
        %s381 = scalar_select %p380, %s379, 0
        %p383 = scmp.eq.s32.totalorder %s25, 0
        %v384 = vld [vmem:[%s341] sm:$0xff]
        %v385 = vld [vmem:[%s341 + $0x8] sm:$0xff]
        %v386 = vpack.c.bf16 %v385, %v384
        %v387 = vld [vmem:[%s348] sm:$0xff]
        %v388 = vld [vmem:[%s348 + $0x8] sm:$0xff]
        %s389 = scalar_select %p383, 1, 0
        %v390 = vstv %s389
        %vm391 = vcmp.eq.s32.totalorder %v390, 1
        %v392 = vsel %vm391, 0.0, %v387
        %v393 = vsel %vm391, 0.0, %v388
        %v394 = vpack.c.bf16 %v393, %v392
        %v395 = vld [vmem:[%s3] sm:$0xff]
        %v396 = vld [vmem:[%s3 + $0x8] sm:$0xff]
        %s397 = scalar_lea.vmem %s2, 24
        %v398 = vld [vmem:[%s397] sm:$0xf]
        %v399 = vld [vmem:[%s397 + $0x4] sm:$0xf]
        %401 = vset.pattern.permute.xlu0 0
        %402 = vperm.xlu0 %401, %v395
        %v403 = vpop.permute.xlu0 %402
        %406 = vset.pattern.permute.xlu0 0
        %407 = vperm.xlu0 %406, %v396
        %v408 = vpop.permute.xlu0 %407
        %v412 = vunpack.c.l.b16 %v398
        %v413 = vunpack.c.l.b16 %v399
        %v414 = vpack.c.b16 %v413, %v412
        %vm415 = vcmask 130048
        %v417 = vsel %vm415, %v414, 0
        %419 = vmatprep.subr.bf16.mxu0 0
        %420 = vmatpush1.bf16.msra.mxu0 0
        %421 = vmatprep.subr.bf16.mxu0 0
        %422 = vmatpush1.bf16.msra.mxu0 0
        %423 = vmatprep.subr.bf16.mxu0 0
        %424 = vmatpush1.bf16.msra.mxu0 0
        %425 = vmatprep.subr.bf16.mxu0 0
        %426 = vmatpush1.bf16.msra.mxu0 0
        %427 = vmatprep.subr.bf16.mxu0 0
        %428 = vmatpush1.bf16.msra.mxu0 0
        %429 = vmatprep.subr.bf16.mxu0 0
        %430 = vmatpush1.bf16.msra.mxu0 0
        %431 = vmatprep.subr.bf16.mxu0 0
        %432 = vmatpush1.bf16.msra.mxu0 0
        %433 = vmatprep.subr.bf16.mxu0 0
        %434 = vmatpush1.bf16.msra.mxu0 %v386
        %435 = vmatprep.subr.bf16.mxu0 0
        %436 = vmatpush2.bf16.msra.mxu0 0
        %437 = vmatprep.subr.bf16.mxu0 0
        %438 = vmatpush2.bf16.msra.mxu0 0
        %439 = vmatprep.subr.bf16.mxu0 0
        %440 = vmatpush2.bf16.msra.mxu0 0
        %441 = vmatprep.subr.bf16.mxu0 0
        %442 = vmatpush2.bf16.msra.mxu0 0
        %443 = vmatprep.subr.bf16.mxu0 0
        %444 = vmatpush2.bf16.msra.mxu0 0
        %445 = vmatprep.subr.bf16.mxu0 0
        %446 = vmatpush2.bf16.msra.mxu0 0
        %447 = vmatprep.subr.bf16.mxu0 0
        %448 = vmatpush2.bf16.msra.mxu0 0
        %449 = vmatprep.subr.bf16.mxu0 0
        %450 = vmatpush2.bf16.msra.mxu0 0
        %451 = vmatprep.mubr.bf16.mxu0 0
        %452 = vmatmul.mubr.bf16.gmra.mxu0 %v417
        %v453 = vpop.f32.mrf.mxu0
        %v454 = vadd.f32 %v403, %v453
        %v455 = vpop.f32.mrf.mxu0
        %v456 = vpop.f32.mrf.mxu0
        %v457 = vadd.f32 %v408, %v456
        %v458 = vpop.f32.mrf.mxu0
        %459 = vdwg.mxu0
        %460 = vst [vmem:[#allocation2] sm:$0xff] %v454
        %461 = vst [vmem:[#allocation2 + $0x8] sm:$0xff] %v457
        %462 = vmatprep.subr.bf16.mxu0 0
        %463 = vmatpush1.bf16.msra.mxu0 0
        %464 = vmatprep.subr.bf16.mxu0 0
        %465 = vmatpush1.bf16.msra.mxu0 0
        %466 = vmatprep.subr.bf16.mxu0 0
        %467 = vmatpush1.bf16.msra.mxu0 0
        %468 = vmatprep.subr.bf16.mxu0 0
        %469 = vmatpush1.bf16.msra.mxu0 0
        %470 = vmatprep.subr.bf16.mxu0 0
        %471 = vmatpush1.bf16.msra.mxu0 0
        %472 = vmatprep.subr.bf16.mxu0 0
        %473 = vmatpush1.bf16.msra.mxu0 0
        %474 = vmatprep.subr.bf16.mxu0 0
        %475 = vmatpush1.bf16.msra.mxu0 0
        %476 = vmatprep.subr.bf16.mxu0 0
        %477 = vmatpush1.bf16.msra.mxu0 %v394
        %478 = vmatprep.subr.bf16.mxu0 0
        %479 = vmatpush2.bf16.msra.mxu0 0
        %480 = vmatprep.subr.bf16.mxu0 0
        %481 = vmatpush2.bf16.msra.mxu0 0
        %482 = vmatprep.subr.bf16.mxu0 0
        %483 = vmatpush2.bf16.msra.mxu0 0
        %484 = vmatprep.subr.bf16.mxu0 0
        %485 = vmatpush2.bf16.msra.mxu0 0
        %486 = vmatprep.subr.bf16.mxu0 0
        %487 = vmatpush2.bf16.msra.mxu0 0
        %488 = vmatprep.subr.bf16.mxu0 0
        %489 = vmatpush2.bf16.msra.mxu0 0
        %490 = vmatprep.subr.bf16.mxu0 0
        %491 = vmatpush2.bf16.msra.mxu0 0
        %492 = vmatprep.subr.bf16.mxu0 0
        %493 = vmatpush2.bf16.msra.mxu0 0
        %494 = vmatprep.mubr.bf16.mxu0 0
        %495 = vmatmul.mubr.bf16.gmra.mxu0 %v417
        %v496 = vpop.f32.mrf.mxu0
        %v497 = vadd.f32 %v403, %v496
        %v498 = vpop.f32.mrf.mxu0
        %v499 = vpop.f32.mrf.mxu0
        %v500 = vadd.f32 %v408, %v499
        %v501 = vpop.f32.mrf.mxu0
        %502 = vdwg.mxu0
        %503 = vst [vmem:[#allocation3] sm:$0xff] %v497
        %504 = vst [vmem:[#allocation3 + $0x8] sm:$0xff] %v500
        %v505 = vld [vmem:[%s2] sm:$0xf]
        %v506 = vld [vmem:[%s2 + $0x4] sm:$0xf]
        %v509 = vunpack.c.l.b16 %v505
        %v510 = vunpack.c.l.b16 %v506
        %v511 = vpack.c.b16 %v510, %v509
        %v513 = vsel %vm415, %v511, 0
        %515 = vmatprep.subr.bf16.mxu0 0
        %516 = vmatpush1.bf16.msra.mxu0 0
        %517 = vmatprep.subr.bf16.mxu0 0
        %518 = vmatpush1.bf16.msra.mxu0 0
        %519 = vmatprep.subr.bf16.mxu0 0
        %520 = vmatpush1.bf16.msra.mxu0 0
        %521 = vmatprep.subr.bf16.mxu0 0
        %522 = vmatpush1.bf16.msra.mxu0 0
        %523 = vmatprep.subr.bf16.mxu0 0
        %524 = vmatpush1.bf16.msra.mxu0 0
        %525 = vmatprep.subr.bf16.mxu0 0
        %526 = vmatpush1.bf16.msra.mxu0 0
        %527 = vmatprep.subr.bf16.mxu0 0
        %528 = vmatpush1.bf16.msra.mxu0 0
        %529 = vmatprep.subr.bf16.mxu0 0
        %530 = vmatpush1.bf16.msra.mxu0 %v386
        %531 = vmatprep.subr.bf16.mxu0 0
        %532 = vmatpush2.bf16.msra.mxu0 0
        %533 = vmatprep.subr.bf16.mxu0 0
        %534 = vmatpush2.bf16.msra.mxu0 0
        %535 = vmatprep.subr.bf16.mxu0 0
        %536 = vmatpush2.bf16.msra.mxu0 0
        %537 = vmatprep.subr.bf16.mxu0 0
        %538 = vmatpush2.bf16.msra.mxu0 0
        %539 = vmatprep.subr.bf16.mxu0 0
        %540 = vmatpush2.bf16.msra.mxu0 0
        %541 = vmatprep.subr.bf16.mxu0 0
        %542 = vmatpush2.bf16.msra.mxu0 0
        %543 = vmatprep.subr.bf16.mxu0 0
        %544 = vmatpush2.bf16.msra.mxu0 0
        %545 = vmatprep.subr.bf16.mxu0 0
        %546 = vmatpush2.bf16.msra.mxu0 0
        %547 = vmatprep.mubr.bf16.mxu0 0
        %548 = vmatmul.mubr.bf16.gmra.mxu0 %v513
        %v549 = vpop.f32.mrf.mxu0
        %v550 = vadd.f32 0.0, %v549
        %v551 = vpop.f32.mrf.mxu0
        %v552 = vpop.f32.mrf.mxu0
        %v553 = vadd.f32 0.0, %v552
        %v554 = vpop.f32.mrf.mxu0
        %555 = vdwg.mxu0
        %556 = vmatprep.subr.bf16.mxu0 0
        %557 = vmatpush1.bf16.msra.mxu0 0
        %558 = vmatprep.subr.bf16.mxu0 0
        %559 = vmatpush1.bf16.msra.mxu0 0
        %560 = vmatprep.subr.bf16.mxu0 0
        %561 = vmatpush1.bf16.msra.mxu0 0
        %562 = vmatprep.subr.bf16.mxu0 0
        %563 = vmatpush1.bf16.msra.mxu0 0
        %564 = vmatprep.subr.bf16.mxu0 0
        %565 = vmatpush1.bf16.msra.mxu0 0
        %566 = vmatprep.subr.bf16.mxu0 0
        %567 = vmatpush1.bf16.msra.mxu0 0
        %568 = vmatprep.subr.bf16.mxu0 0
        %569 = vmatpush1.bf16.msra.mxu0 0
        %570 = vmatprep.subr.bf16.mxu0 0
        %571 = vmatpush1.bf16.msra.mxu0 %v394
        %572 = vmatprep.subr.bf16.mxu0 0
        %573 = vmatpush2.bf16.msra.mxu0 0
        %574 = vmatprep.subr.bf16.mxu0 0
        %575 = vmatpush2.bf16.msra.mxu0 0
        %576 = vmatprep.subr.bf16.mxu0 0
        %577 = vmatpush2.bf16.msra.mxu0 0
        %578 = vmatprep.subr.bf16.mxu0 0
        %579 = vmatpush2.bf16.msra.mxu0 0
        %580 = vmatprep.subr.bf16.mxu0 0
        %581 = vmatpush2.bf16.msra.mxu0 0
        %582 = vmatprep.subr.bf16.mxu0 0
        %583 = vmatpush2.bf16.msra.mxu0 0
        %584 = vmatprep.subr.bf16.mxu0 0
        %585 = vmatpush2.bf16.msra.mxu0 0
        %586 = vmatprep.subr.bf16.mxu0 0
        %587 = vmatpush2.bf16.msra.mxu0 0
        %588 = vmatprep.mubr.bf16.mxu0 0
        %589 = vmatmul.mubr.bf16.gmra.mxu0 %v513
        %v590 = vpop.f32.mrf.mxu0
        %v591 = vadd.f32 0.0, %v590
        %v592 = vpop.f32.mrf.mxu0
        %v593 = vpop.f32.mrf.mxu0
        %v594 = vadd.f32 0.0, %v593
        %v595 = vpop.f32.mrf.mxu0
        %596 = vdwg.mxu0
        %v597 = vld [vmem:[#allocation2] sm:$0xff]
        %v598 = vld [vmem:[#allocation2 + $0x8] sm:$0xff]
        %601 = vrot.lane.b32.xlu0 %v550, 6
        %v602 = vpop.permute.xlu0 %601
        %603 = vrot.lane.b32.xlu0 %v553, 6
        %v604 = vpop.permute.xlu0 %603
        %v607 = vadd.f32 %v597, %v602
        %v608 = vadd.f32 %v598, %v604
        %vm609 = vcmask 1047600
        %610 = vst.msk [vmem:[#allocation2] sm:$0xff] %vm609, %v607
        %611 = vst.msk [vmem:[#allocation2 + $0x8] sm:$0xff] %vm609, %v608
        %v612 = vld [vmem:[#allocation2] sm:$0xff]
        %v613 = vld [vmem:[#allocation2 + $0x8] sm:$0xff]
        %616 = vrot.lane.b32.xlu0 %v591, 6
        %v617 = vpop.permute.xlu0 %616
        %618 = vrot.lane.b32.xlu0 %v594, 6
        %v619 = vpop.permute.xlu0 %618
        %v622 = vadd.f32 %v612, %v617
        %v623 = vadd.f32 %v613, %v619
        %vm624 = vcmask 48128
        %625 = vst.msk [vmem:[#allocation2] sm:$0xff] %vm624, %v622
        %626 = vst.msk [vmem:[#allocation2 + $0x8] sm:$0xff] %vm624, %v623
        %v627 = vld [vmem:[#allocation3] sm:$0xff]
        %v628 = vld [vmem:[#allocation3 + $0x8] sm:$0xff]
        %v629 = vadd.f32 %v627, %v617
        %v630 = vadd.f32 %v628, %v619
        %631 = vst.msk [vmem:[#allocation3] sm:$0xff] %vm609, %v629
        %632 = vst.msk [vmem:[#allocation3 + $0x8] sm:$0xff] %vm609, %v630
        %s633 = scalar_lea.vmem %s2, 8
        %v634 = vld [vmem:[%s633] sm:$0xf]
        %v635 = vld [vmem:[%s633 + $0x4] sm:$0xf]
        %v638 = vunpack.c.l.b16 %v634
        %v639 = vunpack.c.l.b16 %v635
        %v640 = vpack.c.b16 %v639, %v638
        %v642 = vsel %vm415, %v640, 0
        %644 = vmatprep.subr.bf16.mxu0 0
        %645 = vmatpush1.bf16.msra.mxu0 0
        %646 = vmatprep.subr.bf16.mxu0 0
        %647 = vmatpush1.bf16.msra.mxu0 0
        %648 = vmatprep.subr.bf16.mxu0 0
        %649 = vmatpush1.bf16.msra.mxu0 0
        %650 = vmatprep.subr.bf16.mxu0 0
        %651 = vmatpush1.bf16.msra.mxu0 0
        %652 = vmatprep.subr.bf16.mxu0 0
        %653 = vmatpush1.bf16.msra.mxu0 0
        %654 = vmatprep.subr.bf16.mxu0 0
        %655 = vmatpush1.bf16.msra.mxu0 0
        %656 = vmatprep.subr.bf16.mxu0 0
        %657 = vmatpush1.bf16.msra.mxu0 0
        %658 = vmatprep.subr.bf16.mxu0 0
        %659 = vmatpush1.bf16.msra.mxu0 %v386
        %660 = vmatprep.subr.bf16.mxu0 0
        %661 = vmatpush2.bf16.msra.mxu0 0
        %662 = vmatprep.subr.bf16.mxu0 0
        %663 = vmatpush2.bf16.msra.mxu0 0
        %664 = vmatprep.subr.bf16.mxu0 0
        %665 = vmatpush2.bf16.msra.mxu0 0
        %666 = vmatprep.subr.bf16.mxu0 0
        %667 = vmatpush2.bf16.msra.mxu0 0
        %668 = vmatprep.subr.bf16.mxu0 0
        %669 = vmatpush2.bf16.msra.mxu0 0
        %670 = vmatprep.subr.bf16.mxu0 0
        %671 = vmatpush2.bf16.msra.mxu0 0
        %672 = vmatprep.subr.bf16.mxu0 0
        %673 = vmatpush2.bf16.msra.mxu0 0
        %674 = vmatprep.subr.bf16.mxu0 0
        %675 = vmatpush2.bf16.msra.mxu0 0
        %676 = vmatprep.mubr.bf16.mxu0 0
        %677 = vmatmul.mubr.bf16.gmra.mxu0 %v642
        %v678 = vpop.f32.mrf.mxu0
        %v679 = vadd.f32 0.0, %v678
        %v680 = vpop.f32.mrf.mxu0
        %v681 = vpop.f32.mrf.mxu0
        %v682 = vadd.f32 0.0, %v681
        %v683 = vpop.f32.mrf.mxu0
        %684 = vdwg.mxu0
        %685 = vmatprep.subr.bf16.mxu0 0
        %686 = vmatpush1.bf16.msra.mxu0 0
        %687 = vmatprep.subr.bf16.mxu0 0
        %688 = vmatpush1.bf16.msra.mxu0 0
        %689 = vmatprep.subr.bf16.mxu0 0
        %690 = vmatpush1.bf16.msra.mxu0 0
        %691 = vmatprep.subr.bf16.mxu0 0
        %692 = vmatpush1.bf16.msra.mxu0 0
        %693 = vmatprep.subr.bf16.mxu0 0
        %694 = vmatpush1.bf16.msra.mxu0 0
        %695 = vmatprep.subr.bf16.mxu0 0
        %696 = vmatpush1.bf16.msra.mxu0 0
        %697 = vmatprep.subr.bf16.mxu0 0
        %698 = vmatpush1.bf16.msra.mxu0 0
        %699 = vmatprep.subr.bf16.mxu0 0
        %700 = vmatpush1.bf16.msra.mxu0 %v394
        %701 = vmatprep.subr.bf16.mxu0 0
        %702 = vmatpush2.bf16.msra.mxu0 0
        %703 = vmatprep.subr.bf16.mxu0 0
        %704 = vmatpush2.bf16.msra.mxu0 0
        %705 = vmatprep.subr.bf16.mxu0 0
        %706 = vmatpush2.bf16.msra.mxu0 0
        %707 = vmatprep.subr.bf16.mxu0 0
        %708 = vmatpush2.bf16.msra.mxu0 0
        %709 = vmatprep.subr.bf16.mxu0 0
        %710 = vmatpush2.bf16.msra.mxu0 0
        %711 = vmatprep.subr.bf16.mxu0 0
        %712 = vmatpush2.bf16.msra.mxu0 0
        %713 = vmatprep.subr.bf16.mxu0 0
        %714 = vmatpush2.bf16.msra.mxu0 0
        %715 = vmatprep.subr.bf16.mxu0 0
        %716 = vmatpush2.bf16.msra.mxu0 0
        %717 = vmatprep.mubr.bf16.mxu0 0
        %718 = vmatmul.mubr.bf16.gmra.mxu0 %v642
        %v719 = vpop.f32.mrf.mxu0
        %v720 = vadd.f32 0.0, %v719
        %v721 = vpop.f32.mrf.mxu0
        %v722 = vpop.f32.mrf.mxu0
        %v723 = vadd.f32 0.0, %v722
        %v724 = vpop.f32.mrf.mxu0
        %725 = vdwg.mxu0
        %v726 = vld [vmem:[#allocation2] sm:$0xff]
        %v727 = vld [vmem:[#allocation2 + $0x8] sm:$0xff]
        %730 = vrot.lane.b32.xlu0 %v679, 4
        %v731 = vpop.permute.xlu0 %730
        %732 = vrot.lane.b32.xlu0 %v682, 4
        %v733 = vpop.permute.xlu0 %732
        %v736 = vadd.f32 %v726, %v731
        %v737 = vadd.f32 %v727, %v733
        %vm738 = vcmask 1047584
        %739 = vst.msk [vmem:[#allocation2] sm:$0xff] %vm738, %v736
        %740 = vst.msk [vmem:[#allocation2 + $0x8] sm:$0xff] %vm738, %v737
        %v741 = vld [vmem:[#allocation2] sm:$0xff]
        %v742 = vld [vmem:[#allocation2 + $0x8] sm:$0xff]
        %745 = vrot.lane.b32.xlu0 %v720, 4
        %v746 = vpop.permute.xlu0 %745
        %747 = vrot.lane.b32.xlu0 %v723, 4
        %v748 = vpop.permute.xlu0 %747
        %v751 = vadd.f32 %v741, %v746
        %v752 = vadd.f32 %v742, %v748
        %vm753 = vcmask 31744
        %754 = vst.msk [vmem:[#allocation2] sm:$0xff] %vm753, %v751
        %755 = vst.msk [vmem:[#allocation2 + $0x8] sm:$0xff] %vm753, %v752
        %v756 = vld [vmem:[#allocation3] sm:$0xff]
        %v757 = vld [vmem:[#allocation3 + $0x8] sm:$0xff]
        %v758 = vadd.f32 %v756, %v746
        %v759 = vadd.f32 %v757, %v748
        %760 = vst.msk [vmem:[#allocation3] sm:$0xff] %vm738, %v758
        %761 = vst.msk [vmem:[#allocation3 + $0x8] sm:$0xff] %vm738, %v759
        %s762 = scalar_lea.vmem %s2, 16
        %v763 = vld [vmem:[%s762] sm:$0xf]
        %v764 = vld [vmem:[%s762 + $0x4] sm:$0xf]
        %v767 = vunpack.c.l.b16 %v763
        %v768 = vunpack.c.l.b16 %v764
        %v769 = vpack.c.b16 %v768, %v767
        %v771 = vsel %vm415, %v769, 0
        %773 = vmatprep.subr.bf16.mxu0 0
        %774 = vmatpush1.bf16.msra.mxu0 0
        %775 = vmatprep.subr.bf16.mxu0 0
        %776 = vmatpush1.bf16.msra.mxu0 0
        %777 = vmatprep.subr.bf16.mxu0 0
        %778 = vmatpush1.bf16.msra.mxu0 0
        %779 = vmatprep.subr.bf16.mxu0 0
        %780 = vmatpush1.bf16.msra.mxu0 0
        %781 = vmatprep.subr.bf16.mxu0 0
        %782 = vmatpush1.bf16.msra.mxu0 0
        %783 = vmatprep.subr.bf16.mxu0 0
        %784 = vmatpush1.bf16.msra.mxu0 0
        %785 = vmatprep.subr.bf16.mxu0 0
        %786 = vmatpush1.bf16.msra.mxu0 0
        %787 = vmatprep.subr.bf16.mxu0 0
        %788 = vmatpush1.bf16.msra.mxu0 %v386
        %789 = vmatprep.subr.bf16.mxu0 0
        %790 = vmatpush2.bf16.msra.mxu0 0
        %791 = vmatprep.subr.bf16.mxu0 0
        %792 = vmatpush2.bf16.msra.mxu0 0
        %793 = vmatprep.subr.bf16.mxu0 0
        %794 = vmatpush2.bf16.msra.mxu0 0
        %795 = vmatprep.subr.bf16.mxu0 0
        %796 = vmatpush2.bf16.msra.mxu0 0
        %797 = vmatprep.subr.bf16.mxu0 0
        %798 = vmatpush2.bf16.msra.mxu0 0
        %799 = vmatprep.subr.bf16.mxu0 0
        %800 = vmatpush2.bf16.msra.mxu0 0
        %801 = vmatprep.subr.bf16.mxu0 0
        %802 = vmatpush2.bf16.msra.mxu0 0
        %803 = vmatprep.subr.bf16.mxu0 0
        %804 = vmatpush2.bf16.msra.mxu0 0
        %805 = vmatprep.mubr.bf16.mxu0 0
        %806 = vmatmul.mubr.bf16.gmra.mxu0 %v771
        %v807 = vpop.f32.mrf.mxu0
        %v808 = vadd.f32 0.0, %v807
        %v809 = vpop.f32.mrf.mxu0
        %v810 = vpop.f32.mrf.mxu0
        %v811 = vadd.f32 0.0, %v810
        %v812 = vpop.f32.mrf.mxu0
        %813 = vdwg.mxu0
        %814 = vmatprep.subr.bf16.mxu0 0
        %815 = vmatpush1.bf16.msra.mxu0 0
        %816 = vmatprep.subr.bf16.mxu0 0
        %817 = vmatpush1.bf16.msra.mxu0 0
        %818 = vmatprep.subr.bf16.mxu0 0
        %819 = vmatpush1.bf16.msra.mxu0 0
        %820 = vmatprep.subr.bf16.mxu0 0
        %821 = vmatpush1.bf16.msra.mxu0 0
        %822 = vmatprep.subr.bf16.mxu0 0
        %823 = vmatpush1.bf16.msra.mxu0 0
        %824 = vmatprep.subr.bf16.mxu0 0
        %825 = vmatpush1.bf16.msra.mxu0 0
        %826 = vmatprep.subr.bf16.mxu0 0
        %827 = vmatpush1.bf16.msra.mxu0 0
        %828 = vmatprep.subr.bf16.mxu0 0
        %829 = vmatpush1.bf16.msra.mxu0 %v394
        %830 = vmatprep.subr.bf16.mxu0 0
        %831 = vmatpush2.bf16.msra.mxu0 0
        %832 = vmatprep.subr.bf16.mxu0 0
        %833 = vmatpush2.bf16.msra.mxu0 0
        %834 = vmatprep.subr.bf16.mxu0 0
        %835 = vmatpush2.bf16.msra.mxu0 0
        %836 = vmatprep.subr.bf16.mxu0 0
        %837 = vmatpush2.bf16.msra.mxu0 0
        %838 = vmatprep.subr.bf16.mxu0 0
        %839 = vmatpush2.bf16.msra.mxu0 0
        %840 = vmatprep.subr.bf16.mxu0 0
        %841 = vmatpush2.bf16.msra.mxu0 0
        %842 = vmatprep.subr.bf16.mxu0 0
        %843 = vmatpush2.bf16.msra.mxu0 0
        %844 = vmatprep.subr.bf16.mxu0 0
        %845 = vmatpush2.bf16.msra.mxu0 0
        %846 = vmatprep.mubr.bf16.mxu0 0
        %847 = vmatmul.mubr.bf16.gmra.mxu0 %v771
        %v848 = vpop.f32.mrf.mxu0
        %v849 = vadd.f32 0.0, %v848
        %v850 = vpop.f32.mrf.mxu0
        %v851 = vpop.f32.mrf.mxu0
        %v852 = vadd.f32 0.0, %v851
        %v853 = vpop.f32.mrf.mxu0
        %854 = vdwg.mxu0
        %v855 = vld [vmem:[#allocation2] sm:$0xff]
        %v856 = vld [vmem:[#allocation2 + $0x8] sm:$0xff]
        %859 = vrot.lane.b32.xlu0 %v808, 2
        %v860 = vpop.permute.xlu0 %859
        %861 = vrot.lane.b32.xlu0 %v811, 2
        %v862 = vpop.permute.xlu0 %861
        %v865 = vadd.f32 %v855, %v860
        %v866 = vadd.f32 %v856, %v862
        %vm867 = vcmask 1047568
        %868 = vst.msk [vmem:[#allocation2] sm:$0xff] %vm867, %v865
        %869 = vst.msk [vmem:[#allocation2 + $0x8] sm:$0xff] %vm867, %v866
        %v870 = vld [vmem:[#allocation2] sm:$0xff]
        %v871 = vld [vmem:[#allocation2 + $0x8] sm:$0xff]
        %874 = vrot.lane.b32.xlu0 %v849, 2
        %v875 = vpop.permute.xlu0 %874
        %876 = vrot.lane.b32.xlu0 %v852, 2
        %v877 = vpop.permute.xlu0 %876
        %v880 = vadd.f32 %v870, %v875
        %v881 = vadd.f32 %v871, %v877
        %vm882 = vcmask 15360
        %883 = vst.msk [vmem:[#allocation2] sm:$0xff] %vm882, %v880
        %884 = vst.msk [vmem:[#allocation2 + $0x8] sm:$0xff] %vm882, %v881
        %v885 = vld [vmem:[#allocation3] sm:$0xff]
        %v886 = vld [vmem:[#allocation3 + $0x8] sm:$0xff]
        %v887 = vadd.f32 %v885, %v875
        %v888 = vadd.f32 %v886, %v877
        %889 = vst.msk [vmem:[#allocation3] sm:$0xff] %vm867, %v887
        %890 = vst.msk [vmem:[#allocation3 + $0x8] sm:$0xff] %vm867, %v888
        %v891 = vld [vmem:[#allocation2] sm:$0xff]
        %v892 = vld [vmem:[#allocation2 + $0x8] sm:$0xff]
        %v893 = vmax.f32 %v891, 0.0
        %v894 = vmax.f32 %v892, 0.0
        %v895 = vpack.c.bf16 %v894, %v893
        %v897 = vunpack.c.l.b16 %v895
        %v898 = vunpack.c.h.b16 %v895
        %v899 = vpack.c.b16 %v897, %v897
        %v900 = vpack.c.b16 %v898, %v898
        %903 = vst [vmem:[#allocation4] sm:$0xf] %v899
        %904 = vst [vmem:[#allocation4 + $0x4] sm:$0xf] %v900
        %v905 = vld [vmem:[#allocation3] sm:$0xff]
        %v906 = vld [vmem:[#allocation3 + $0x8] sm:$0xff]
        %v907 = vmax.f32 %v905, 0.0
        %v908 = vmax.f32 %v906, 0.0
        %v909 = vsel %vm391, 0.0, %v907
        %v910 = vsel %vm391, 0.0, %v908
        %v911 = vpack.c.bf16 %v910, %v909
        %v913 = vunpack.c.l.b16 %v911
        %v914 = vunpack.c.h.b16 %v911
        %v915 = vpack.c.b16 %v913, %v913
        %v916 = vpack.c.b16 %v914, %v914
        %919 = vst [vmem:[#allocation5] sm:$0xf] %v915
        %920 = vst [vmem:[#allocation5 + $0x4] sm:$0xf] %v916
        %v921 = vld [vmem:[%s5] sm:$0xff]
        %v922 = vld [vmem:[%s5 + $0x8] sm:$0xff]
        %s923 = scalar_lea.vmem %s4, 24
        %v924 = vld [vmem:[%s923] sm:$0xf]
        %v925 = vld [vmem:[%s923 + $0x4] sm:$0xf]
        %v926 = vld [vmem:[#allocation4] sm:$0xf]
        %v927 = vld [vmem:[#allocation4 + $0x4] sm:$0xf]
        %929 = vset.pattern.permute.xlu0 0
        %930 = vperm.xlu0 %929, %v921
        %v931 = vpop.permute.xlu0 %930
        %934 = vset.pattern.permute.xlu0 0
        %935 = vperm.xlu0 %934, %v922
        %v936 = vpop.permute.xlu0 %935
        %v940 = vunpack.c.l.b16 %v924
        %v941 = vunpack.c.l.b16 %v925
        %v942 = vpack.c.b16 %v941, %v940
        %v945 = vunpack.c.l.b16 %v926
        %v946 = vunpack.c.l.b16 %v927
        %v947 = vpack.c.b16 %v946, %v945
        %v950 = vsel %vm415, %v942, 0
        %952 = vmatprep.subr.bf16.mxu0 0
        %953 = vmatpush1.bf16.msra.mxu0 0
        %954 = vmatprep.subr.bf16.mxu0 0
        %955 = vmatpush1.bf16.msra.mxu0 0
        %956 = vmatprep.subr.bf16.mxu0 0
        %957 = vmatpush1.bf16.msra.mxu0 0
        %958 = vmatprep.subr.bf16.mxu0 0
        %959 = vmatpush1.bf16.msra.mxu0 0
        %960 = vmatprep.subr.bf16.mxu0 0
        %961 = vmatpush1.bf16.msra.mxu0 0
        %962 = vmatprep.subr.bf16.mxu0 0
        %963 = vmatpush1.bf16.msra.mxu0 0
        %964 = vmatprep.subr.bf16.mxu0 0
        %965 = vmatpush1.bf16.msra.mxu0 0
        %966 = vmatprep.subr.bf16.mxu0 0
        %967 = vmatpush1.bf16.msra.mxu0 %v947
        %968 = vmatprep.subr.bf16.mxu0 0
        %969 = vmatpush2.bf16.msra.mxu0 0
        %970 = vmatprep.subr.bf16.mxu0 0
        %971 = vmatpush2.bf16.msra.mxu0 0
        %972 = vmatprep.subr.bf16.mxu0 0
        %973 = vmatpush2.bf16.msra.mxu0 0
        %974 = vmatprep.subr.bf16.mxu0 0
        %975 = vmatpush2.bf16.msra.mxu0 0
        %976 = vmatprep.subr.bf16.mxu0 0
        %977 = vmatpush2.bf16.msra.mxu0 0
        %978 = vmatprep.subr.bf16.mxu0 0
        %979 = vmatpush2.bf16.msra.mxu0 0
        %980 = vmatprep.subr.bf16.mxu0 0
        %981 = vmatpush2.bf16.msra.mxu0 0
        %982 = vmatprep.subr.bf16.mxu0 0
        %983 = vmatpush2.bf16.msra.mxu0 0
        %984 = vmatprep.mubr.bf16.mxu0 0
        %985 = vmatmul.mubr.bf16.gmra.mxu0 %v950
        %v986 = vpop.f32.mrf.mxu0
        %v987 = vadd.f32 %v931, %v986
        %v988 = vpop.f32.mrf.mxu0
        %v989 = vpop.f32.mrf.mxu0
        %v990 = vadd.f32 %v936, %v989
        %v991 = vpop.f32.mrf.mxu0
        %992 = vdwg.mxu0
        %993 = vst [vmem:[#allocation6] sm:$0xff] %v987
        %994 = vst [vmem:[#allocation6 + $0x8] sm:$0xff] %v990
        %v995 = vld [vmem:[%s4] sm:$0xf]
        %v996 = vld [vmem:[%s4 + $0x4] sm:$0xf]
        %v997 = vld [vmem:[#allocation4] sm:$0xf]
        %v998 = vld [vmem:[#allocation4 + $0x4] sm:$0xf]
        %v1001 = vunpack.c.l.b16 %v995
        %v1002 = vunpack.c.l.b16 %v996
        %v1003 = vpack.c.b16 %v1002, %v1001
        %v1006 = vunpack.c.l.b16 %v997
        %v1007 = vunpack.c.l.b16 %v998
        %v1008 = vpack.c.b16 %v1007, %v1006
        %v1011 = vsel %vm415, %v1003, 0
        %1013 = vmatprep.subr.bf16.mxu0 0
        %1014 = vmatpush1.bf16.msra.mxu0 0
        %1015 = vmatprep.subr.bf16.mxu0 0
        %1016 = vmatpush1.bf16.msra.mxu0 0
        %1017 = vmatprep.subr.bf16.mxu0 0
        %1018 = vmatpush1.bf16.msra.mxu0 0
        %1019 = vmatprep.subr.bf16.mxu0 0
        %1020 = vmatpush1.bf16.msra.mxu0 0
        %1021 = vmatprep.subr.bf16.mxu0 0
        %1022 = vmatpush1.bf16.msra.mxu0 0
        %1023 = vmatprep.subr.bf16.mxu0 0
        %1024 = vmatpush1.bf16.msra.mxu0 0
        %1025 = vmatprep.subr.bf16.mxu0 0
        %1026 = vmatpush1.bf16.msra.mxu0 0
        %1027 = vmatprep.subr.bf16.mxu0 0
        %1028 = vmatpush1.bf16.msra.mxu0 %v1008
        %1029 = vmatprep.subr.bf16.mxu0 0
        %1030 = vmatpush2.bf16.msra.mxu0 0
        %1031 = vmatprep.subr.bf16.mxu0 0
        %1032 = vmatpush2.bf16.msra.mxu0 0
        %1033 = vmatprep.subr.bf16.mxu0 0
        %1034 = vmatpush2.bf16.msra.mxu0 0
        %1035 = vmatprep.subr.bf16.mxu0 0
        %1036 = vmatpush2.bf16.msra.mxu0 0
        %1037 = vmatprep.subr.bf16.mxu0 0
        %1038 = vmatpush2.bf16.msra.mxu0 0
        %1039 = vmatprep.subr.bf16.mxu0 0
        %1040 = vmatpush2.bf16.msra.mxu0 0
        %1041 = vmatprep.subr.bf16.mxu0 0
        %1042 = vmatpush2.bf16.msra.mxu0 0
        %1043 = vmatprep.subr.bf16.mxu0 0
        %1044 = vmatpush2.bf16.msra.mxu0 0
        %1045 = vmatprep.mubr.bf16.mxu0 0
        %1046 = vmatmul.mubr.bf16.gmra.mxu0 %v1011
        %v1047 = vpop.f32.mrf.mxu0
        %v1048 = vadd.f32 0.0, %v1047
        %v1049 = vpop.f32.mrf.mxu0
        %v1050 = vpop.f32.mrf.mxu0
        %v1051 = vadd.f32 0.0, %v1050
        %v1052 = vpop.f32.mrf.mxu0
        %1053 = vdwg.mxu0
        %v1054 = vld [vmem:[#allocation5] sm:$0xf]
        %v1055 = vld [vmem:[#allocation5 + $0x4] sm:$0xf]
        %v1058 = vunpack.c.l.b16 %v1054
        %v1059 = vunpack.c.l.b16 %v1055
        %v1060 = vpack.c.b16 %v1059, %v1058
        %1062 = vmatprep.subr.bf16.mxu0 0
        %1063 = vmatpush1.bf16.msra.mxu0 0
        %1064 = vmatprep.subr.bf16.mxu0 0
        %1065 = vmatpush1.bf16.msra.mxu0 0
        %1066 = vmatprep.subr.bf16.mxu0 0
        %1067 = vmatpush1.bf16.msra.mxu0 0
        %1068 = vmatprep.subr.bf16.mxu0 0
        %1069 = vmatpush1.bf16.msra.mxu0 0
        %1070 = vmatprep.subr.bf16.mxu0 0
        %1071 = vmatpush1.bf16.msra.mxu0 0
        %1072 = vmatprep.subr.bf16.mxu0 0
        %1073 = vmatpush1.bf16.msra.mxu0 0
        %1074 = vmatprep.subr.bf16.mxu0 0
        %1075 = vmatpush1.bf16.msra.mxu0 0
        %1076 = vmatprep.subr.bf16.mxu0 0
        %1077 = vmatpush1.bf16.msra.mxu0 %v1060
        %1078 = vmatprep.subr.bf16.mxu0 0
        %1079 = vmatpush2.bf16.msra.mxu0 0
        %1080 = vmatprep.subr.bf16.mxu0 0
        %1081 = vmatpush2.bf16.msra.mxu0 0
        %1082 = vmatprep.subr.bf16.mxu0 0
        %1083 = vmatpush2.bf16.msra.mxu0 0
        %1084 = vmatprep.subr.bf16.mxu0 0
        %1085 = vmatpush2.bf16.msra.mxu0 0
        %1086 = vmatprep.subr.bf16.mxu0 0
        %1087 = vmatpush2.bf16.msra.mxu0 0
        %1088 = vmatprep.subr.bf16.mxu0 0
        %1089 = vmatpush2.bf16.msra.mxu0 0
        %1090 = vmatprep.subr.bf16.mxu0 0
        %1091 = vmatpush2.bf16.msra.mxu0 0
        %1092 = vmatprep.subr.bf16.mxu0 0
        %1093 = vmatpush2.bf16.msra.mxu0 0
        %1094 = vmatprep.mubr.bf16.mxu0 0
        %1095 = vmatmul.mubr.bf16.gmra.mxu0 %v1011
        %v1096 = vpop.f32.mrf.mxu0
        %v1097 = vadd.f32 0.0, %v1096
        %v1098 = vpop.f32.mrf.mxu0
        %v1099 = vpop.f32.mrf.mxu0
        %v1100 = vadd.f32 0.0, %v1099
        %v1101 = vpop.f32.mrf.mxu0
        %1102 = vdwg.mxu0
        %v1103 = vld [vmem:[#allocation6] sm:$0xff]
        %v1104 = vld [vmem:[#allocation6 + $0x8] sm:$0xff]
        %1107 = vrot.lane.b32.xlu0 %v1048, 6
        %v1108 = vpop.permute.xlu0 %1107
        %1109 = vrot.lane.b32.xlu0 %v1051, 6
        %v1110 = vpop.permute.xlu0 %1109
        %v1113 = vadd.f32 %v1103, %v1108
        %v1114 = vadd.f32 %v1104, %v1110
        %1115 = vst.msk [vmem:[#allocation6] sm:$0xff] %vm609, %v1113
        %1116 = vst.msk [vmem:[#allocation6 + $0x8] sm:$0xff] %vm609, %v1114
        %v1117 = vld [vmem:[#allocation6] sm:$0xff]
        %v1118 = vld [vmem:[#allocation6 + $0x8] sm:$0xff]
        %1121 = vrot.lane.b32.xlu0 %v1097, 6
        %v1122 = vpop.permute.xlu0 %1121
        %1123 = vrot.lane.b32.xlu0 %v1100, 6
        %v1124 = vpop.permute.xlu0 %1123
        %v1127 = vadd.f32 %v1117, %v1122
        %v1128 = vadd.f32 %v1118, %v1124
        %1129 = vst.msk [vmem:[#allocation6] sm:$0xff] %vm624, %v1127
        %1130 = vst.msk [vmem:[#allocation6 + $0x8] sm:$0xff] %vm624, %v1128
        %s1131 = scalar_lea.vmem %s4, 8
        %v1132 = vld [vmem:[%s1131] sm:$0xf]
        %v1133 = vld [vmem:[%s1131 + $0x4] sm:$0xf]
        %v1134 = vld [vmem:[#allocation4] sm:$0xf]
        %v1135 = vld [vmem:[#allocation4 + $0x4] sm:$0xf]
        %v1138 = vunpack.c.l.b16 %v1132
        %v1139 = vunpack.c.l.b16 %v1133
        %v1140 = vpack.c.b16 %v1139, %v1138
        %v1143 = vunpack.c.l.b16 %v1134
        %v1144 = vunpack.c.l.b16 %v1135
        %v1145 = vpack.c.b16 %v1144, %v1143
        %v1148 = vsel %vm415, %v1140, 0
        %1150 = vmatprep.subr.bf16.mxu0 0
        %1151 = vmatpush1.bf16.msra.mxu0 0
        %1152 = vmatprep.subr.bf16.mxu0 0
        %1153 = vmatpush1.bf16.msra.mxu0 0
        %1154 = vmatprep.subr.bf16.mxu0 0
        %1155 = vmatpush1.bf16.msra.mxu0 0
        %1156 = vmatprep.subr.bf16.mxu0 0
        %1157 = vmatpush1.bf16.msra.mxu0 0
        %1158 = vmatprep.subr.bf16.mxu0 0
        %1159 = vmatpush1.bf16.msra.mxu0 0
        %1160 = vmatprep.subr.bf16.mxu0 0
        %1161 = vmatpush1.bf16.msra.mxu0 0
        %1162 = vmatprep.subr.bf16.mxu0 0
        %1163 = vmatpush1.bf16.msra.mxu0 0
        %1164 = vmatprep.subr.bf16.mxu0 0
        %1165 = vmatpush1.bf16.msra.mxu0 %v1145
        %1166 = vmatprep.subr.bf16.mxu0 0
        %1167 = vmatpush2.bf16.msra.mxu0 0
        %1168 = vmatprep.subr.bf16.mxu0 0
        %1169 = vmatpush2.bf16.msra.mxu0 0
        %1170 = vmatprep.subr.bf16.mxu0 0
        %1171 = vmatpush2.bf16.msra.mxu0 0
        %1172 = vmatprep.subr.bf16.mxu0 0
        %1173 = vmatpush2.bf16.msra.mxu0 0
        %1174 = vmatprep.subr.bf16.mxu0 0
        %1175 = vmatpush2.bf16.msra.mxu0 0
        %1176 = vmatprep.subr.bf16.mxu0 0
        %1177 = vmatpush2.bf16.msra.mxu0 0
        %1178 = vmatprep.subr.bf16.mxu0 0
        %1179 = vmatpush2.bf16.msra.mxu0 0
        %1180 = vmatprep.subr.bf16.mxu0 0
        %1181 = vmatpush2.bf16.msra.mxu0 0
        %1182 = vmatprep.mubr.bf16.mxu0 0
        %1183 = vmatmul.mubr.bf16.gmra.mxu0 %v1148
        %v1184 = vpop.f32.mrf.mxu0
        %v1185 = vadd.f32 0.0, %v1184
        %v1186 = vpop.f32.mrf.mxu0
        %v1187 = vpop.f32.mrf.mxu0
        %v1188 = vadd.f32 0.0, %v1187
        %v1189 = vpop.f32.mrf.mxu0
        %1190 = vdwg.mxu0
        %v1191 = vld [vmem:[#allocation5] sm:$0xf]
        %v1192 = vld [vmem:[#allocation5 + $0x4] sm:$0xf]
        %v1195 = vunpack.c.l.b16 %v1191
        %v1196 = vunpack.c.l.b16 %v1192
        %v1197 = vpack.c.b16 %v1196, %v1195
        %1199 = vmatprep.subr.bf16.mxu0 0
        %1200 = vmatpush1.bf16.msra.mxu0 0
        %1201 = vmatprep.subr.bf16.mxu0 0
        %1202 = vmatpush1.bf16.msra.mxu0 0
        %1203 = vmatprep.subr.bf16.mxu0 0
        %1204 = vmatpush1.bf16.msra.mxu0 0
        %1205 = vmatprep.subr.bf16.mxu0 0
        %1206 = vmatpush1.bf16.msra.mxu0 0
        %1207 = vmatprep.subr.bf16.mxu0 0
        %1208 = vmatpush1.bf16.msra.mxu0 0
        %1209 = vmatprep.subr.bf16.mxu0 0
        %1210 = vmatpush1.bf16.msra.mxu0 0
        %1211 = vmatprep.subr.bf16.mxu0 0
        %1212 = vmatpush1.bf16.msra.mxu0 0
        %1213 = vmatprep.subr.bf16.mxu0 0
        %1214 = vmatpush1.bf16.msra.mxu0 %v1197
        %1215 = vmatprep.subr.bf16.mxu0 0
        %1216 = vmatpush2.bf16.msra.mxu0 0
        %1217 = vmatprep.subr.bf16.mxu0 0
        %1218 = vmatpush2.bf16.msra.mxu0 0
        %1219 = vmatprep.subr.bf16.mxu0 0
        %1220 = vmatpush2.bf16.msra.mxu0 0
        %1221 = vmatprep.subr.bf16.mxu0 0
        %1222 = vmatpush2.bf16.msra.mxu0 0
        %1223 = vmatprep.subr.bf16.mxu0 0
        %1224 = vmatpush2.bf16.msra.mxu0 0
        %1225 = vmatprep.subr.bf16.mxu0 0
        %1226 = vmatpush2.bf16.msra.mxu0 0
        %1227 = vmatprep.subr.bf16.mxu0 0
        %1228 = vmatpush2.bf16.msra.mxu0 0
        %1229 = vmatprep.subr.bf16.mxu0 0
        %1230 = vmatpush2.bf16.msra.mxu0 0
        %1231 = vmatprep.mubr.bf16.mxu0 0
        %1232 = vmatmul.mubr.bf16.gmra.mxu0 %v1148
        %v1233 = vpop.f32.mrf.mxu0
        %v1234 = vadd.f32 0.0, %v1233
        %v1235 = vpop.f32.mrf.mxu0
        %v1236 = vpop.f32.mrf.mxu0
        %v1237 = vadd.f32 0.0, %v1236
        %v1238 = vpop.f32.mrf.mxu0
        %1239 = vdwg.mxu0
        %v1240 = vld [vmem:[#allocation6] sm:$0xff]
        %v1241 = vld [vmem:[#allocation6 + $0x8] sm:$0xff]
        %1244 = vrot.lane.b32.xlu0 %v1185, 4
        %v1245 = vpop.permute.xlu0 %1244
        %1246 = vrot.lane.b32.xlu0 %v1188, 4
        %v1247 = vpop.permute.xlu0 %1246
        %v1250 = vadd.f32 %v1240, %v1245
        %v1251 = vadd.f32 %v1241, %v1247
        %1252 = vst.msk [vmem:[#allocation6] sm:$0xff] %vm738, %v1250
        %1253 = vst.msk [vmem:[#allocation6 + $0x8] sm:$0xff] %vm738, %v1251
        %v1254 = vld [vmem:[#allocation6] sm:$0xff]
        %v1255 = vld [vmem:[#allocation6 + $0x8] sm:$0xff]
        %1258 = vrot.lane.b32.xlu0 %v1234, 4
        %v1259 = vpop.permute.xlu0 %1258
        %1260 = vrot.lane.b32.xlu0 %v1237, 4
        %v1261 = vpop.permute.xlu0 %1260
        %v1264 = vadd.f32 %v1254, %v1259
        %v1265 = vadd.f32 %v1255, %v1261
        %1266 = vst.msk [vmem:[#allocation6] sm:$0xff] %vm753, %v1264
        %1267 = vst.msk [vmem:[#allocation6 + $0x8] sm:$0xff] %vm753, %v1265
        %s1268 = scalar_lea.vmem %s4, 16
        %v1269 = vld [vmem:[%s1268] sm:$0xf]
        %v1270 = vld [vmem:[%s1268 + $0x4] sm:$0xf]
        %v1271 = vld [vmem:[#allocation4] sm:$0xf]
        %v1272 = vld [vmem:[#allocation4 + $0x4] sm:$0xf]
        %v1275 = vunpack.c.l.b16 %v1269
        %v1276 = vunpack.c.l.b16 %v1270
        %v1277 = vpack.c.b16 %v1276, %v1275
        %v1280 = vunpack.c.l.b16 %v1271
        %v1281 = vunpack.c.l.b16 %v1272
        %v1282 = vpack.c.b16 %v1281, %v1280
        %v1285 = vsel %vm415, %v1277, 0
        %1287 = vmatprep.subr.bf16.mxu0 0
        %1288 = vmatpush1.bf16.msra.mxu0 0
        %1289 = vmatprep.subr.bf16.mxu0 0
        %1290 = vmatpush1.bf16.msra.mxu0 0
        %1291 = vmatprep.subr.bf16.mxu0 0
        %1292 = vmatpush1.bf16.msra.mxu0 0
        %1293 = vmatprep.subr.bf16.mxu0 0
        %1294 = vmatpush1.bf16.msra.mxu0 0
        %1295 = vmatprep.subr.bf16.mxu0 0
        %1296 = vmatpush1.bf16.msra.mxu0 0
        %1297 = vmatprep.subr.bf16.mxu0 0
        %1298 = vmatpush1.bf16.msra.mxu0 0
        %1299 = vmatprep.subr.bf16.mxu0 0
        %1300 = vmatpush1.bf16.msra.mxu0 0
        %1301 = vmatprep.subr.bf16.mxu0 0
        %1302 = vmatpush1.bf16.msra.mxu0 %v1282
        %1303 = vmatprep.subr.bf16.mxu0 0
        %1304 = vmatpush2.bf16.msra.mxu0 0
        %1305 = vmatprep.subr.bf16.mxu0 0
        %1306 = vmatpush2.bf16.msra.mxu0 0
        %1307 = vmatprep.subr.bf16.mxu0 0
        %1308 = vmatpush2.bf16.msra.mxu0 0
        %1309 = vmatprep.subr.bf16.mxu0 0
        %1310 = vmatpush2.bf16.msra.mxu0 0
        %1311 = vmatprep.subr.bf16.mxu0 0
        %1312 = vmatpush2.bf16.msra.mxu0 0
        %1313 = vmatprep.subr.bf16.mxu0 0
        %1314 = vmatpush2.bf16.msra.mxu0 0
        %1315 = vmatprep.subr.bf16.mxu0 0
        %1316 = vmatpush2.bf16.msra.mxu0 0
        %1317 = vmatprep.subr.bf16.mxu0 0
        %1318 = vmatpush2.bf16.msra.mxu0 0
        %1319 = vmatprep.mubr.bf16.mxu0 0
        %1320 = vmatmul.mubr.bf16.gmra.mxu0 %v1285
        %v1321 = vpop.f32.mrf.mxu0
        %v1322 = vadd.f32 0.0, %v1321
        %v1323 = vpop.f32.mrf.mxu0
        %v1324 = vpop.f32.mrf.mxu0
        %v1325 = vadd.f32 0.0, %v1324
        %v1326 = vpop.f32.mrf.mxu0
        %1327 = vdwg.mxu0
        %v1328 = vld [vmem:[#allocation5] sm:$0xf]
        %v1329 = vld [vmem:[#allocation5 + $0x4] sm:$0xf]
        %v1332 = vunpack.c.l.b16 %v1328
        %v1333 = vunpack.c.l.b16 %v1329
        %v1334 = vpack.c.b16 %v1333, %v1332
        %1336 = vmatprep.subr.bf16.mxu0 0
        %1337 = vmatpush1.bf16.msra.mxu0 0
        %1338 = vmatprep.subr.bf16.mxu0 0
        %1339 = vmatpush1.bf16.msra.mxu0 0
        %1340 = vmatprep.subr.bf16.mxu0 0
        %1341 = vmatpush1.bf16.msra.mxu0 0
        %1342 = vmatprep.subr.bf16.mxu0 0
        %1343 = vmatpush1.bf16.msra.mxu0 0
        %1344 = vmatprep.subr.bf16.mxu0 0
        %1345 = vmatpush1.bf16.msra.mxu0 0
        %1346 = vmatprep.subr.bf16.mxu0 0
        %1347 = vmatpush1.bf16.msra.mxu0 0
        %1348 = vmatprep.subr.bf16.mxu0 0
        %1349 = vmatpush1.bf16.msra.mxu0 0
        %1350 = vmatprep.subr.bf16.mxu0 0
        %1351 = vmatpush1.bf16.msra.mxu0 %v1334
        %1352 = vmatprep.subr.bf16.mxu0 0
        %1353 = vmatpush2.bf16.msra.mxu0 0
        %1354 = vmatprep.subr.bf16.mxu0 0
        %1355 = vmatpush2.bf16.msra.mxu0 0
        %1356 = vmatprep.subr.bf16.mxu0 0
        %1357 = vmatpush2.bf16.msra.mxu0 0
        %1358 = vmatprep.subr.bf16.mxu0 0
        %1359 = vmatpush2.bf16.msra.mxu0 0
        %1360 = vmatprep.subr.bf16.mxu0 0
        %1361 = vmatpush2.bf16.msra.mxu0 0
        %1362 = vmatprep.subr.bf16.mxu0 0
        %1363 = vmatpush2.bf16.msra.mxu0 0
        %1364 = vmatprep.subr.bf16.mxu0 0
        %1365 = vmatpush2.bf16.msra.mxu0 0
        %1366 = vmatprep.subr.bf16.mxu0 0
        %1367 = vmatpush2.bf16.msra.mxu0 0
        %1368 = vmatprep.mubr.bf16.mxu0 0
        %1369 = vmatmul.mubr.bf16.gmra.mxu0 %v1285
        %v1370 = vpop.f32.mrf.mxu0
        %v1371 = vadd.f32 0.0, %v1370
        %v1372 = vpop.f32.mrf.mxu0
        %v1373 = vpop.f32.mrf.mxu0
        %v1374 = vadd.f32 0.0, %v1373
        %v1375 = vpop.f32.mrf.mxu0
        %1376 = vdwg.mxu0
        %v1377 = vld [vmem:[#allocation6] sm:$0xff]
        %v1378 = vld [vmem:[#allocation6 + $0x8] sm:$0xff]
        %1381 = vrot.lane.b32.xlu0 %v1322, 2
        %v1382 = vpop.permute.xlu0 %1381
        %1383 = vrot.lane.b32.xlu0 %v1325, 2
        %v1384 = vpop.permute.xlu0 %1383
        %v1387 = vadd.f32 %v1377, %v1382
        %v1388 = vadd.f32 %v1378, %v1384
        %1389 = vst.msk [vmem:[#allocation6] sm:$0xff] %vm867, %v1387
        %1390 = vst.msk [vmem:[#allocation6 + $0x8] sm:$0xff] %vm867, %v1388
        %v1391 = vld [vmem:[#allocation6] sm:$0xff]
        %v1392 = vld [vmem:[#allocation6 + $0x8] sm:$0xff]
        %1395 = vrot.lane.b32.xlu0 %v1371, 2
        %v1396 = vpop.permute.xlu0 %1395
        %1397 = vrot.lane.b32.xlu0 %v1374, 2
        %v1398 = vpop.permute.xlu0 %1397
        %v1401 = vadd.f32 %v1391, %v1396
        %v1402 = vadd.f32 %v1392, %v1398
        %1403 = vst.msk [vmem:[#allocation6] sm:$0xff] %vm882, %v1401
        %1404 = vst.msk [vmem:[#allocation6 + $0x8] sm:$0xff] %vm882, %v1402
        %v1405 = vld [vmem:[#allocation6] sm:$0xff]
        %v1406 = vld [vmem:[#allocation6 + $0x8] sm:$0xff]
        %v1407 = vmax.f32 %v1405, 0.0
        %v1408 = vmax.f32 %v1406, 0.0
        %v1409 = vadd.f32 %v1407, %v384
        %v1410 = vadd.f32 %v1408, %v385
        %v1411 = vmax.f32 %v1409, 0.0
        %v1412 = vmax.f32 %v1410, 0.0
        %1413 = vst [vmem:[%s378] sm:$0xff] %v1411
        %1414 = vst [vmem:[%s378 + $0x8] sm:$0xff] %v1412
        %s1415 = sand.u32 %s188, 1
        %s1416 = scalar_lea.sflag [#allocation10], %s1415
        %s1417 = sand.u32 %s188, 1
        %s1418 = smul.addr %s1417, 16
        %s1419 = scalar_lea.vmem [#allocation9], %s1418
        // Predicated region
        $region121: #{tcn_forward.3} parent=111 // pred_check
          %p1420 = pneg %p198
        $region122: #{tcn_forward.3} parent=111 // pred_check_branch
          %1422 = sbr.rel (%p1420) target = $region124
        $region123: #{tcn_forward.3} parent=111 // pred_region
          %s1424 = ssub.s32 256, 256
          %1425 = vsyncadd %s1416, %s1424
          %s1426 = smul.addr %s24, 4
          %s1427 = sadd.s32 %s25, %s1426
          %s1428 = smul.addr %s1427, 128
          %s1429 = scalar_lea.hbm %s6, %s1428
          %s1430 = sshll.u32 %s1419, 4
          %s1431 = int_to_ptr.vmem [resolvable:$true] %s1430
          %1436 = dma.vmem_to_hbm [thread:$0]  %s1431, 256, %s1429, %s1416, 128, 256, 8
        $region124: #{tcn_forward.3} parent=111 // pred_fallthru
          _
      $region112: #{tcn_forward.3} parent=5 // pred_fallthru
        _
      %p1437 = scmp.le.s32.totalorder 2, %s15
      // Predicated region
      $region125: #{tcn_forward.3} parent=5 // pred_check
        %p1438 = pneg %p1437
      $region126: #{tcn_forward.3} parent=5 // pred_check_branch
        %1440 = sbr.rel (%p1438) target = $region128
      $region127: #{tcn_forward.3} parent=5 // pred_region
        %s1441 = ssub.s32 %s15, 2
        // Predicated region
        $region129: #{tcn_forward.3} parent=127 // pred_check
          %p1442 = pneg %p204
        $region130: #{tcn_forward.3} parent=127 // pred_check_branch
          %1444 = sbr.rel (%p1442) target = $region132
        $region131: #{tcn_forward.3} parent=127 // pred_region
          %s1445 = sand.u32 %s189, 1
          %s1446 = scalar_lea.sflag [#allocation10], %s1445
          %s1447 = sand.u32 %s189, 1
          %s1448 = smul.addr %s1447, 16
          %s1449 = scalar_lea.vmem [#allocation9], %s1448
          %1450 = dma.done %s1446, 256
        $region132: #{tcn_forward.3} parent=127 // pred_fallthru
          _
      $region128: #{tcn_forward.3} parent=5 // pred_fallthru
        _
    $region6: #{tcn_forward.3} parent=1 // loop_footer
      %s19 = sadd.s32 1, %s15
    $region7: #{tcn_forward.3} parent=1 // loop_footer_branch
      %14 = sbr.rel target = $region3
    $region8: #{tcn_forward.3} parent=1 // loop_exit
      _
    %1451 = vsyncpa [#allocation10], 1
    %s1452 = scalar_lea.sflag [#allocation10], 1
    %1453 = vsyncpa %s1452, 1

</llo_original>
